<compile_context>
chip_gen: v7x
topology: tpu7x:2x2x1
jax: 0.10.0
libtpu: 0.0.40
codegen_flags: <defaults>
</compile_context>

<pallas_src>
import functools
import numpy as np

import jax
import jax.numpy as jnp
from jax import lax
from jax.experimental import pallas as pl
from jax.experimental.pallas import tpu as pltpu


# -----------------------------------------------------------------------------
# Fused kernel: BiLSTM + hidden2tag + Viterbi recursion + backtrace (one batch block)
# -----------------------------------------------------------------------------
def _bilstm_crf_kernel(emb_ref,      # (S*B, D)   f32, rows ordered s*B + b
                       w_in_ref,     # (D, 8H)    bf16, gate blocks [i|f|o|g], each [fwd|bwd]
                       b_in_ref,     # (1, 8H)    f32, bih + bhh, same packing
                       w_rec_ref,    # (2H, 8H)   bf16, block-diagonal recurrent weight
                       h0_ref,       # (B, 2H)    f32, [h_fwd | h_bwd]
                       c0_ref,       # (B, 2H)    f32
                       wtag_ref,     # (2H, T)    bf16
                       btag_ref,     # (1, T)     f32
                       trans_ref,    # (T, T)     f32
                       feats_ref,    # out (S*B, T)  f32
                       path_ref,     # out (B, S+1)  i32  [:, :S]=tags, [:, S]=start tag
                       score_ref,    # out (B, 1)    f32
                       hid_ref,      # scratch (S*B, 2H) f32
                       *, start_idx, stop_idx):
    SB = emb_ref.shape[0]
    B, H2 = h0_ref.shape
    H = H2 // 2
    S = SB // B
    G = w_in_ref.shape[1]            # 8H = 4 gate blocks x 2H
    T = trans_ref.shape[0]
    f32 = jnp.float32
    bf16 = jnp.bfloat16

    # ---- input projection: all timesteps, both directions, ONE MXU matmul ----
    xp = (jnp.dot(emb_ref[...].astype(bf16), w_in_ref[...],
                  preferred_element_type=f32) + b_in_ref[...])          # (S*B, 8H)

    # ---- prologue: per-step gate inputs (fwd lanes take timestep k, bwd lanes S-1-k)
    lane_g = lax.broadcasted_iota(jnp.int32, (1, G), 1)
    is_fwd = (lane_g % H2) < H
    xsel = [jnp.where(is_fwd,
                      xp[k * B:(k + 1) * B, :],
                      xp[(S - 1 - k) * B:(S - k) * B, :])
            for k in range(S)]

    # ---- fused fwd+bwd recurrence, fully unrolled (S static & small) ----
    # Note: for S >~ 32 this should become a lax.fori_loop with VMEM row reads to
    # bound vreg pressure / compile time; fine at S=8.
    w_rec = w_rec_ref[...]
    h = h0_ref[...]                                                     # (B, 2H)
    c = c0_ref[...]
    for k in range(S):
        g_all = xsel[k] + jnp.dot(h.astype(bf16), w_rec,
                                  preferred_element_type=f32)           # (B, 8H)
        sig = jax.nn.sigmoid(g_all[:, 0:3 * H2])        # one EUP pass over [i | f | o]
        i_g = sig[:, 0:H2]
        f_g = sig[:, H2:2 * H2]
        o_g = sig[:, 2 * H2:3 * H2]
        g_g = jnp.tanh(g_all[:, 3 * H2:4 * H2])
        c = f_g * c + i_g * g_g                                         # (B, 2H)
        h = o_g * jnp.tanh(c)
        # Store hidden rows off the carried path (no select-accumulate chains).
        hid_ref[k * B:(k + 1) * B, 0:H] = h[:, 0:H]
        hid_ref[(S - 1 - k) * B:(S - k) * B, H:H2] = h[:, H:H2]

    # ---- hidden2tag: ONE (S*B, 2H) @ (2H, T) matmul ----
    feats = (jnp.dot(hid_ref[...].astype(bf16), wtag_ref[...],
                     preferred_element_type=f32) + btag_ref[...])       # (S*B, T)
    feats_ref[...] = feats

    # ---- Viterbi forward recursion: batch on sublanes, tags on lanes ----
    trans = trans_ref[...]
    trans_rows = [trans[j:j + 1, :] for j in range(T)]                  # hoisted
    lane_t = lax.broadcasted_iota(jnp.int32, (B, T), 1)
    fv = jnp.where(lane_t == start_idx, f32(0.0), f32(-10000.0))        # (B, T)
    bp_steps = []
    for s in range(S):
        new_fv = jnp.zeros((B, T), f32)
        bp = jnp.zeros((B, T), jnp.int32)
        for j in range(T):
            m = fv + trans_rows[j]                                      # (B, T)
            best = jnp.max(m, axis=1, keepdims=True)                    # (B, 1)
            # first-occurrence argmax, derived from the SAME m/best (exact tie-break)
            arg = jnp.min(jnp.where(m == best, lane_t, jnp.int32(T)),
                          axis=1, keepdims=True)                        # (B, 1)
            new_fv = jnp.where(lane_t == j, best, new_fv)
            bp = jnp.where(lane_t == j, arg, bp)
        bp_steps.append(bp)
        fv = new_fv + feats[s * B:(s + 1) * B, :]

    terminal = fv + trans[stop_idx:stop_idx + 1, :]                     # (B, T)
    tmax = jnp.max(terminal, axis=1, keepdims=True)                     # (B, 1)
    tag = jnp.min(jnp.where(terminal == tmax, lane_t, jnp.int32(T)),
                  axis=1, keepdims=True)                                # (B, 1)
    score_ref[...] = tmax

    # ---- in-kernel backtrace, vectorized across the batch ----
    lane_p = lax.broadcasted_iota(jnp.int32, (B, S + 1), 1)
    path = jnp.where(lane_p == (S - 1), tag, jnp.zeros((B, S + 1), jnp.int32))
    for t in range(S - 1, -1, -1):
        # tag <- bp_steps[t][tag]  (per-sentence gather along lanes)
        tag = jnp.max(jnp.where(lane_t == tag, bp_steps[t], jnp.int32(0)),
                      axis=1, keepdims=True)                            # (B, 1)
        slot = t - 1 if t > 0 else S       # slot S holds the <START> consistency tag
        path = jnp.where(lane_p == slot, tag, path)
    path_ref[...] = path


def bilstm_crf_forward(emb, w_in, b_in, w_rec, h0, c0, wtag, btag, transitions,
                       *, num_blocks, block_b, seq_len, start_idx, stop_idx):
    SB = seq_len * block_b
    D = emb.shape[1]
    G = w_in.shape[1]
    H2 = w_rec.shape[0]
    T = transitions.shape[0]
    kernel = functools.partial(_bilstm_crf_kernel,
                               start_idx=start_idx, stop_idx=stop_idx)

    def fixed(shape):                      # whole-array operand, same for every block
        return pl.BlockSpec(shape, lambda i: (0, 0))

    return pl.pallas_call(
        kernel,
        out_shape=(jax.ShapeDtypeStruct((num_blocks * SB, T), jnp.float32),              # feats
                   jax.ShapeDtypeStruct((num_blocks * block_b, seq_len + 1), jnp.int32),  # path
                   jax.ShapeDtypeStruct((num_blocks * block_b, 1), jnp.float32)),         # score
        grid=(num_blocks,),
        in_specs=[pl.BlockSpec((SB, D), lambda i: (i, 0)),           # emb (per block)
                  fixed((D, G)),                                     # w_in
                  fixed((1, G)),                                     # b_in
                  fixed((H2, G)),                                    # w_rec
                  pl.BlockSpec((block_b, H2), lambda i: (i, 0)),     # h0 (per block)
                  pl.BlockSpec((block_b, H2), lambda i: (i, 0)),     # c0 (per block)
                  fixed((H2, T)),                                    # wtag
                  fixed((1, T)),                                     # btag
                  fixed((T, T))],                                    # transitions
        out_specs=(pl.BlockSpec((SB, T), lambda i: (i, 0)),
                   pl.BlockSpec((block_b, seq_len + 1), lambda i: (i, 0)),
                   pl.BlockSpec((block_b, 1), lambda i: (i, 0))),
        scratch_shapes=[pltpu.VMEM((SB, H2), jnp.float32)],
        compiler_params=pltpu.CompilerParams(
            dimension_semantics=("parallel",)),
    )(emb, w_in, b_in, w_rec, h0, c0, wtag, btag, transitions)


# -----------------------------------------------------------------------------
# Host-side weight packing (one-time layout work).  Packed gate order: [i, f, o, g]
# (PyTorch row order is i, f, g, o), each gate block = [fwd H | bwd H] lanes.
# -----------------------------------------------------------------------------
_PACK_ORDER = (0, 1, 3, 2)


def _pack_input(wih_f, wih_b, H):
    """(4H, D) x2 -> (D, 8H) bf16, column blocks [i_f,i_b | f_f,f_b | o_f,o_b | g_f,g_b]."""
    wf, wb = np.asarray(wih_f), np.asarray(wih_b)
    cols = []
    for g in _PACK_ORDER:
        cols.append(wf[g * H:(g + 1) * H, :].T)
        cols.append(wb[g * H:(g + 1) * H, :].T)
    return jnp.asarray(np.concatenate(cols, axis=1).astype(np.float32)).astype(jnp.bfloat16)


def _pack_bias(bf, bb, H):
    """(4H,) x2 (already bih+bhh per direction) -> (1, 8H) f32 matching _pack_input."""
    bf, bb = np.asarray(bf), np.asarray(bb)
    parts = []
    for g in _PACK_ORDER:
        parts.append(bf[g * H:(g + 1) * H])
        parts.append(bb[g * H:(g + 1) * H])
    return jnp.asarray(np.concatenate(parts).astype(np.float32).reshape(1, -1))


def _pack_recurrent(whh_f, whh_b, H):
    """(4H, H) x2 -> block-diagonal (2H, 8H) bf16: rows 0:H act on h_f, rows H:2H on h_b."""
    wf, wb = np.asarray(whh_f), np.asarray(whh_b)
    w = np.zeros((2 * H, 8 * H), np.float32)
    for gi, g in enumerate(_PACK_ORDER):
        w[0:H, gi * 2 * H:gi * 2 * H + H] = wf[g * H:(g + 1) * H, :].T
        w[H:2 * H, gi * 2 * H + H:(gi + 1) * 2 * H] = wb[g * H:(g + 1) * H, :].T
    return jnp.asarray(w).astype(jnp.bfloat16)


# -----------------------------------------------------------------------------
# Pure numpy reference (mirrors the PyTorch module's forward())
# -----------------------------------------------------------------------------
def _sigmoid(x):
    return 1.0 / (1.0 + np.exp(-x))


def _ref_lstm_dir(x, wih, whh, bih, bhh, h, c, reverse):
    S = x.shape[0]
    H = whh.shape[1]
    out = np.zeros((S, H), np.float32)
    order = range(S - 1, -1, -1) if reverse else range(S)
    for t in order:
        g = x[t] @ wih.T + bih + h @ whh.T + bhh
        i = _sigmoid(g[0:H]); f = _sigmoid(g[H:2 * H])
        gg = np.tanh(g[2 * H:3 * H]); o = _sigmoid(g[3 * H:4 * H])
        c = f * c + i * gg
        h = o * np.tanh(c)
        out[t] = h
    return out


def _ref_viterbi(feats, transitions, start, stop):
    T = transitions.shape[0]
    fv = np.full((T,), -10000.0, np.float32)
    fv[start] = 0.0
    backptrs = []
    for feat in feats:
        m = fv[None, :] + transitions          # [next, prev]
        bp = np.argmax(m, axis=1)
        vv = np.max(m, axis=1)
        backptrs.append(bp)
        fv = vv + feat
    terminal = fv + transitions[stop]
    best = int(np.argmax(terminal))
    score = float(terminal[best])
    path = [best]
    for bp in reversed(backptrs):
        best = int(bp[best])
        path.append(best)
    assert path.pop() == start
    path.reverse()
    return score, path


# -----------------------------------------------------------------------------
if __name__ == "__main__":
    # Model hyper-parameters (small, consistent with the module's __init__).
    V, D, Hd = 20, 16, 32          # vocab, embedding_dim, hidden_dim
    H = Hd // 2                    # per-direction hidden
    tag_to_ix = {"B": 0, "I": 1, "O": 2, "<START>": 3, "<STOP>": 4}
    T = len(tag_to_ix)
    S = 8                          # sentence length
    B = 8                          # sentences per grid block (MXU rows)
    NB = 2                         # grid blocks (v7x: one per TensorCore)
    BT = NB * B                    # total sentences

    key = jax.random.PRNGKey(0)
    ks = jax.random.split(key, 16)
    kscale = 1.0 / np.sqrt(H)

    def unif(k_, shape):
        return jax.random.uniform(k_, shape, jnp.float32, -kscale, kscale)

    embedding = jax.random.normal(ks[0], (V, D), jnp.float32)
    wih_f = unif(ks[1], (4 * H, D)); whh_f = unif(ks[2], (4 * H, H))
    bih_f = unif(ks[3], (4 * H,));   bhh_f = unif(ks[4], (4 * H,))
    wih_b = unif(ks[5], (4 * H, D)); whh_b = unif(ks[6], (4 * H, H))
    bih_b = unif(ks[7], (4 * H,));   bhh_b = unif(ks[8], (4 * H,))
    wtag = unif(ks[9], (T, 2 * H));  btag = unif(ks[10], (T,))
    transitions = jax.random.normal(ks[11], (T, T), jnp.float32)
    transitions = transitions.at[tag_to_ix["<START>"], :].set(-10000.0)
    transitions = transitions.at[:, tag_to_ix["<STOP>"]].set(-10000.0)
    # init_hidden() in the module is torch.randn per call; deterministic per sentence here.
    h0_all = jax.random.normal(ks[12], (BT, 2, H), jnp.float32)
    c0_all = jax.random.normal(ks[13], (BT, 2, H), jnp.float32)
    sentences = jax.random.randint(ks[14], (BT, S), 0, V)

    START, STOP = tag_to_ix["<START>"], tag_to_ix["<STOP>"]

    # Embedding lookup is glue (gather) in plain JAX.
    emb_all = embedding[sentences]                                 # (BT, S, D)

    # Host-side packing into lane-dense bf16 MXU layouts.
    w_in = _pack_input(wih_f, wih_b, H)                            # (D, 8H)  bf16
    b_in = _pack_bias(np.asarray(bih_f) + np.asarray(bhh_f),
                      np.asarray(bih_b) + np.asarray(bhh_b), H)    # (1, 8H)  f32
    w_rec = _pack_recurrent(whh_f, whh_b, H)                       # (2H, 8H) bf16
    wtag_k = jnp.asarray(np.asarray(wtag).T.astype(np.float32)).astype(jnp.bfloat16)  # (2H, T)
    btag_k = jnp.asarray(np.asarray(btag).reshape(1, T).astype(np.float32))
    h0_pack = jnp.concatenate([h0_all[:, 0, :], h0_all[:, 1, :]], axis=1)   # (BT, 2H)
    c0_pack = jnp.concatenate([c0_all[:, 0, :], c0_all[:, 1, :]], axis=1)
    # Sequence-major row layout per block: row = blk*(S*B) + s*B + b.
    emb_in = emb_all.reshape(NB, B, S, D).transpose(0, 2, 1, 3).reshape(NB * S * B, D)

    # ---- single fused, batched Pallas kernel ----
    feats_flat, path_out, score_out = bilstm_crf_forward(
        emb_in, w_in, b_in, w_rec, h0_pack, c0_pack, wtag_k, btag_k, transitions,
        num_blocks=NB, block_b=B, seq_len=S, start_idx=START, stop_idx=STOP)
    feats_flat, path_out, score_out = jax.block_until_ready(
        (feats_flat, path_out, score_out))

    feats = np.asarray(feats_flat).reshape(NB, S, B, T).transpose(0, 2, 1, 3).reshape(BT, S, T)
    path_out = np.asarray(path_out)
    score_out = np.asarray(score_out).reshape(BT)

    # ---- verification against a numpy mirror of the PyTorch forward() ----
    def bfround(x):  # emulate the kernel's bf16 MXU-operand rounding in the reference
        return np.asarray(jnp.asarray(np.asarray(x), jnp.bfloat16).astype(jnp.float32))

    wih_f_r, whh_f_r = bfround(wih_f), bfround(whh_f)
    wih_b_r, whh_b_r = bfround(wih_b), bfround(whh_b)
    wtag_r = bfround(np.asarray(wtag))
    btag_np = np.asarray(btag)

    for b in range(BT):
        emb_np = bfround(emb_all[b])
        out_f = _ref_lstm_dir(emb_np, wih_f_r, whh_f_r, np.asarray(bih_f), np.asarray(bhh_f),
                              np.asarray(h0_all[b, 0]), np.asarray(c0_all[b, 0]), reverse=False)
        out_b = _ref_lstm_dir(emb_np, wih_b_r, whh_b_r, np.asarray(bih_b), np.asarray(bhh_b),
                              np.asarray(h0_all[b, 1]), np.asarray(c0_all[b, 1]), reverse=True)
        feats_ref = np.concatenate([out_f, out_b], axis=1) @ wtag_r.T + btag_np
        # bf16 MXU operands accumulate small error over the S-step recurrence -> looser tol.
        assert np.allclose(feats[b], feats_ref, atol=1e-1, rtol=5e-2), \
            f"feats mismatch for sentence {b}"

        ref_score, ref_path = _ref_viterbi(feats[b], np.asarray(transitions), START, STOP)
        assert abs(ref_score - float(score_out[b])) < 1e-3, f"score mismatch for sentence {b}"
        assert ref_path == list(map(int, path_out[b, :S])), f"path mismatch for sentence {b}"
        assert int(path_out[b, S]) == START, f"start-tag check failed for sentence {b}"

    # TODO(synk): _forward_alg / neg_log_likelihood / _score_sentence (training path)
    # are not kernelized; only the module's forward() (features + Viterbi decode) is.
    print("KERNEL_OK")
</pallas_src>

<mosaic_0001>
module attributes {stable_mosaic.version = 11 : i64} {
  func.func @_bilstm_crf_kernel(%arg0: i32, %arg1: memref<64x16xf32, #tpu.memory_space<vmem>>, %arg2: memref<16x128xbf16, #tpu.memory_space<vmem>>, %arg3: memref<1x128xf32, #tpu.memory_space<vmem>>, %arg4: memref<32x128xbf16, #tpu.memory_space<vmem>>, %arg5: memref<8x32xf32, #tpu.memory_space<vmem>>, %arg6: memref<8x32xf32, #tpu.memory_space<vmem>>, %arg7: memref<32x5xbf16, #tpu.memory_space<vmem>>, %arg8: memref<1x5xf32, #tpu.memory_space<vmem>>, %arg9: memref<5x5xf32, #tpu.memory_space<vmem>>, %arg10: memref<64x5xf32, #tpu.memory_space<vmem>>, %arg11: memref<8x9xi32, #tpu.memory_space<vmem>>, %arg12: memref<8x1xf32, #tpu.memory_space<vmem>>, %arg13: memref<64x32xf32, #tpu.memory_space<vmem>>) attributes {dimension_semantics = [#tpu.dimension_semantics<parallel>], iteration_bounds = array<i64: 2>, scalar_prefetch = 0 : i64, scratch_operands = 1 : i64, tpu.core_type = #tpu.core_type<tc>, window_params = [{transform_indices = @transform_0, window_bounds = array<i64: 64, 16>}, {pipeline_mode = #tpu.pipeline_mode<synchronous>, transform_indices = @transform_1, window_bounds = array<i64: 16, 128>}, {pipeline_mode = #tpu.pipeline_mode<synchronous>, transform_indices = @transform_2, window_bounds = array<i64: 1, 128>}, {pipeline_mode = #tpu.pipeline_mode<synchronous>, transform_indices = @transform_3, window_bounds = array<i64: 32, 128>}, {transform_indices = @transform_4, window_bounds = array<i64: 8, 32>}, {transform_indices = @transform_5, window_bounds = array<i64: 8, 32>}, {pipeline_mode = #tpu.pipeline_mode<synchronous>, transform_indices = @transform_6, window_bounds = array<i64: 32, 5>}, {pipeline_mode = #tpu.pipeline_mode<synchronous>, transform_indices = @transform_7, window_bounds = array<i64: 1, 5>}, {pipeline_mode = #tpu.pipeline_mode<synchronous>, transform_indices = @transform_8, window_bounds = array<i64: 5, 5>}, {transform_indices = @transform_9, window_bounds = array<i64: 64, 5>}, {transform_indices = @transform_10, window_bounds = array<i64: 8, 9>}, {transform_indices = @transform_11, window_bounds = array<i64: 8, 1>}]} {
    %c0 = arith.constant 0 : index
    %c0_0 = arith.constant 0 : index
    %0 = vector.load %arg1[%c0, %c0_0] : memref<64x16xf32, #tpu.memory_space<vmem>>, vector<64x16xf32>
    %1 = arith.truncf %0 : vector<64x16xf32> to vector<64x16xbf16>
    %c0_1 = arith.constant 0 : index
    %c0_2 = arith.constant 0 : index
    %2 = vector.load %arg2[%c0_1, %c0_2] : memref<16x128xbf16, #tpu.memory_space<vmem>>, vector<16x128xbf16>
    %cst = arith.constant dense<0.000000e+00> : vector<64x128xf32>
    %3 = tpu.matmul %1, %2, %cst {dimension_numbers = #tpu.dot_dimension_numbers<[1], [0], [0], [1], [0, 0, 1, 1], [], []>} : vector<64x16xbf16>, vector<16x128xbf16>, vector<64x128xf32> -> vector<64x128xf32>
    %c0_3 = arith.constant 0 : index
    %c0_4 = arith.constant 0 : index
    %4 = vector.load %arg3[%c0_3, %c0_4] : memref<1x128xf32, #tpu.memory_space<vmem>>, vector<1x128xf32>
    %5 = vector.broadcast %4 : vector<1x128xf32> to vector<64x128xf32>
    %6 = arith.addf %3, %5 : vector<64x128xf32>
    %7 = tpu.iota {dimensions = array<i32: 1>} : vector<1x128xi32>
    %c32_i32 = arith.constant 32 : i32
    %c0_i32 = arith.constant 0 : i32
    %8 = arith.cmpi eq, %c32_i32, %c0_i32 : i32
    %c1_i32 = arith.constant 1 : i32
    %9 = arith.select %8, %c1_i32, %c32_i32 : i32
    %10 = vector.broadcast %9 : i32 to vector<1x128xi32>
    %11 = arith.remsi %7, %10 : vector<1x128xi32>
    %c0_i32_5 = arith.constant 0 : i32
    %12 = vector.broadcast %c0_i32_5 : i32 to vector<1x128xi32>
    %13 = arith.cmpi ne, %11, %12 : vector<1x128xi32>
    %c0_i32_6 = arith.constant 0 : i32
    %14 = vector.broadcast %c0_i32_6 : i32 to vector<1x128xi32>
    %15 = arith.cmpi slt, %11, %14 : vector<1x128xi32>
    %c0_i32_7 = arith.constant 0 : i32
    %16 = arith.cmpi slt, %9, %c0_i32_7 : i32
    %17 = vector.broadcast %16 : i1 to vector<1x128xi1>
    %18 = vector.broadcast %17 : vector<1x128xi1> to vector<1x128xi1>
    %19 = arith.xori %15, %18 : vector<1x128xi1>
    %20 = arith.andi %19, %13 : vector<1x128xi1>
    %21 = vector.broadcast %9 : i32 to vector<1x128xi32>
    %22 = arith.addi %11, %21 : vector<1x128xi32>
    %23 = arith.select %20, %22, %11 : vector<1x128xi1>, vector<1x128xi32>
    %c16_i32 = arith.constant 16 : i32
    %24 = vector.broadcast %c16_i32 : i32 to vector<1x128xi32>
    %25 = arith.cmpi slt, %23, %24 : vector<1x128xi32>
    %26 = vector.extract_strided_slice %6 {offsets = [0, 0], sizes = [8, 128], strides = [1, 1]} : vector<64x128xf32> to vector<8x128xf32>
    %27 = vector.extract_strided_slice %6 {offsets = [56, 0], sizes = [8, 128], strides = [1, 1]} : vector<64x128xf32> to vector<8x128xf32>
    %28 = vector.shape_cast %25 : vector<1x128xi1> to vector<1x128xi1>
    %29 = vector.broadcast %28 : vector<1x128xi1> to vector<8x128xi1>
    %30 = arith.select %29, %26, %27 : vector<8x128xi1>, vector<8x128xf32>
    %31 = vector.extract_strided_slice %6 {offsets = [8, 0], sizes = [8, 128], strides = [1, 1]} : vector<64x128xf32> to vector<8x128xf32>
    %32 = vector.extract_strided_slice %6 {offsets = [48, 0], sizes = [8, 128], strides = [1, 1]} : vector<64x128xf32> to vector<8x128xf32>
    %33 = vector.shape_cast %25 : vector<1x128xi1> to vector<1x128xi1>
    %34 = vector.broadcast %33 : vector<1x128xi1> to vector<8x128xi1>
    %35 = arith.select %34, %31, %32 : vector<8x128xi1>, vector<8x128xf32>
    %36 = vector.extract_strided_slice %6 {offsets = [16, 0], sizes = [8, 128], strides = [1, 1]} : vector<64x128xf32> to vector<8x128xf32>
    %37 = vector.extract_strided_slice %6 {offsets = [40, 0], sizes = [8, 128], strides = [1, 1]} : vector<64x128xf32> to vector<8x128xf32>
    %38 = vector.shape_cast %25 : vector<1x128xi1> to vector<1x128xi1>
    %39 = vector.broadcast %38 : vector<1x128xi1> to vector<8x128xi1>
    %40 = arith.select %39, %36, %37 : vector<8x128xi1>, vector<8x128xf32>
    %41 = vector.extract_strided_slice %6 {offsets = [24, 0], sizes = [8, 128], strides = [1, 1]} : vector<64x128xf32> to vector<8x128xf32>
    %42 = vector.extract_strided_slice %6 {offsets = [32, 0], sizes = [8, 128], strides = [1, 1]} : vector<64x128xf32> to vector<8x128xf32>
    %43 = vector.shape_cast %25 : vector<1x128xi1> to vector<1x128xi1>
    %44 = vector.broadcast %43 : vector<1x128xi1> to vector<8x128xi1>
    %45 = arith.select %44, %41, %42 : vector<8x128xi1>, vector<8x128xf32>
    %46 = vector.extract_strided_slice %6 {offsets = [32, 0], sizes = [8, 128], strides = [1, 1]} : vector<64x128xf32> to vector<8x128xf32>
    %47 = vector.extract_strided_slice %6 {offsets = [24, 0], sizes = [8, 128], strides = [1, 1]} : vector<64x128xf32> to vector<8x128xf32>
    %48 = vector.shape_cast %25 : vector<1x128xi1> to vector<1x128xi1>
    %49 = vector.broadcast %48 : vector<1x128xi1> to vector<8x128xi1>
    %50 = arith.select %49, %46, %47 : vector<8x128xi1>, vector<8x128xf32>
    %51 = vector.extract_strided_slice %6 {offsets = [40, 0], sizes = [8, 128], strides = [1, 1]} : vector<64x128xf32> to vector<8x128xf32>
    %52 = vector.extract_strided_slice %6 {offsets = [16, 0], sizes = [8, 128], strides = [1, 1]} : vector<64x128xf32> to vector<8x128xf32>
    %53 = vector.shape_cast %25 : vector<1x128xi1> to vector<1x128xi1>
    %54 = vector.broadcast %53 : vector<1x128xi1> to vector<8x128xi1>
    %55 = arith.select %54, %51, %52 : vector<8x128xi1>, vector<8x128xf32>
    %56 = vector.extract_strided_slice %6 {offsets = [48, 0], sizes = [8, 128], strides = [1, 1]} : vector<64x128xf32> to vector<8x128xf32>
    %57 = vector.extract_strided_slice %6 {offsets = [8, 0], sizes = [8, 128], strides = [1, 1]} : vector<64x128xf32> to vector<8x128xf32>
    %58 = vector.shape_cast %25 : vector<1x128xi1> to vector<1x128xi1>
    %59 = vector.broadcast %58 : vector<1x128xi1> to vector<8x128xi1>
    %60 = arith.select %59, %56, %57 : vector<8x128xi1>, vector<8x128xf32>
    %61 = vector.extract_strided_slice %6 {offsets = [56, 0], sizes = [8, 128], strides = [1, 1]} : vector<64x128xf32> to vector<8x128xf32>
    %62 = vector.extract_strided_slice %6 {offsets = [0, 0], sizes = [8, 128], strides = [1, 1]} : vector<64x128xf32> to vector<8x128xf32>
    %63 = vector.shape_cast %25 : vector<1x128xi1> to vector<1x128xi1>
    %64 = vector.broadcast %63 : vector<1x128xi1> to vector<8x128xi1>
    %65 = arith.select %64, %61, %62 : vector<8x128xi1>, vector<8x128xf32>
    %c0_8 = arith.constant 0 : index
    %c0_9 = arith.constant 0 : index
    %66 = vector.load %arg4[%c0_8, %c0_9] : memref<32x128xbf16, #tpu.memory_space<vmem>>, vector<32x128xbf16>
    %c0_10 = arith.constant 0 : index
    %c0_11 = arith.constant 0 : index
    %67 = vector.load %arg5[%c0_10, %c0_11] : memref<8x32xf32, #tpu.memory_space<vmem>>, vector<8x32xf32>
    %c0_12 = arith.constant 0 : index
    %c0_13 = arith.constant 0 : index
    %68 = vector.load %arg6[%c0_12, %c0_13] : memref<8x32xf32, #tpu.memory_space<vmem>>, vector<8x32xf32>
    %69 = arith.truncf %67 : vector<8x32xf32> to vector<8x32xbf16>
    %cst_14 = arith.constant dense<0.000000e+00> : vector<8x128xf32>
    %70 = tpu.matmul %69, %66, %cst_14 {dimension_numbers = #tpu.dot_dimension_numbers<[1], [0], [0], [1], [0, 0, 1, 1], [], []>} : vector<8x32xbf16>, vector<32x128xbf16>, vector<8x128xf32> -> vector<8x128xf32>
    %71 = arith.addf %30, %70 : vector<8x128xf32>
    %72 = vector.extract_strided_slice %71 {offsets = [0, 0], sizes = [8, 96], strides = [1, 1]} : vector<8x128xf32> to vector<8x96xf32>
    %73 = arith.negf %72 : vector<8x96xf32>
    %74 = math.exp %73 : vector<8x96xf32>
    %cst_15 = arith.constant 1.000000e+00 : f32
    %75 = vector.broadcast %cst_15 : f32 to vector<8x96xf32>
    %76 = arith.addf %75, %74 : vector<8x96xf32>
    %77 = arith.divf %75, %76 : vector<8x96xf32>
    %78 = vector.extract_strided_slice %77 {offsets = [0, 0], sizes = [8, 32], strides = [1, 1]} : vector<8x96xf32> to vector<8x32xf32>
    %79 = vector.extract_strided_slice %77 {offsets = [0, 32], sizes = [8, 32], strides = [1, 1]} : vector<8x96xf32> to vector<8x32xf32>
    %80 = vector.extract_strided_slice %77 {offsets = [0, 64], sizes = [8, 32], strides = [1, 1]} : vector<8x96xf32> to vector<8x32xf32>
    %81 = vector.extract_strided_slice %71 {offsets = [0, 96], sizes = [8, 32], strides = [1, 1]} : vector<8x128xf32> to vector<8x32xf32>
    %82 = math.tanh %81 : vector<8x32xf32>
    %83 = arith.mulf %79, %68 : vector<8x32xf32>
    %84 = arith.mulf %78, %82 : vector<8x32xf32>
    %85 = arith.addf %83, %84 : vector<8x32xf32>
    %86 = math.tanh %85 : vector<8x32xf32>
    %87 = arith.mulf %80, %86 : vector<8x32xf32>
    %88 = vector.extract_strided_slice %87 {offsets = [0, 0], sizes = [8, 16], strides = [1, 1]} : vector<8x32xf32> to vector<8x16xf32>
    %c0_16 = arith.constant 0 : index
    %c0_17 = arith.constant 0 : index
    %89 = vector.load %arg13[%c0_16, %c0_17] : memref<64x32xf32, #tpu.memory_space<vmem>>, vector<8x16xf32>
    tpu.vector_store %arg13[%c0_16, %c0_17], %88 {strides = array<i32>} : memref<64x32xf32, #tpu.memory_space<vmem>>, vector<8x16xf32>,
    %90 = vector.extract_strided_slice %87 {offsets = [0, 16], sizes = [8, 16], strides = [1, 1]} : vector<8x32xf32> to vector<8x16xf32>
    %c56 = arith.constant 56 : index
    %c16 = arith.constant 16 : index
    %91 = vector.load %arg13[%c56, %c16] : memref<64x32xf32, #tpu.memory_space<vmem>>, vector<8x16xf32>
    tpu.vector_store %arg13[%c56, %c16], %90 {strides = array<i32>} : memref<64x32xf32, #tpu.memory_space<vmem>>, vector<8x16xf32>,
    %92 = arith.truncf %87 : vector<8x32xf32> to vector<8x32xbf16>
    %cst_18 = arith.constant dense<0.000000e+00> : vector<8x128xf32>
    %93 = tpu.matmul %92, %66, %cst_18 {dimension_numbers = #tpu.dot_dimension_numbers<[1], [0], [0], [1], [0, 0, 1, 1], [], []>} : vector<8x32xbf16>, vector<32x128xbf16>, vector<8x128xf32> -> vector<8x128xf32>
    %94 = arith.addf %35, %93 : vector<8x128xf32>
    %95 = vector.extract_strided_slice %94 {offsets = [0, 0], sizes = [8, 96], strides = [1, 1]} : vector<8x128xf32> to vector<8x96xf32>
    %96 = arith.negf %95 : vector<8x96xf32>
    %97 = math.exp %96 : vector<8x96xf32>
    %cst_19 = arith.constant 1.000000e+00 : f32
    %98 = vector.broadcast %cst_19 : f32 to vector<8x96xf32>
    %99 = arith.addf %98, %97 : vector<8x96xf32>
    %100 = arith.divf %98, %99 : vector<8x96xf32>
    %101 = vector.extract_strided_slice %100 {offsets = [0, 0], sizes = [8, 32], strides = [1, 1]} : vector<8x96xf32> to vector<8x32xf32>
    %102 = vector.extract_strided_slice %100 {offsets = [0, 32], sizes = [8, 32], strides = [1, 1]} : vector<8x96xf32> to vector<8x32xf32>
    %103 = vector.extract_strided_slice %100 {offsets = [0, 64], sizes = [8, 32], strides = [1, 1]} : vector<8x96xf32> to vector<8x32xf32>
    %104 = vector.extract_strided_slice %94 {offsets = [0, 96], sizes = [8, 32], strides = [1, 1]} : vector<8x128xf32> to vector<8x32xf32>
    %105 = math.tanh %104 : vector<8x32xf32>
    %106 = arith.mulf %102, %85 : vector<8x32xf32>
    %107 = arith.mulf %101, %105 : vector<8x32xf32>
    %108 = arith.addf %106, %107 : vector<8x32xf32>
    %109 = math.tanh %108 : vector<8x32xf32>
    %110 = arith.mulf %103, %109 : vector<8x32xf32>
    %111 = vector.extract_strided_slice %110 {offsets = [0, 0], sizes = [8, 16], strides = [1, 1]} : vector<8x32xf32> to vector<8x16xf32>
    %c8 = arith.constant 8 : index
    %c0_20 = arith.constant 0 : index
    %112 = vector.load %arg13[%c8, %c0_20] : memref<64x32xf32, #tpu.memory_space<vmem>>, vector<8x16xf32>
    tpu.vector_store %arg13[%c8, %c0_20], %111 {strides = array<i32>} : memref<64x32xf32, #tpu.memory_space<vmem>>, vector<8x16xf32>,
    %113 = vector.extract_strided_slice %110 {offsets = [0, 16], sizes = [8, 16], strides = [1, 1]} : vector<8x32xf32> to vector<8x16xf32>
    %c48 = arith.constant 48 : index
    %c16_21 = arith.constant 16 : index
    %114 = vector.load %arg13[%c48, %c16_21] : memref<64x32xf32, #tpu.memory_space<vmem>>, vector<8x16xf32>
    tpu.vector_store %arg13[%c48, %c16_21], %113 {strides = array<i32>} : memref<64x32xf32, #tpu.memory_space<vmem>>, vector<8x16xf32>,
    %115 = arith.truncf %110 : vector<8x32xf32> to vector<8x32xbf16>
    %cst_22 = arith.constant dense<0.000000e+00> : vector<8x128xf32>
    %116 = tpu.matmul %115, %66, %cst_22 {dimension_numbers = #tpu.dot_dimension_numbers<[1], [0], [0], [1], [0, 0, 1, 1], [], []>} : vector<8x32xbf16>, vector<32x128xbf16>, vector<8x128xf32> -> vector<8x128xf32>
    %117 = arith.addf %40, %116 : vector<8x128xf32>
    %118 = vector.extract_strided_slice %117 {offsets = [0, 0], sizes = [8, 96], strides = [1, 1]} : vector<8x128xf32> to vector<8x96xf32>
    %119 = arith.negf %118 : vector<8x96xf32>
    %120 = math.exp %119 : vector<8x96xf32>
    %cst_23 = arith.constant 1.000000e+00 : f32
    %121 = vector.broadcast %cst_23 : f32 to vector<8x96xf32>
    %122 = arith.addf %121, %120 : vector<8x96xf32>
    %123 = arith.divf %121, %122 : vector<8x96xf32>
    %124 = vector.extract_strided_slice %123 {offsets = [0, 0], sizes = [8, 32], strides = [1, 1]} : vector<8x96xf32> to vector<8x32xf32>
    %125 = vector.extract_strided_slice %123 {offsets = [0, 32], sizes = [8, 32], strides = [1, 1]} : vector<8x96xf32> to vector<8x32xf32>
    %126 = vector.extract_strided_slice %123 {offsets = [0, 64], sizes = [8, 32], strides = [1, 1]} : vector<8x96xf32> to vector<8x32xf32>
    %127 = vector.extract_strided_slice %117 {offsets = [0, 96], sizes = [8, 32], strides = [1, 1]} : vector<8x128xf32> to vector<8x32xf32>
    %128 = math.tanh %127 : vector<8x32xf32>
    %129 = arith.mulf %125, %108 : vector<8x32xf32>
    %130 = arith.mulf %124, %128 : vector<8x32xf32>
    %131 = arith.addf %129, %130 : vector<8x32xf32>
    %132 = math.tanh %131 : vector<8x32xf32>
    %133 = arith.mulf %126, %132 : vector<8x32xf32>
    %134 = vector.extract_strided_slice %133 {offsets = [0, 0], sizes = [8, 16], strides = [1, 1]} : vector<8x32xf32> to vector<8x16xf32>
    %c16_24 = arith.constant 16 : index
    %c0_25 = arith.constant 0 : index
    %135 = vector.load %arg13[%c16_24, %c0_25] : memref<64x32xf32, #tpu.memory_space<vmem>>, vector<8x16xf32>
    tpu.vector_store %arg13[%c16_24, %c0_25], %134 {strides = array<i32>} : memref<64x32xf32, #tpu.memory_space<vmem>>, vector<8x16xf32>,
    %136 = vector.extract_strided_slice %133 {offsets = [0, 16], sizes = [8, 16], strides = [1, 1]} : vector<8x32xf32> to vector<8x16xf32>
    %c40 = arith.constant 40 : index
    %c16_26 = arith.constant 16 : index
    %137 = vector.load %arg13[%c40, %c16_26] : memref<64x32xf32, #tpu.memory_space<vmem>>, vector<8x16xf32>
    tpu.vector_store %arg13[%c40, %c16_26], %136 {strides = array<i32>} : memref<64x32xf32, #tpu.memory_space<vmem>>, vector<8x16xf32>,
    %138 = arith.truncf %133 : vector<8x32xf32> to vector<8x32xbf16>
    %cst_27 = arith.constant dense<0.000000e+00> : vector<8x128xf32>
    %139 = tpu.matmul %138, %66, %cst_27 {dimension_numbers = #tpu.dot_dimension_numbers<[1], [0], [0], [1], [0, 0, 1, 1], [], []>} : vector<8x32xbf16>, vector<32x128xbf16>, vector<8x128xf32> -> vector<8x128xf32>
    %140 = arith.addf %45, %139 : vector<8x128xf32>
    %141 = vector.extract_strided_slice %140 {offsets = [0, 0], sizes = [8, 96], strides = [1, 1]} : vector<8x128xf32> to vector<8x96xf32>
    %142 = arith.negf %141 : vector<8x96xf32>
    %143 = math.exp %142 : vector<8x96xf32>
    %cst_28 = arith.constant 1.000000e+00 : f32
    %144 = vector.broadcast %cst_28 : f32 to vector<8x96xf32>
    %145 = arith.addf %144, %143 : vector<8x96xf32>
    %146 = arith.divf %144, %145 : vector<8x96xf32>
    %147 = vector.extract_strided_slice %146 {offsets = [0, 0], sizes = [8, 32], strides = [1, 1]} : vector<8x96xf32> to vector<8x32xf32>
    %148 = vector.extract_strided_slice %146 {offsets = [0, 32], sizes = [8, 32], strides = [1, 1]} : vector<8x96xf32> to vector<8x32xf32>
    %149 = vector.extract_strided_slice %146 {offsets = [0, 64], sizes = [8, 32], strides = [1, 1]} : vector<8x96xf32> to vector<8x32xf32>
    %150 = vector.extract_strided_slice %140 {offsets = [0, 96], sizes = [8, 32], strides = [1, 1]} : vector<8x128xf32> to vector<8x32xf32>
    %151 = math.tanh %150 : vector<8x32xf32>
    %152 = arith.mulf %148, %131 : vector<8x32xf32>
    %153 = arith.mulf %147, %151 : vector<8x32xf32>
    %154 = arith.addf %152, %153 : vector<8x32xf32>
    %155 = math.tanh %154 : vector<8x32xf32>
    %156 = arith.mulf %149, %155 : vector<8x32xf32>
    %157 = vector.extract_strided_slice %156 {offsets = [0, 0], sizes = [8, 16], strides = [1, 1]} : vector<8x32xf32> to vector<8x16xf32>
    %c24 = arith.constant 24 : index
    %c0_29 = arith.constant 0 : index
    %158 = vector.load %arg13[%c24, %c0_29] : memref<64x32xf32, #tpu.memory_space<vmem>>, vector<8x16xf32>
    tpu.vector_store %arg13[%c24, %c0_29], %157 {strides = array<i32>} : memref<64x32xf32, #tpu.memory_space<vmem>>, vector<8x16xf32>,
    %159 = vector.extract_strided_slice %156 {offsets = [0, 16], sizes = [8, 16], strides = [1, 1]} : vector<8x32xf32> to vector<8x16xf32>
    %c32 = arith.constant 32 : index
    %c16_30 = arith.constant 16 : index
    %160 = vector.load %arg13[%c32, %c16_30] : memref<64x32xf32, #tpu.memory_space<vmem>>, vector<8x16xf32>
    tpu.vector_store %arg13[%c32, %c16_30], %159 {strides = array<i32>} : memref<64x32xf32, #tpu.memory_space<vmem>>, vector<8x16xf32>,
    %161 = arith.truncf %156 : vector<8x32xf32> to vector<8x32xbf16>
    %cst_31 = arith.constant dense<0.000000e+00> : vector<8x128xf32>
    %162 = tpu.matmul %161, %66, %cst_31 {dimension_numbers = #tpu.dot_dimension_numbers<[1], [0], [0], [1], [0, 0, 1, 1], [], []>} : vector<8x32xbf16>, vector<32x128xbf16>, vector<8x128xf32> -> vector<8x128xf32>
    %163 = arith.addf %50, %162 : vector<8x128xf32>
    %164 = vector.extract_strided_slice %163 {offsets = [0, 0], sizes = [8, 96], strides = [1, 1]} : vector<8x128xf32> to vector<8x96xf32>
    %165 = arith.negf %164 : vector<8x96xf32>
    %166 = math.exp %165 : vector<8x96xf32>
    %cst_32 = arith.constant 1.000000e+00 : f32
    %167 = vector.broadcast %cst_32 : f32 to vector<8x96xf32>
    %168 = arith.addf %167, %166 : vector<8x96xf32>
    %169 = arith.divf %167, %168 : vector<8x96xf32>
    %170 = vector.extract_strided_slice %169 {offsets = [0, 0], sizes = [8, 32], strides = [1, 1]} : vector<8x96xf32> to vector<8x32xf32>
    %171 = vector.extract_strided_slice %169 {offsets = [0, 32], sizes = [8, 32], strides = [1, 1]} : vector<8x96xf32> to vector<8x32xf32>
    %172 = vector.extract_strided_slice %169 {offsets = [0, 64], sizes = [8, 32], strides = [1, 1]} : vector<8x96xf32> to vector<8x32xf32>
    %173 = vector.extract_strided_slice %163 {offsets = [0, 96], sizes = [8, 32], strides = [1, 1]} : vector<8x128xf32> to vector<8x32xf32>
    %174 = math.tanh %173 : vector<8x32xf32>
    %175 = arith.mulf %171, %154 : vector<8x32xf32>
    %176 = arith.mulf %170, %174 : vector<8x32xf32>
    %177 = arith.addf %175, %176 : vector<8x32xf32>
    %178 = math.tanh %177 : vector<8x32xf32>
    %179 = arith.mulf %172, %178 : vector<8x32xf32>
    %180 = vector.extract_strided_slice %179 {offsets = [0, 0], sizes = [8, 16], strides = [1, 1]} : vector<8x32xf32> to vector<8x16xf32>
    %c32_33 = arith.constant 32 : index
    %c0_34 = arith.constant 0 : index
    %181 = vector.load %arg13[%c32_33, %c0_34] : memref<64x32xf32, #tpu.memory_space<vmem>>, vector<8x16xf32>
    tpu.vector_store %arg13[%c32_33, %c0_34], %180 {strides = array<i32>} : memref<64x32xf32, #tpu.memory_space<vmem>>, vector<8x16xf32>,
    %182 = vector.extract_strided_slice %179 {offsets = [0, 16], sizes = [8, 16], strides = [1, 1]} : vector<8x32xf32> to vector<8x16xf32>
    %c24_35 = arith.constant 24 : index
    %c16_36 = arith.constant 16 : index
    %183 = vector.load %arg13[%c24_35, %c16_36] : memref<64x32xf32, #tpu.memory_space<vmem>>, vector<8x16xf32>
    tpu.vector_store %arg13[%c24_35, %c16_36], %182 {strides = array<i32>} : memref<64x32xf32, #tpu.memory_space<vmem>>, vector<8x16xf32>,
    %184 = arith.truncf %179 : vector<8x32xf32> to vector<8x32xbf16>
    %cst_37 = arith.constant dense<0.000000e+00> : vector<8x128xf32>
    %185 = tpu.matmul %184, %66, %cst_37 {dimension_numbers = #tpu.dot_dimension_numbers<[1], [0], [0], [1], [0, 0, 1, 1], [], []>} : vector<8x32xbf16>, vector<32x128xbf16>, vector<8x128xf32> -> vector<8x128xf32>
    %186 = arith.addf %55, %185 : vector<8x128xf32>
    %187 = vector.extract_strided_slice %186 {offsets = [0, 0], sizes = [8, 96], strides = [1, 1]} : vector<8x128xf32> to vector<8x96xf32>
    %188 = arith.negf %187 : vector<8x96xf32>
    %189 = math.exp %188 : vector<8x96xf32>
    %cst_38 = arith.constant 1.000000e+00 : f32
    %190 = vector.broadcast %cst_38 : f32 to vector<8x96xf32>
    %191 = arith.addf %190, %189 : vector<8x96xf32>
    %192 = arith.divf %190, %191 : vector<8x96xf32>
    %193 = vector.extract_strided_slice %192 {offsets = [0, 0], sizes = [8, 32], strides = [1, 1]} : vector<8x96xf32> to vector<8x32xf32>
    %194 = vector.extract_strided_slice %192 {offsets = [0, 32], sizes = [8, 32], strides = [1, 1]} : vector<8x96xf32> to vector<8x32xf32>
    %195 = vector.extract_strided_slice %192 {offsets = [0, 64], sizes = [8, 32], strides = [1, 1]} : vector<8x96xf32> to vector<8x32xf32>
    %196 = vector.extract_strided_slice %186 {offsets = [0, 96], sizes = [8, 32], strides = [1, 1]} : vector<8x128xf32> to vector<8x32xf32>
    %197 = math.tanh %196 : vector<8x32xf32>
    %198 = arith.mulf %194, %177 : vector<8x32xf32>
    %199 = arith.mulf %193, %197 : vector<8x32xf32>
    %200 = arith.addf %198, %199 : vector<8x32xf32>
    %201 = math.tanh %200 : vector<8x32xf32>
    %202 = arith.mulf %195, %201 : vector<8x32xf32>
    %203 = vector.extract_strided_slice %202 {offsets = [0, 0], sizes = [8, 16], strides = [1, 1]} : vector<8x32xf32> to vector<8x16xf32>
    %c40_39 = arith.constant 40 : index
    %c0_40 = arith.constant 0 : index
    %204 = vector.load %arg13[%c40_39, %c0_40] : memref<64x32xf32, #tpu.memory_space<vmem>>, vector<8x16xf32>
    tpu.vector_store %arg13[%c40_39, %c0_40], %203 {strides = array<i32>} : memref<64x32xf32, #tpu.memory_space<vmem>>, vector<8x16xf32>,
    %205 = vector.extract_strided_slice %202 {offsets = [0, 16], sizes = [8, 16], strides = [1, 1]} : vector<8x32xf32> to vector<8x16xf32>
    %c16_41 = arith.constant 16 : index
    %c16_42 = arith.constant 16 : index
    %206 = vector.load %arg13[%c16_41, %c16_42] : memref<64x32xf32, #tpu.memory_space<vmem>>, vector<8x16xf32>
    tpu.vector_store %arg13[%c16_41, %c16_42], %205 {strides = array<i32>} : memref<64x32xf32, #tpu.memory_space<vmem>>, vector<8x16xf32>,
    %207 = arith.truncf %202 : vector<8x32xf32> to vector<8x32xbf16>
    %cst_43 = arith.constant dense<0.000000e+00> : vector<8x128xf32>
    %208 = tpu.matmul %207, %66, %cst_43 {dimension_numbers = #tpu.dot_dimension_numbers<[1], [0], [0], [1], [0, 0, 1, 1], [], []>} : vector<8x32xbf16>, vector<32x128xbf16>, vector<8x128xf32> -> vector<8x128xf32>
    %209 = arith.addf %60, %208 : vector<8x128xf32>
    %210 = vector.extract_strided_slice %209 {offsets = [0, 0], sizes = [8, 96], strides = [1, 1]} : vector<8x128xf32> to vector<8x96xf32>
    %211 = arith.negf %210 : vector<8x96xf32>
    %212 = math.exp %211 : vector<8x96xf32>
    %cst_44 = arith.constant 1.000000e+00 : f32
    %213 = vector.broadcast %cst_44 : f32 to vector<8x96xf32>
    %214 = arith.addf %213, %212 : vector<8x96xf32>
    %215 = arith.divf %213, %214 : vector<8x96xf32>
    %216 = vector.extract_strided_slice %215 {offsets = [0, 0], sizes = [8, 32], strides = [1, 1]} : vector<8x96xf32> to vector<8x32xf32>
    %217 = vector.extract_strided_slice %215 {offsets = [0, 32], sizes = [8, 32], strides = [1, 1]} : vector<8x96xf32> to vector<8x32xf32>
    %218 = vector.extract_strided_slice %215 {offsets = [0, 64], sizes = [8, 32], strides = [1, 1]} : vector<8x96xf32> to vector<8x32xf32>
    %219 = vector.extract_strided_slice %209 {offsets = [0, 96], sizes = [8, 32], strides = [1, 1]} : vector<8x128xf32> to vector<8x32xf32>
    %220 = math.tanh %219 : vector<8x32xf32>
    %221 = arith.mulf %217, %200 : vector<8x32xf32>
    %222 = arith.mulf %216, %220 : vector<8x32xf32>
    %223 = arith.addf %221, %222 : vector<8x32xf32>
    %224 = math.tanh %223 : vector<8x32xf32>
    %225 = arith.mulf %218, %224 : vector<8x32xf32>
    %226 = vector.extract_strided_slice %225 {offsets = [0, 0], sizes = [8, 16], strides = [1, 1]} : vector<8x32xf32> to vector<8x16xf32>
    %c48_45 = arith.constant 48 : index
    %c0_46 = arith.constant 0 : index
    %227 = vector.load %arg13[%c48_45, %c0_46] : memref<64x32xf32, #tpu.memory_space<vmem>>, vector<8x16xf32>
    tpu.vector_store %arg13[%c48_45, %c0_46], %226 {strides = array<i32>} : memref<64x32xf32, #tpu.memory_space<vmem>>, vector<8x16xf32>,
    %228 = vector.extract_strided_slice %225 {offsets = [0, 16], sizes = [8, 16], strides = [1, 1]} : vector<8x32xf32> to vector<8x16xf32>
    %c8_47 = arith.constant 8 : index
    %c16_48 = arith.constant 16 : index
    %229 = vector.load %arg13[%c8_47, %c16_48] : memref<64x32xf32, #tpu.memory_space<vmem>>, vector<8x16xf32>
    tpu.vector_store %arg13[%c8_47, %c16_48], %228 {strides = array<i32>} : memref<64x32xf32, #tpu.memory_space<vmem>>, vector<8x16xf32>,
    %230 = arith.truncf %225 : vector<8x32xf32> to vector<8x32xbf16>
    %cst_49 = arith.constant dense<0.000000e+00> : vector<8x128xf32>
    %231 = tpu.matmul %230, %66, %cst_49 {dimension_numbers = #tpu.dot_dimension_numbers<[1], [0], [0], [1], [0, 0, 1, 1], [], []>} : vector<8x32xbf16>, vector<32x128xbf16>, vector<8x128xf32> -> vector<8x128xf32>
    %232 = arith.addf %65, %231 : vector<8x128xf32>
    %233 = vector.extract_strided_slice %232 {offsets = [0, 0], sizes = [8, 96], strides = [1, 1]} : vector<8x128xf32> to vector<8x96xf32>
    %234 = arith.negf %233 : vector<8x96xf32>
    %235 = math.exp %234 : vector<8x96xf32>
    %cst_50 = arith.constant 1.000000e+00 : f32
    %236 = vector.broadcast %cst_50 : f32 to vector<8x96xf32>
    %237 = arith.addf %236, %235 : vector<8x96xf32>
    %238 = arith.divf %236, %237 : vector<8x96xf32>
    %239 = vector.extract_strided_slice %238 {offsets = [0, 0], sizes = [8, 32], strides = [1, 1]} : vector<8x96xf32> to vector<8x32xf32>
    %240 = vector.extract_strided_slice %238 {offsets = [0, 32], sizes = [8, 32], strides = [1, 1]} : vector<8x96xf32> to vector<8x32xf32>
    %241 = vector.extract_strided_slice %238 {offsets = [0, 64], sizes = [8, 32], strides = [1, 1]} : vector<8x96xf32> to vector<8x32xf32>
    %242 = vector.extract_strided_slice %232 {offsets = [0, 96], sizes = [8, 32], strides = [1, 1]} : vector<8x128xf32> to vector<8x32xf32>
    %243 = math.tanh %242 : vector<8x32xf32>
    %244 = arith.mulf %240, %223 : vector<8x32xf32>
    %245 = arith.mulf %239, %243 : vector<8x32xf32>
    %246 = arith.addf %244, %245 : vector<8x32xf32>
    %247 = math.tanh %246 : vector<8x32xf32>
    %248 = arith.mulf %241, %247 : vector<8x32xf32>
    %249 = vector.extract_strided_slice %248 {offsets = [0, 0], sizes = [8, 16], strides = [1, 1]} : vector<8x32xf32> to vector<8x16xf32>
    %c56_51 = arith.constant 56 : index
    %c0_52 = arith.constant 0 : index
    %250 = vector.load %arg13[%c56_51, %c0_52] : memref<64x32xf32, #tpu.memory_space<vmem>>, vector<8x16xf32>
    tpu.vector_store %arg13[%c56_51, %c0_52], %249 {strides = array<i32>} : memref<64x32xf32, #tpu.memory_space<vmem>>, vector<8x16xf32>,
    %251 = vector.extract_strided_slice %248 {offsets = [0, 16], sizes = [8, 16], strides = [1, 1]} : vector<8x32xf32> to vector<8x16xf32>
    %c0_53 = arith.constant 0 : index
    %c16_54 = arith.constant 16 : index
    %252 = vector.load %arg13[%c0_53, %c16_54] : memref<64x32xf32, #tpu.memory_space<vmem>>, vector<8x16xf32>
    tpu.vector_store %arg13[%c0_53, %c16_54], %251 {strides = array<i32>} : memref<64x32xf32, #tpu.memory_space<vmem>>, vector<8x16xf32>,
    %c0_55 = arith.constant 0 : index
    %c0_56 = arith.constant 0 : index
    %253 = vector.load %arg13[%c0_55, %c0_56] : memref<64x32xf32, #tpu.memory_space<vmem>>, vector<64x32xf32>
    %254 = arith.truncf %253 : vector<64x32xf32> to vector<64x32xbf16>
    %c0_57 = arith.constant 0 : index
    %c0_58 = arith.constant 0 : index
    %255 = vector.load %arg7[%c0_57, %c0_58] : memref<32x5xbf16, #tpu.memory_space<vmem>>, vector<32x5xbf16>
    %cst_59 = arith.constant dense<0.000000e+00> : vector<64x5xf32>
    %256 = tpu.matmul %254, %255, %cst_59 {dimension_numbers = #tpu.dot_dimension_numbers<[1], [0], [0], [1], [0, 0, 1, 1], [], []>} : vector<64x32xbf16>, vector<32x5xbf16>, vector<64x5xf32> -> vector<64x5xf32>
    %c0_60 = arith.constant 0 : index
    %c0_61 = arith.constant 0 : index
    %257 = vector.load %arg8[%c0_60, %c0_61] : memref<1x5xf32, #tpu.memory_space<vmem>>, vector<1x5xf32>
    %258 = vector.broadcast %257 : vector<1x5xf32> to vector<64x5xf32>
    %259 = arith.addf %256, %258 : vector<64x5xf32>
    %c0_62 = arith.constant 0 : index
    %c0_63 = arith.constant 0 : index
    %260 = vector.load %arg10[%c0_62, %c0_63] : memref<64x5xf32, #tpu.memory_space<vmem>>, vector<64x5xf32>
    tpu.vector_store %arg10[%c0_62, %c0_63], %259 {strides = array<i32>} : memref<64x5xf32, #tpu.memory_space<vmem>>, vector<64x5xf32>,
    %c0_64 = arith.constant 0 : index
    %c0_65 = arith.constant 0 : index
    %261 = vector.load %arg9[%c0_64, %c0_65] : memref<5x5xf32, #tpu.memory_space<vmem>>, vector<5x5xf32>
    %262 = vector.extract_strided_slice %261 {offsets = [0, 0], sizes = [1, 5], strides = [1, 1]} : vector<5x5xf32> to vector<1x5xf32>
    %263 = vector.extract_strided_slice %261 {offsets = [1, 0], sizes = [1, 5], strides = [1, 1]} : vector<5x5xf32> to vector<1x5xf32>
    %264 = vector.extract_strided_slice %261 {offsets = [2, 0], sizes = [1, 5], strides = [1, 1]} : vector<5x5xf32> to vector<1x5xf32>
    %265 = vector.extract_strided_slice %261 {offsets = [3, 0], sizes = [1, 5], strides = [1, 1]} : vector<5x5xf32> to vector<1x5xf32>
    %266 = vector.extract_strided_slice %261 {offsets = [4, 0], sizes = [1, 5], strides = [1, 1]} : vector<5x5xf32> to vector<1x5xf32>
    %267 = tpu.iota {dimensions = array<i32: 1>} : vector<8x5xi32>
    %c3_i32 = arith.constant 3 : i32
    %268 = vector.broadcast %c3_i32 : i32 to vector<8x5xi32>
    %269 = arith.cmpi eq, %267, %268 : vector<8x5xi32>
    %cst_66 = arith.constant 0.000000e+00 : f32
    %cst_67 = arith.constant -1.000000e+04 : f32
    %270 = vector.broadcast %cst_66 : f32 to vector<8x5xf32>
    %271 = vector.broadcast %cst_67 : f32 to vector<8x5xf32>
    %272 = arith.select %269, %270, %271 : vector<8x5xi1>, vector<8x5xf32>
    %cst_68 = arith.constant 0.000000e+00 : f32
    %273 = vector.broadcast %cst_68 : f32 to vector<8x5xf32>
    %c0_i32_69 = arith.constant 0 : i32
    %274 = vector.broadcast %c0_i32_69 : i32 to vector<8x5xi32>
    %275 = vector.broadcast %262 : vector<1x5xf32> to vector<8x5xf32>
    %276 = arith.addf %272, %275 : vector<8x5xf32>
    %cst_70 = arith.constant dense<0xFF800000> : vector<8xf32>
    %277 = vector.multi_reduction <maximumf>, %276, %cst_70 [1] : vector<8x5xf32> to vector<8xf32>
    %278 = vector.shape_cast %277 : vector<8xf32> to vector<8x1xf32>
    %279 = vector.broadcast %278 : vector<8x1xf32> to vector<8x5xf32>
    %280 = arith.cmpf oeq, %276, %279 : vector<8x5xf32>
    %c5_i32 = arith.constant 5 : i32
    %281 = vector.broadcast %c5_i32 : i32 to vector<8x5xi32>
    %282 = arith.select %280, %267, %281 : vector<8x5xi1>, vector<8x5xi32>
    %cst_71 = arith.constant dense<2147483647> : vector<8xi32>
    %283 = vector.multi_reduction <minsi>, %282, %cst_71 [1] : vector<8x5xi32> to vector<8xi32>
    %284 = vector.shape_cast %283 : vector<8xi32> to vector<8x1xi32>
    %c0_i32_72 = arith.constant 0 : i32
    %285 = vector.broadcast %c0_i32_72 : i32 to vector<8x5xi32>
    %286 = arith.cmpi eq, %267, %285 : vector<8x5xi32>
    %287 = vector.shape_cast %278 : vector<8x1xf32> to vector<8x1xf32>
    %288 = vector.broadcast %287 : vector<8x1xf32> to vector<8x5xf32>
    %289 = arith.select %286, %288, %273 : vector<8x5xi1>, vector<8x5xf32>
    %c0_i32_73 = arith.constant 0 : i32
    %290 = vector.broadcast %c0_i32_73 : i32 to vector<8x5xi32>
    %291 = arith.cmpi eq, %267, %290 : vector<8x5xi32>
    %292 = vector.shape_cast %284 : vector<8x1xi32> to vector<8x1xi32>
    %293 = vector.broadcast %292 : vector<8x1xi32> to vector<8x5xi32>
    %294 = arith.select %291, %293, %274 : vector<8x5xi1>, vector<8x5xi32>
    %295 = vector.broadcast %263 : vector<1x5xf32> to vector<8x5xf32>
    %296 = arith.addf %272, %295 : vector<8x5xf32>
    %cst_74 = arith.constant dense<0xFF800000> : vector<8xf32>
    %297 = vector.multi_reduction <maximumf>, %296, %cst_74 [1] : vector<8x5xf32> to vector<8xf32>
    %298 = vector.shape_cast %297 : vector<8xf32> to vector<8x1xf32>
    %299 = vector.broadcast %298 : vector<8x1xf32> to vector<8x5xf32>
    %300 = arith.cmpf oeq, %296, %299 : vector<8x5xf32>
    %c5_i32_75 = arith.constant 5 : i32
    %301 = vector.broadcast %c5_i32_75 : i32 to vector<8x5xi32>
    %302 = arith.select %300, %267, %301 : vector<8x5xi1>, vector<8x5xi32>
    %cst_76 = arith.constant dense<2147483647> : vector<8xi32>
    %303 = vector.multi_reduction <minsi>, %302, %cst_76 [1] : vector<8x5xi32> to vector<8xi32>
    %304 = vector.shape_cast %303 : vector<8xi32> to vector<8x1xi32>
    %c1_i32_77 = arith.constant 1 : i32
    %305 = vector.broadcast %c1_i32_77 : i32 to vector<8x5xi32>
    %306 = arith.cmpi eq, %267, %305 : vector<8x5xi32>
    %307 = vector.shape_cast %298 : vector<8x1xf32> to vector<8x1xf32>
    %308 = vector.broadcast %307 : vector<8x1xf32> to vector<8x5xf32>
    %309 = arith.select %306, %308, %289 : vector<8x5xi1>, vector<8x5xf32>
    %c1_i32_78 = arith.constant 1 : i32
    %310 = vector.broadcast %c1_i32_78 : i32 to vector<8x5xi32>
    %311 = arith.cmpi eq, %267, %310 : vector<8x5xi32>
    %312 = vector.shape_cast %304 : vector<8x1xi32> to vector<8x1xi32>
    %313 = vector.broadcast %312 : vector<8x1xi32> to vector<8x5xi32>
    %314 = arith.select %311, %313, %294 : vector<8x5xi1>, vector<8x5xi32>
    %315 = vector.broadcast %264 : vector<1x5xf32> to vector<8x5xf32>
    %316 = arith.addf %272, %315 : vector<8x5xf32>
    %cst_79 = arith.constant dense<0xFF800000> : vector<8xf32>
    %317 = vector.multi_reduction <maximumf>, %316, %cst_79 [1] : vector<8x5xf32> to vector<8xf32>
    %318 = vector.shape_cast %317 : vector<8xf32> to vector<8x1xf32>
    %319 = vector.broadcast %318 : vector<8x1xf32> to vector<8x5xf32>
    %320 = arith.cmpf oeq, %316, %319 : vector<8x5xf32>
    %c5_i32_80 = arith.constant 5 : i32
    %321 = vector.broadcast %c5_i32_80 : i32 to vector<8x5xi32>
    %322 = arith.select %320, %267, %321 : vector<8x5xi1>, vector<8x5xi32>
    %cst_81 = arith.constant dense<2147483647> : vector<8xi32>
    %323 = vector.multi_reduction <minsi>, %322, %cst_81 [1] : vector<8x5xi32> to vector<8xi32>
    %324 = vector.shape_cast %323 : vector<8xi32> to vector<8x1xi32>
    %c2_i32 = arith.constant 2 : i32
    %325 = vector.broadcast %c2_i32 : i32 to vector<8x5xi32>
    %326 = arith.cmpi eq, %267, %325 : vector<8x5xi32>
    %327 = vector.shape_cast %318 : vector<8x1xf32> to vector<8x1xf32>
    %328 = vector.broadcast %327 : vector<8x1xf32> to vector<8x5xf32>
    %329 = arith.select %326, %328, %309 : vector<8x5xi1>, vector<8x5xf32>
    %c2_i32_82 = arith.constant 2 : i32
    %330 = vector.broadcast %c2_i32_82 : i32 to vector<8x5xi32>
    %331 = arith.cmpi eq, %267, %330 : vector<8x5xi32>
    %332 = vector.shape_cast %324 : vector<8x1xi32> to vector<8x1xi32>
    %333 = vector.broadcast %332 : vector<8x1xi32> to vector<8x5xi32>
    %334 = arith.select %331, %333, %314 : vector<8x5xi1>, vector<8x5xi32>
    %335 = vector.broadcast %265 : vector<1x5xf32> to vector<8x5xf32>
    %336 = arith.addf %272, %335 : vector<8x5xf32>
    %cst_83 = arith.constant dense<0xFF800000> : vector<8xf32>
    %337 = vector.multi_reduction <maximumf>, %336, %cst_83 [1] : vector<8x5xf32> to vector<8xf32>
    %338 = vector.shape_cast %337 : vector<8xf32> to vector<8x1xf32>
    %339 = vector.broadcast %338 : vector<8x1xf32> to vector<8x5xf32>
    %340 = arith.cmpf oeq, %336, %339 : vector<8x5xf32>
    %c5_i32_84 = arith.constant 5 : i32
    %341 = vector.broadcast %c5_i32_84 : i32 to vector<8x5xi32>
    %342 = arith.select %340, %267, %341 : vector<8x5xi1>, vector<8x5xi32>
    %cst_85 = arith.constant dense<2147483647> : vector<8xi32>
    %343 = vector.multi_reduction <minsi>, %342, %cst_85 [1] : vector<8x5xi32> to vector<8xi32>
    %344 = vector.shape_cast %343 : vector<8xi32> to vector<8x1xi32>
    %c3_i32_86 = arith.constant 3 : i32
    %345 = vector.broadcast %c3_i32_86 : i32 to vector<8x5xi32>
    %346 = arith.cmpi eq, %267, %345 : vector<8x5xi32>
    %347 = vector.shape_cast %338 : vector<8x1xf32> to vector<8x1xf32>
    %348 = vector.broadcast %347 : vector<8x1xf32> to vector<8x5xf32>
    %349 = arith.select %346, %348, %329 : vector<8x5xi1>, vector<8x5xf32>
    %c3_i32_87 = arith.constant 3 : i32
    %350 = vector.broadcast %c3_i32_87 : i32 to vector<8x5xi32>
    %351 = arith.cmpi eq, %267, %350 : vector<8x5xi32>
    %352 = vector.shape_cast %344 : vector<8x1xi32> to vector<8x1xi32>
    %353 = vector.broadcast %352 : vector<8x1xi32> to vector<8x5xi32>
    %354 = arith.select %351, %353, %334 : vector<8x5xi1>, vector<8x5xi32>
    %355 = vector.broadcast %266 : vector<1x5xf32> to vector<8x5xf32>
    %356 = arith.addf %272, %355 : vector<8x5xf32>
    %cst_88 = arith.constant dense<0xFF800000> : vector<8xf32>
    %357 = vector.multi_reduction <maximumf>, %356, %cst_88 [1] : vector<8x5xf32> to vector<8xf32>
    %358 = vector.shape_cast %357 : vector<8xf32> to vector<8x1xf32>
    %359 = vector.broadcast %358 : vector<8x1xf32> to vector<8x5xf32>
    %360 = arith.cmpf oeq, %356, %359 : vector<8x5xf32>
    %c5_i32_89 = arith.constant 5 : i32
    %361 = vector.broadcast %c5_i32_89 : i32 to vector<8x5xi32>
    %362 = arith.select %360, %267, %361 : vector<8x5xi1>, vector<8x5xi32>
    %cst_90 = arith.constant dense<2147483647> : vector<8xi32>
    %363 = vector.multi_reduction <minsi>, %362, %cst_90 [1] : vector<8x5xi32> to vector<8xi32>
    %364 = vector.shape_cast %363 : vector<8xi32> to vector<8x1xi32>
    %c4_i32 = arith.constant 4 : i32
    %365 = vector.broadcast %c4_i32 : i32 to vector<8x5xi32>
    %366 = arith.cmpi eq, %267, %365 : vector<8x5xi32>
    %367 = vector.shape_cast %358 : vector<8x1xf32> to vector<8x1xf32>
    %368 = vector.broadcast %367 : vector<8x1xf32> to vector<8x5xf32>
    %369 = arith.select %366, %368, %349 : vector<8x5xi1>, vector<8x5xf32>
    %c4_i32_91 = arith.constant 4 : i32
    %370 = vector.broadcast %c4_i32_91 : i32 to vector<8x5xi32>
    %371 = arith.cmpi eq, %267, %370 : vector<8x5xi32>
    %372 = vector.shape_cast %364 : vector<8x1xi32> to vector<8x1xi32>
    %373 = vector.broadcast %372 : vector<8x1xi32> to vector<8x5xi32>
    %374 = arith.select %371, %373, %354 : vector<8x5xi1>, vector<8x5xi32>
    %375 = vector.extract_strided_slice %259 {offsets = [0, 0], sizes = [8, 5], strides = [1, 1]} : vector<64x5xf32> to vector<8x5xf32>
    %376 = arith.addf %369, %375 : vector<8x5xf32>
    %cst_92 = arith.constant 0.000000e+00 : f32
    %377 = vector.broadcast %cst_92 : f32 to vector<8x5xf32>
    %c0_i32_93 = arith.constant 0 : i32
    %378 = vector.broadcast %c0_i32_93 : i32 to vector<8x5xi32>
    %379 = vector.broadcast %262 : vector<1x5xf32> to vector<8x5xf32>
    %380 = arith.addf %376, %379 : vector<8x5xf32>
    %cst_94 = arith.constant dense<0xFF800000> : vector<8xf32>
    %381 = vector.multi_reduction <maximumf>, %380, %cst_94 [1] : vector<8x5xf32> to vector<8xf32>
    %382 = vector.shape_cast %381 : vector<8xf32> to vector<8x1xf32>
    %383 = vector.broadcast %382 : vector<8x1xf32> to vector<8x5xf32>
    %384 = arith.cmpf oeq, %380, %383 : vector<8x5xf32>
    %c5_i32_95 = arith.constant 5 : i32
    %385 = vector.broadcast %c5_i32_95 : i32 to vector<8x5xi32>
    %386 = arith.select %384, %267, %385 : vector<8x5xi1>, vector<8x5xi32>
    %cst_96 = arith.constant dense<2147483647> : vector<8xi32>
    %387 = vector.multi_reduction <minsi>, %386, %cst_96 [1] : vector<8x5xi32> to vector<8xi32>
    %388 = vector.shape_cast %387 : vector<8xi32> to vector<8x1xi32>
    %c0_i32_97 = arith.constant 0 : i32
    %389 = vector.broadcast %c0_i32_97 : i32 to vector<8x5xi32>
    %390 = arith.cmpi eq, %267, %389 : vector<8x5xi32>
    %391 = vector.shape_cast %382 : vector<8x1xf32> to vector<8x1xf32>
    %392 = vector.broadcast %391 : vector<8x1xf32> to vector<8x5xf32>
    %393 = arith.select %390, %392, %377 : vector<8x5xi1>, vector<8x5xf32>
    %c0_i32_98 = arith.constant 0 : i32
    %394 = vector.broadcast %c0_i32_98 : i32 to vector<8x5xi32>
    %395 = arith.cmpi eq, %267, %394 : vector<8x5xi32>
    %396 = vector.shape_cast %388 : vector<8x1xi32> to vector<8x1xi32>
    %397 = vector.broadcast %396 : vector<8x1xi32> to vector<8x5xi32>
    %398 = arith.select %395, %397, %378 : vector<8x5xi1>, vector<8x5xi32>
    %399 = vector.broadcast %263 : vector<1x5xf32> to vector<8x5xf32>
    %400 = arith.addf %376, %399 : vector<8x5xf32>
    %cst_99 = arith.constant dense<0xFF800000> : vector<8xf32>
    %401 = vector.multi_reduction <maximumf>, %400, %cst_99 [1] : vector<8x5xf32> to vector<8xf32>
    %402 = vector.shape_cast %401 : vector<8xf32> to vector<8x1xf32>
    %403 = vector.broadcast %402 : vector<8x1xf32> to vector<8x5xf32>
    %404 = arith.cmpf oeq, %400, %403 : vector<8x5xf32>
    %c5_i32_100 = arith.constant 5 : i32
    %405 = vector.broadcast %c5_i32_100 : i32 to vector<8x5xi32>
    %406 = arith.select %404, %267, %405 : vector<8x5xi1>, vector<8x5xi32>
    %cst_101 = arith.constant dense<2147483647> : vector<8xi32>
    %407 = vector.multi_reduction <minsi>, %406, %cst_101 [1] : vector<8x5xi32> to vector<8xi32>
    %408 = vector.shape_cast %407 : vector<8xi32> to vector<8x1xi32>
    %c1_i32_102 = arith.constant 1 : i32
    %409 = vector.broadcast %c1_i32_102 : i32 to vector<8x5xi32>
    %410 = arith.cmpi eq, %267, %409 : vector<8x5xi32>
    %411 = vector.shape_cast %402 : vector<8x1xf32> to vector<8x1xf32>
    %412 = vector.broadcast %411 : vector<8x1xf32> to vector<8x5xf32>
    %413 = arith.select %410, %412, %393 : vector<8x5xi1>, vector<8x5xf32>
    %c1_i32_103 = arith.constant 1 : i32
    %414 = vector.broadcast %c1_i32_103 : i32 to vector<8x5xi32>
    %415 = arith.cmpi eq, %267, %414 : vector<8x5xi32>
    %416 = vector.shape_cast %408 : vector<8x1xi32> to vector<8x1xi32>
    %417 = vector.broadcast %416 : vector<8x1xi32> to vector<8x5xi32>
    %418 = arith.select %415, %417, %398 : vector<8x5xi1>, vector<8x5xi32>
    %419 = vector.broadcast %264 : vector<1x5xf32> to vector<8x5xf32>
    %420 = arith.addf %376, %419 : vector<8x5xf32>
    %cst_104 = arith.constant dense<0xFF800000> : vector<8xf32>
    %421 = vector.multi_reduction <maximumf>, %420, %cst_104 [1] : vector<8x5xf32> to vector<8xf32>
    %422 = vector.shape_cast %421 : vector<8xf32> to vector<8x1xf32>
    %423 = vector.broadcast %422 : vector<8x1xf32> to vector<8x5xf32>
    %424 = arith.cmpf oeq, %420, %423 : vector<8x5xf32>
    %c5_i32_105 = arith.constant 5 : i32
    %425 = vector.broadcast %c5_i32_105 : i32 to vector<8x5xi32>
    %426 = arith.select %424, %267, %425 : vector<8x5xi1>, vector<8x5xi32>
    %cst_106 = arith.constant dense<2147483647> : vector<8xi32>
    %427 = vector.multi_reduction <minsi>, %426, %cst_106 [1] : vector<8x5xi32> to vector<8xi32>
    %428 = vector.shape_cast %427 : vector<8xi32> to vector<8x1xi32>
    %c2_i32_107 = arith.constant 2 : i32
    %429 = vector.broadcast %c2_i32_107 : i32 to vector<8x5xi32>
    %430 = arith.cmpi eq, %267, %429 : vector<8x5xi32>
    %431 = vector.shape_cast %422 : vector<8x1xf32> to vector<8x1xf32>
    %432 = vector.broadcast %431 : vector<8x1xf32> to vector<8x5xf32>
    %433 = arith.select %430, %432, %413 : vector<8x5xi1>, vector<8x5xf32>
    %c2_i32_108 = arith.constant 2 : i32
    %434 = vector.broadcast %c2_i32_108 : i32 to vector<8x5xi32>
    %435 = arith.cmpi eq, %267, %434 : vector<8x5xi32>
    %436 = vector.shape_cast %428 : vector<8x1xi32> to vector<8x1xi32>
    %437 = vector.broadcast %436 : vector<8x1xi32> to vector<8x5xi32>
    %438 = arith.select %435, %437, %418 : vector<8x5xi1>, vector<8x5xi32>
    %439 = vector.broadcast %265 : vector<1x5xf32> to vector<8x5xf32>
    %440 = arith.addf %376, %439 : vector<8x5xf32>
    %cst_109 = arith.constant dense<0xFF800000> : vector<8xf32>
    %441 = vector.multi_reduction <maximumf>, %440, %cst_109 [1] : vector<8x5xf32> to vector<8xf32>
    %442 = vector.shape_cast %441 : vector<8xf32> to vector<8x1xf32>
    %443 = vector.broadcast %442 : vector<8x1xf32> to vector<8x5xf32>
    %444 = arith.cmpf oeq, %440, %443 : vector<8x5xf32>
    %c5_i32_110 = arith.constant 5 : i32
    %445 = vector.broadcast %c5_i32_110 : i32 to vector<8x5xi32>
    %446 = arith.select %444, %267, %445 : vector<8x5xi1>, vector<8x5xi32>
    %cst_111 = arith.constant dense<2147483647> : vector<8xi32>
    %447 = vector.multi_reduction <minsi>, %446, %cst_111 [1] : vector<8x5xi32> to vector<8xi32>
    %448 = vector.shape_cast %447 : vector<8xi32> to vector<8x1xi32>
    %c3_i32_112 = arith.constant 3 : i32
    %449 = vector.broadcast %c3_i32_112 : i32 to vector<8x5xi32>
    %450 = arith.cmpi eq, %267, %449 : vector<8x5xi32>
    %451 = vector.shape_cast %442 : vector<8x1xf32> to vector<8x1xf32>
    %452 = vector.broadcast %451 : vector<8x1xf32> to vector<8x5xf32>
    %453 = arith.select %450, %452, %433 : vector<8x5xi1>, vector<8x5xf32>
    %c3_i32_113 = arith.constant 3 : i32
    %454 = vector.broadcast %c3_i32_113 : i32 to vector<8x5xi32>
    %455 = arith.cmpi eq, %267, %454 : vector<8x5xi32>
    %456 = vector.shape_cast %448 : vector<8x1xi32> to vector<8x1xi32>
    %457 = vector.broadcast %456 : vector<8x1xi32> to vector<8x5xi32>
    %458 = arith.select %455, %457, %438 : vector<8x5xi1>, vector<8x5xi32>
    %459 = vector.broadcast %266 : vector<1x5xf32> to vector<8x5xf32>
    %460 = arith.addf %376, %459 : vector<8x5xf32>
    %cst_114 = arith.constant dense<0xFF800000> : vector<8xf32>
    %461 = vector.multi_reduction <maximumf>, %460, %cst_114 [1] : vector<8x5xf32> to vector<8xf32>
    %462 = vector.shape_cast %461 : vector<8xf32> to vector<8x1xf32>
    %463 = vector.broadcast %462 : vector<8x1xf32> to vector<8x5xf32>
    %464 = arith.cmpf oeq, %460, %463 : vector<8x5xf32>
    %c5_i32_115 = arith.constant 5 : i32
    %465 = vector.broadcast %c5_i32_115 : i32 to vector<8x5xi32>
    %466 = arith.select %464, %267, %465 : vector<8x5xi1>, vector<8x5xi32>
    %cst_116 = arith.constant dense<2147483647> : vector<8xi32>
    %467 = vector.multi_reduction <minsi>, %466, %cst_116 [1] : vector<8x5xi32> to vector<8xi32>
    %468 = vector.shape_cast %467 : vector<8xi32> to vector<8x1xi32>
    %c4_i32_117 = arith.constant 4 : i32
    %469 = vector.broadcast %c4_i32_117 : i32 to vector<8x5xi32>
    %470 = arith.cmpi eq, %267, %469 : vector<8x5xi32>
    %471 = vector.shape_cast %462 : vector<8x1xf32> to vector<8x1xf32>
    %472 = vector.broadcast %471 : vector<8x1xf32> to vector<8x5xf32>
    %473 = arith.select %470, %472, %453 : vector<8x5xi1>, vector<8x5xf32>
    %c4_i32_118 = arith.constant 4 : i32
    %474 = vector.broadcast %c4_i32_118 : i32 to vector<8x5xi32>
    %475 = arith.cmpi eq, %267, %474 : vector<8x5xi32>
    %476 = vector.shape_cast %468 : vector<8x1xi32> to vector<8x1xi32>
    %477 = vector.broadcast %476 : vector<8x1xi32> to vector<8x5xi32>
    %478 = arith.select %475, %477, %458 : vector<8x5xi1>, vector<8x5xi32>
    %479 = vector.extract_strided_slice %259 {offsets = [8, 0], sizes = [8, 5], strides = [1, 1]} : vector<64x5xf32> to vector<8x5xf32>
    %480 = arith.addf %473, %479 : vector<8x5xf32>
    %cst_119 = arith.constant 0.000000e+00 : f32
    %481 = vector.broadcast %cst_119 : f32 to vector<8x5xf32>
    %c0_i32_120 = arith.constant 0 : i32
    %482 = vector.broadcast %c0_i32_120 : i32 to vector<8x5xi32>
    %483 = vector.broadcast %262 : vector<1x5xf32> to vector<8x5xf32>
    %484 = arith.addf %480, %483 : vector<8x5xf32>
    %cst_121 = arith.constant dense<0xFF800000> : vector<8xf32>
    %485 = vector.multi_reduction <maximumf>, %484, %cst_121 [1] : vector<8x5xf32> to vector<8xf32>
    %486 = vector.shape_cast %485 : vector<8xf32> to vector<8x1xf32>
    %487 = vector.broadcast %486 : vector<8x1xf32> to vector<8x5xf32>
    %488 = arith.cmpf oeq, %484, %487 : vector<8x5xf32>
    %c5_i32_122 = arith.constant 5 : i32
    %489 = vector.broadcast %c5_i32_122 : i32 to vector<8x5xi32>
    %490 = arith.select %488, %267, %489 : vector<8x5xi1>, vector<8x5xi32>
    %cst_123 = arith.constant dense<2147483647> : vector<8xi32>
    %491 = vector.multi_reduction <minsi>, %490, %cst_123 [1] : vector<8x5xi32> to vector<8xi32>
    %492 = vector.shape_cast %491 : vector<8xi32> to vector<8x1xi32>
    %c0_i32_124 = arith.constant 0 : i32
    %493 = vector.broadcast %c0_i32_124 : i32 to vector<8x5xi32>
    %494 = arith.cmpi eq, %267, %493 : vector<8x5xi32>
    %495 = vector.shape_cast %486 : vector<8x1xf32> to vector<8x1xf32>
    %496 = vector.broadcast %495 : vector<8x1xf32> to vector<8x5xf32>
    %497 = arith.select %494, %496, %481 : vector<8x5xi1>, vector<8x5xf32>
    %c0_i32_125 = arith.constant 0 : i32
    %498 = vector.broadcast %c0_i32_125 : i32 to vector<8x5xi32>
    %499 = arith.cmpi eq, %267, %498 : vector<8x5xi32>
    %500 = vector.shape_cast %492 : vector<8x1xi32> to vector<8x1xi32>
    %501 = vector.broadcast %500 : vector<8x1xi32> to vector<8x5xi32>
    %502 = arith.select %499, %501, %482 : vector<8x5xi1>, vector<8x5xi32>
    %503 = vector.broadcast %263 : vector<1x5xf32> to vector<8x5xf32>
    %504 = arith.addf %480, %503 : vector<8x5xf32>
    %cst_126 = arith.constant dense<0xFF800000> : vector<8xf32>
    %505 = vector.multi_reduction <maximumf>, %504, %cst_126 [1] : vector<8x5xf32> to vector<8xf32>
    %506 = vector.shape_cast %505 : vector<8xf32> to vector<8x1xf32>
    %507 = vector.broadcast %506 : vector<8x1xf32> to vector<8x5xf32>
    %508 = arith.cmpf oeq, %504, %507 : vector<8x5xf32>
    %c5_i32_127 = arith.constant 5 : i32
    %509 = vector.broadcast %c5_i32_127 : i32 to vector<8x5xi32>
    %510 = arith.select %508, %267, %509 : vector<8x5xi1>, vector<8x5xi32>
    %cst_128 = arith.constant dense<2147483647> : vector<8xi32>
    %511 = vector.multi_reduction <minsi>, %510, %cst_128 [1] : vector<8x5xi32> to vector<8xi32>
    %512 = vector.shape_cast %511 : vector<8xi32> to vector<8x1xi32>
    %c1_i32_129 = arith.constant 1 : i32
    %513 = vector.broadcast %c1_i32_129 : i32 to vector<8x5xi32>
    %514 = arith.cmpi eq, %267, %513 : vector<8x5xi32>
    %515 = vector.shape_cast %506 : vector<8x1xf32> to vector<8x1xf32>
    %516 = vector.broadcast %515 : vector<8x1xf32> to vector<8x5xf32>
    %517 = arith.select %514, %516, %497 : vector<8x5xi1>, vector<8x5xf32>
    %c1_i32_130 = arith.constant 1 : i32
    %518 = vector.broadcast %c1_i32_130 : i32 to vector<8x5xi32>
    %519 = arith.cmpi eq, %267, %518 : vector<8x5xi32>
    %520 = vector.shape_cast %512 : vector<8x1xi32> to vector<8x1xi32>
    %521 = vector.broadcast %520 : vector<8x1xi32> to vector<8x5xi32>
    %522 = arith.select %519, %521, %502 : vector<8x5xi1>, vector<8x5xi32>
    %523 = vector.broadcast %264 : vector<1x5xf32> to vector<8x5xf32>
    %524 = arith.addf %480, %523 : vector<8x5xf32>
    %cst_131 = arith.constant dense<0xFF800000> : vector<8xf32>
    %525 = vector.multi_reduction <maximumf>, %524, %cst_131 [1] : vector<8x5xf32> to vector<8xf32>
    %526 = vector.shape_cast %525 : vector<8xf32> to vector<8x1xf32>
    %527 = vector.broadcast %526 : vector<8x1xf32> to vector<8x5xf32>
    %528 = arith.cmpf oeq, %524, %527 : vector<8x5xf32>
    %c5_i32_132 = arith.constant 5 : i32
    %529 = vector.broadcast %c5_i32_132 : i32 to vector<8x5xi32>
    %530 = arith.select %528, %267, %529 : vector<8x5xi1>, vector<8x5xi32>
    %cst_133 = arith.constant dense<2147483647> : vector<8xi32>
    %531 = vector.multi_reduction <minsi>, %530, %cst_133 [1] : vector<8x5xi32> to vector<8xi32>
    %532 = vector.shape_cast %531 : vector<8xi32> to vector<8x1xi32>
    %c2_i32_134 = arith.constant 2 : i32
    %533 = vector.broadcast %c2_i32_134 : i32 to vector<8x5xi32>
    %534 = arith.cmpi eq, %267, %533 : vector<8x5xi32>
    %535 = vector.shape_cast %526 : vector<8x1xf32> to vector<8x1xf32>
    %536 = vector.broadcast %535 : vector<8x1xf32> to vector<8x5xf32>
    %537 = arith.select %534, %536, %517 : vector<8x5xi1>, vector<8x5xf32>
    %c2_i32_135 = arith.constant 2 : i32
    %538 = vector.broadcast %c2_i32_135 : i32 to vector<8x5xi32>
    %539 = arith.cmpi eq, %267, %538 : vector<8x5xi32>
    %540 = vector.shape_cast %532 : vector<8x1xi32> to vector<8x1xi32>
    %541 = vector.broadcast %540 : vector<8x1xi32> to vector<8x5xi32>
    %542 = arith.select %539, %541, %522 : vector<8x5xi1>, vector<8x5xi32>
    %543 = vector.broadcast %265 : vector<1x5xf32> to vector<8x5xf32>
    %544 = arith.addf %480, %543 : vector<8x5xf32>
    %cst_136 = arith.constant dense<0xFF800000> : vector<8xf32>
    %545 = vector.multi_reduction <maximumf>, %544, %cst_136 [1] : vector<8x5xf32> to vector<8xf32>
    %546 = vector.shape_cast %545 : vector<8xf32> to vector<8x1xf32>
    %547 = vector.broadcast %546 : vector<8x1xf32> to vector<8x5xf32>
    %548 = arith.cmpf oeq, %544, %547 : vector<8x5xf32>
    %c5_i32_137 = arith.constant 5 : i32
    %549 = vector.broadcast %c5_i32_137 : i32 to vector<8x5xi32>
    %550 = arith.select %548, %267, %549 : vector<8x5xi1>, vector<8x5xi32>
    %cst_138 = arith.constant dense<2147483647> : vector<8xi32>
    %551 = vector.multi_reduction <minsi>, %550, %cst_138 [1] : vector<8x5xi32> to vector<8xi32>
    %552 = vector.shape_cast %551 : vector<8xi32> to vector<8x1xi32>
    %c3_i32_139 = arith.constant 3 : i32
    %553 = vector.broadcast %c3_i32_139 : i32 to vector<8x5xi32>
    %554 = arith.cmpi eq, %267, %553 : vector<8x5xi32>
    %555 = vector.shape_cast %546 : vector<8x1xf32> to vector<8x1xf32>
    %556 = vector.broadcast %555 : vector<8x1xf32> to vector<8x5xf32>
    %557 = arith.select %554, %556, %537 : vector<8x5xi1>, vector<8x5xf32>
    %c3_i32_140 = arith.constant 3 : i32
    %558 = vector.broadcast %c3_i32_140 : i32 to vector<8x5xi32>
    %559 = arith.cmpi eq, %267, %558 : vector<8x5xi32>
    %560 = vector.shape_cast %552 : vector<8x1xi32> to vector<8x1xi32>
    %561 = vector.broadcast %560 : vector<8x1xi32> to vector<8x5xi32>
    %562 = arith.select %559, %561, %542 : vector<8x5xi1>, vector<8x5xi32>
    %563 = vector.broadcast %266 : vector<1x5xf32> to vector<8x5xf32>
    %564 = arith.addf %480, %563 : vector<8x5xf32>
    %cst_141 = arith.constant dense<0xFF800000> : vector<8xf32>
    %565 = vector.multi_reduction <maximumf>, %564, %cst_141 [1] : vector<8x5xf32> to vector<8xf32>
    %566 = vector.shape_cast %565 : vector<8xf32> to vector<8x1xf32>
    %567 = vector.broadcast %566 : vector<8x1xf32> to vector<8x5xf32>
    %568 = arith.cmpf oeq, %564, %567 : vector<8x5xf32>
    %c5_i32_142 = arith.constant 5 : i32
    %569 = vector.broadcast %c5_i32_142 : i32 to vector<8x5xi32>
    %570 = arith.select %568, %267, %569 : vector<8x5xi1>, vector<8x5xi32>
    %cst_143 = arith.constant dense<2147483647> : vector<8xi32>
    %571 = vector.multi_reduction <minsi>, %570, %cst_143 [1] : vector<8x5xi32> to vector<8xi32>
    %572 = vector.shape_cast %571 : vector<8xi32> to vector<8x1xi32>
    %c4_i32_144 = arith.constant 4 : i32
    %573 = vector.broadcast %c4_i32_144 : i32 to vector<8x5xi32>
    %574 = arith.cmpi eq, %267, %573 : vector<8x5xi32>
    %575 = vector.shape_cast %566 : vector<8x1xf32> to vector<8x1xf32>
    %576 = vector.broadcast %575 : vector<8x1xf32> to vector<8x5xf32>
    %577 = arith.select %574, %576, %557 : vector<8x5xi1>, vector<8x5xf32>
    %c4_i32_145 = arith.constant 4 : i32
    %578 = vector.broadcast %c4_i32_145 : i32 to vector<8x5xi32>
    %579 = arith.cmpi eq, %267, %578 : vector<8x5xi32>
    %580 = vector.shape_cast %572 : vector<8x1xi32> to vector<8x1xi32>
    %581 = vector.broadcast %580 : vector<8x1xi32> to vector<8x5xi32>
    %582 = arith.select %579, %581, %562 : vector<8x5xi1>, vector<8x5xi32>
    %583 = vector.extract_strided_slice %259 {offsets = [16, 0], sizes = [8, 5], strides = [1, 1]} : vector<64x5xf32> to vector<8x5xf32>
    %584 = arith.addf %577, %583 : vector<8x5xf32>
    %cst_146 = arith.constant 0.000000e+00 : f32
    %585 = vector.broadcast %cst_146 : f32 to vector<8x5xf32>
    %c0_i32_147 = arith.constant 0 : i32
    %586 = vector.broadcast %c0_i32_147 : i32 to vector<8x5xi32>
    %587 = vector.broadcast %262 : vector<1x5xf32> to vector<8x5xf32>
    %588 = arith.addf %584, %587 : vector<8x5xf32>
    %cst_148 = arith.constant dense<0xFF800000> : vector<8xf32>
    %589 = vector.multi_reduction <maximumf>, %588, %cst_148 [1] : vector<8x5xf32> to vector<8xf32>
    %590 = vector.shape_cast %589 : vector<8xf32> to vector<8x1xf32>
    %591 = vector.broadcast %590 : vector<8x1xf32> to vector<8x5xf32>
    %592 = arith.cmpf oeq, %588, %591 : vector<8x5xf32>
    %c5_i32_149 = arith.constant 5 : i32
    %593 = vector.broadcast %c5_i32_149 : i32 to vector<8x5xi32>
    %594 = arith.select %592, %267, %593 : vector<8x5xi1>, vector<8x5xi32>
    %cst_150 = arith.constant dense<2147483647> : vector<8xi32>
    %595 = vector.multi_reduction <minsi>, %594, %cst_150 [1] : vector<8x5xi32> to vector<8xi32>
    %596 = vector.shape_cast %595 : vector<8xi32> to vector<8x1xi32>
    %c0_i32_151 = arith.constant 0 : i32
    %597 = vector.broadcast %c0_i32_151 : i32 to vector<8x5xi32>
    %598 = arith.cmpi eq, %267, %597 : vector<8x5xi32>
    %599 = vector.shape_cast %590 : vector<8x1xf32> to vector<8x1xf32>
    %600 = vector.broadcast %599 : vector<8x1xf32> to vector<8x5xf32>
    %601 = arith.select %598, %600, %585 : vector<8x5xi1>, vector<8x5xf32>
    %c0_i32_152 = arith.constant 0 : i32
    %602 = vector.broadcast %c0_i32_152 : i32 to vector<8x5xi32>
    %603 = arith.cmpi eq, %267, %602 : vector<8x5xi32>
    %604 = vector.shape_cast %596 : vector<8x1xi32> to vector<8x1xi32>
    %605 = vector.broadcast %604 : vector<8x1xi32> to vector<8x5xi32>
    %606 = arith.select %603, %605, %586 : vector<8x5xi1>, vector<8x5xi32>
    %607 = vector.broadcast %263 : vector<1x5xf32> to vector<8x5xf32>
    %608 = arith.addf %584, %607 : vector<8x5xf32>
    %cst_153 = arith.constant dense<0xFF800000> : vector<8xf32>
    %609 = vector.multi_reduction <maximumf>, %608, %cst_153 [1] : vector<8x5xf32> to vector<8xf32>
    %610 = vector.shape_cast %609 : vector<8xf32> to vector<8x1xf32>
    %611 = vector.broadcast %610 : vector<8x1xf32> to vector<8x5xf32>
    %612 = arith.cmpf oeq, %608, %611 : vector<8x5xf32>
    %c5_i32_154 = arith.constant 5 : i32
    %613 = vector.broadcast %c5_i32_154 : i32 to vector<8x5xi32>
    %614 = arith.select %612, %267, %613 : vector<8x5xi1>, vector<8x5xi32>
    %cst_155 = arith.constant dense<2147483647> : vector<8xi32>
    %615 = vector.multi_reduction <minsi>, %614, %cst_155 [1] : vector<8x5xi32> to vector<8xi32>
    %616 = vector.shape_cast %615 : vector<8xi32> to vector<8x1xi32>
    %c1_i32_156 = arith.constant 1 : i32
    %617 = vector.broadcast %c1_i32_156 : i32 to vector<8x5xi32>
    %618 = arith.cmpi eq, %267, %617 : vector<8x5xi32>
    %619 = vector.shape_cast %610 : vector<8x1xf32> to vector<8x1xf32>
    %620 = vector.broadcast %619 : vector<8x1xf32> to vector<8x5xf32>
    %621 = arith.select %618, %620, %601 : vector<8x5xi1>, vector<8x5xf32>
    %c1_i32_157 = arith.constant 1 : i32
    %622 = vector.broadcast %c1_i32_157 : i32 to vector<8x5xi32>
    %623 = arith.cmpi eq, %267, %622 : vector<8x5xi32>
    %624 = vector.shape_cast %616 : vector<8x1xi32> to vector<8x1xi32>
    %625 = vector.broadcast %624 : vector<8x1xi32> to vector<8x5xi32>
    %626 = arith.select %623, %625, %606 : vector<8x5xi1>, vector<8x5xi32>
    %627 = vector.broadcast %264 : vector<1x5xf32> to vector<8x5xf32>
    %628 = arith.addf %584, %627 : vector<8x5xf32>
    %cst_158 = arith.constant dense<0xFF800000> : vector<8xf32>
    %629 = vector.multi_reduction <maximumf>, %628, %cst_158 [1] : vector<8x5xf32> to vector<8xf32>
    %630 = vector.shape_cast %629 : vector<8xf32> to vector<8x1xf32>
    %631 = vector.broadcast %630 : vector<8x1xf32> to vector<8x5xf32>
    %632 = arith.cmpf oeq, %628, %631 : vector<8x5xf32>
    %c5_i32_159 = arith.constant 5 : i32
    %633 = vector.broadcast %c5_i32_159 : i32 to vector<8x5xi32>
    %634 = arith.select %632, %267, %633 : vector<8x5xi1>, vector<8x5xi32>
    %cst_160 = arith.constant dense<2147483647> : vector<8xi32>
    %635 = vector.multi_reduction <minsi>, %634, %cst_160 [1] : vector<8x5xi32> to vector<8xi32>
    %636 = vector.shape_cast %635 : vector<8xi32> to vector<8x1xi32>
    %c2_i32_161 = arith.constant 2 : i32
    %637 = vector.broadcast %c2_i32_161 : i32 to vector<8x5xi32>
    %638 = arith.cmpi eq, %267, %637 : vector<8x5xi32>
    %639 = vector.shape_cast %630 : vector<8x1xf32> to vector<8x1xf32>
    %640 = vector.broadcast %639 : vector<8x1xf32> to vector<8x5xf32>
    %641 = arith.select %638, %640, %621 : vector<8x5xi1>, vector<8x5xf32>
    %c2_i32_162 = arith.constant 2 : i32
    %642 = vector.broadcast %c2_i32_162 : i32 to vector<8x5xi32>
    %643 = arith.cmpi eq, %267, %642 : vector<8x5xi32>
    %644 = vector.shape_cast %636 : vector<8x1xi32> to vector<8x1xi32>
    %645 = vector.broadcast %644 : vector<8x1xi32> to vector<8x5xi32>
    %646 = arith.select %643, %645, %626 : vector<8x5xi1>, vector<8x5xi32>
    %647 = vector.broadcast %265 : vector<1x5xf32> to vector<8x5xf32>
    %648 = arith.addf %584, %647 : vector<8x5xf32>
    %cst_163 = arith.constant dense<0xFF800000> : vector<8xf32>
    %649 = vector.multi_reduction <maximumf>, %648, %cst_163 [1] : vector<8x5xf32> to vector<8xf32>
    %650 = vector.shape_cast %649 : vector<8xf32> to vector<8x1xf32>
    %651 = vector.broadcast %650 : vector<8x1xf32> to vector<8x5xf32>
    %652 = arith.cmpf oeq, %648, %651 : vector<8x5xf32>
    %c5_i32_164 = arith.constant 5 : i32
    %653 = vector.broadcast %c5_i32_164 : i32 to vector<8x5xi32>
    %654 = arith.select %652, %267, %653 : vector<8x5xi1>, vector<8x5xi32>
    %cst_165 = arith.constant dense<2147483647> : vector<8xi32>
    %655 = vector.multi_reduction <minsi>, %654, %cst_165 [1] : vector<8x5xi32> to vector<8xi32>
    %656 = vector.shape_cast %655 : vector<8xi32> to vector<8x1xi32>
    %c3_i32_166 = arith.constant 3 : i32
    %657 = vector.broadcast %c3_i32_166 : i32 to vector<8x5xi32>
    %658 = arith.cmpi eq, %267, %657 : vector<8x5xi32>
    %659 = vector.shape_cast %650 : vector<8x1xf32> to vector<8x1xf32>
    %660 = vector.broadcast %659 : vector<8x1xf32> to vector<8x5xf32>
    %661 = arith.select %658, %660, %641 : vector<8x5xi1>, vector<8x5xf32>
    %c3_i32_167 = arith.constant 3 : i32
    %662 = vector.broadcast %c3_i32_167 : i32 to vector<8x5xi32>
    %663 = arith.cmpi eq, %267, %662 : vector<8x5xi32>
    %664 = vector.shape_cast %656 : vector<8x1xi32> to vector<8x1xi32>
    %665 = vector.broadcast %664 : vector<8x1xi32> to vector<8x5xi32>
    %666 = arith.select %663, %665, %646 : vector<8x5xi1>, vector<8x5xi32>
    %667 = vector.broadcast %266 : vector<1x5xf32> to vector<8x5xf32>
    %668 = arith.addf %584, %667 : vector<8x5xf32>
    %cst_168 = arith.constant dense<0xFF800000> : vector<8xf32>
    %669 = vector.multi_reduction <maximumf>, %668, %cst_168 [1] : vector<8x5xf32> to vector<8xf32>
    %670 = vector.shape_cast %669 : vector<8xf32> to vector<8x1xf32>
    %671 = vector.broadcast %670 : vector<8x1xf32> to vector<8x5xf32>
    %672 = arith.cmpf oeq, %668, %671 : vector<8x5xf32>
    %c5_i32_169 = arith.constant 5 : i32
    %673 = vector.broadcast %c5_i32_169 : i32 to vector<8x5xi32>
    %674 = arith.select %672, %267, %673 : vector<8x5xi1>, vector<8x5xi32>
    %cst_170 = arith.constant dense<2147483647> : vector<8xi32>
    %675 = vector.multi_reduction <minsi>, %674, %cst_170 [1] : vector<8x5xi32> to vector<8xi32>
    %676 = vector.shape_cast %675 : vector<8xi32> to vector<8x1xi32>
    %c4_i32_171 = arith.constant 4 : i32
    %677 = vector.broadcast %c4_i32_171 : i32 to vector<8x5xi32>
    %678 = arith.cmpi eq, %267, %677 : vector<8x5xi32>
    %679 = vector.shape_cast %670 : vector<8x1xf32> to vector<8x1xf32>
    %680 = vector.broadcast %679 : vector<8x1xf32> to vector<8x5xf32>
    %681 = arith.select %678, %680, %661 : vector<8x5xi1>, vector<8x5xf32>
    %c4_i32_172 = arith.constant 4 : i32
    %682 = vector.broadcast %c4_i32_172 : i32 to vector<8x5xi32>
    %683 = arith.cmpi eq, %267, %682 : vector<8x5xi32>
    %684 = vector.shape_cast %676 : vector<8x1xi32> to vector<8x1xi32>
    %685 = vector.broadcast %684 : vector<8x1xi32> to vector<8x5xi32>
    %686 = arith.select %683, %685, %666 : vector<8x5xi1>, vector<8x5xi32>
    %687 = vector.extract_strided_slice %259 {offsets = [24, 0], sizes = [8, 5], strides = [1, 1]} : vector<64x5xf32> to vector<8x5xf32>
    %688 = arith.addf %681, %687 : vector<8x5xf32>
    %cst_173 = arith.constant 0.000000e+00 : f32
    %689 = vector.broadcast %cst_173 : f32 to vector<8x5xf32>
    %c0_i32_174 = arith.constant 0 : i32
    %690 = vector.broadcast %c0_i32_174 : i32 to vector<8x5xi32>
    %691 = vector.broadcast %262 : vector<1x5xf32> to vector<8x5xf32>
    %692 = arith.addf %688, %691 : vector<8x5xf32>
    %cst_175 = arith.constant dense<0xFF800000> : vector<8xf32>
    %693 = vector.multi_reduction <maximumf>, %692, %cst_175 [1] : vector<8x5xf32> to vector<8xf32>
    %694 = vector.shape_cast %693 : vector<8xf32> to vector<8x1xf32>
    %695 = vector.broadcast %694 : vector<8x1xf32> to vector<8x5xf32>
    %696 = arith.cmpf oeq, %692, %695 : vector<8x5xf32>
    %c5_i32_176 = arith.constant 5 : i32
    %697 = vector.broadcast %c5_i32_176 : i32 to vector<8x5xi32>
    %698 = arith.select %696, %267, %697 : vector<8x5xi1>, vector<8x5xi32>
    %cst_177 = arith.constant dense<2147483647> : vector<8xi32>
    %699 = vector.multi_reduction <minsi>, %698, %cst_177 [1] : vector<8x5xi32> to vector<8xi32>
    %700 = vector.shape_cast %699 : vector<8xi32> to vector<8x1xi32>
    %c0_i32_178 = arith.constant 0 : i32
    %701 = vector.broadcast %c0_i32_178 : i32 to vector<8x5xi32>
    %702 = arith.cmpi eq, %267, %701 : vector<8x5xi32>
    %703 = vector.shape_cast %694 : vector<8x1xf32> to vector<8x1xf32>
    %704 = vector.broadcast %703 : vector<8x1xf32> to vector<8x5xf32>
    %705 = arith.select %702, %704, %689 : vector<8x5xi1>, vector<8x5xf32>
    %c0_i32_179 = arith.constant 0 : i32
    %706 = vector.broadcast %c0_i32_179 : i32 to vector<8x5xi32>
    %707 = arith.cmpi eq, %267, %706 : vector<8x5xi32>
    %708 = vector.shape_cast %700 : vector<8x1xi32> to vector<8x1xi32>
    %709 = vector.broadcast %708 : vector<8x1xi32> to vector<8x5xi32>
    %710 = arith.select %707, %709, %690 : vector<8x5xi1>, vector<8x5xi32>
    %711 = vector.broadcast %263 : vector<1x5xf32> to vector<8x5xf32>
    %712 = arith.addf %688, %711 : vector<8x5xf32>
    %cst_180 = arith.constant dense<0xFF800000> : vector<8xf32>
    %713 = vector.multi_reduction <maximumf>, %712, %cst_180 [1] : vector<8x5xf32> to vector<8xf32>
    %714 = vector.shape_cast %713 : vector<8xf32> to vector<8x1xf32>
    %715 = vector.broadcast %714 : vector<8x1xf32> to vector<8x5xf32>
    %716 = arith.cmpf oeq, %712, %715 : vector<8x5xf32>
    %c5_i32_181 = arith.constant 5 : i32
    %717 = vector.broadcast %c5_i32_181 : i32 to vector<8x5xi32>
    %718 = arith.select %716, %267, %717 : vector<8x5xi1>, vector<8x5xi32>
    %cst_182 = arith.constant dense<2147483647> : vector<8xi32>
    %719 = vector.multi_reduction <minsi>, %718, %cst_182 [1] : vector<8x5xi32> to vector<8xi32>
    %720 = vector.shape_cast %719 : vector<8xi32> to vector<8x1xi32>
    %c1_i32_183 = arith.constant 1 : i32
    %721 = vector.broadcast %c1_i32_183 : i32 to vector<8x5xi32>
    %722 = arith.cmpi eq, %267, %721 : vector<8x5xi32>
    %723 = vector.shape_cast %714 : vector<8x1xf32> to vector<8x1xf32>
    %724 = vector.broadcast %723 : vector<8x1xf32> to vector<8x5xf32>
    %725 = arith.select %722, %724, %705 : vector<8x5xi1>, vector<8x5xf32>
    %c1_i32_184 = arith.constant 1 : i32
    %726 = vector.broadcast %c1_i32_184 : i32 to vector<8x5xi32>
    %727 = arith.cmpi eq, %267, %726 : vector<8x5xi32>
    %728 = vector.shape_cast %720 : vector<8x1xi32> to vector<8x1xi32>
    %729 = vector.broadcast %728 : vector<8x1xi32> to vector<8x5xi32>
    %730 = arith.select %727, %729, %710 : vector<8x5xi1>, vector<8x5xi32>
    %731 = vector.broadcast %264 : vector<1x5xf32> to vector<8x5xf32>
    %732 = arith.addf %688, %731 : vector<8x5xf32>
    %cst_185 = arith.constant dense<0xFF800000> : vector<8xf32>
    %733 = vector.multi_reduction <maximumf>, %732, %cst_185 [1] : vector<8x5xf32> to vector<8xf32>
    %734 = vector.shape_cast %733 : vector<8xf32> to vector<8x1xf32>
    %735 = vector.broadcast %734 : vector<8x1xf32> to vector<8x5xf32>
    %736 = arith.cmpf oeq, %732, %735 : vector<8x5xf32>
    %c5_i32_186 = arith.constant 5 : i32
    %737 = vector.broadcast %c5_i32_186 : i32 to vector<8x5xi32>
    %738 = arith.select %736, %267, %737 : vector<8x5xi1>, vector<8x5xi32>
    %cst_187 = arith.constant dense<2147483647> : vector<8xi32>
    %739 = vector.multi_reduction <minsi>, %738, %cst_187 [1] : vector<8x5xi32> to vector<8xi32>
    %740 = vector.shape_cast %739 : vector<8xi32> to vector<8x1xi32>
    %c2_i32_188 = arith.constant 2 : i32
    %741 = vector.broadcast %c2_i32_188 : i32 to vector<8x5xi32>
    %742 = arith.cmpi eq, %267, %741 : vector<8x5xi32>
    %743 = vector.shape_cast %734 : vector<8x1xf32> to vector<8x1xf32>
    %744 = vector.broadcast %743 : vector<8x1xf32> to vector<8x5xf32>
    %745 = arith.select %742, %744, %725 : vector<8x5xi1>, vector<8x5xf32>
    %c2_i32_189 = arith.constant 2 : i32
    %746 = vector.broadcast %c2_i32_189 : i32 to vector<8x5xi32>
    %747 = arith.cmpi eq, %267, %746 : vector<8x5xi32>
    %748 = vector.shape_cast %740 : vector<8x1xi32> to vector<8x1xi32>
    %749 = vector.broadcast %748 : vector<8x1xi32> to vector<8x5xi32>
    %750 = arith.select %747, %749, %730 : vector<8x5xi1>, vector<8x5xi32>
    %751 = vector.broadcast %265 : vector<1x5xf32> to vector<8x5xf32>
    %752 = arith.addf %688, %751 : vector<8x5xf32>
    %cst_190 = arith.constant dense<0xFF800000> : vector<8xf32>
    %753 = vector.multi_reduction <maximumf>, %752, %cst_190 [1] : vector<8x5xf32> to vector<8xf32>
    %754 = vector.shape_cast %753 : vector<8xf32> to vector<8x1xf32>
    %755 = vector.broadcast %754 : vector<8x1xf32> to vector<8x5xf32>
    %756 = arith.cmpf oeq, %752, %755 : vector<8x5xf32>
    %c5_i32_191 = arith.constant 5 : i32
    %757 = vector.broadcast %c5_i32_191 : i32 to vector<8x5xi32>
    %758 = arith.select %756, %267, %757 : vector<8x5xi1>, vector<8x5xi32>
    %cst_192 = arith.constant dense<2147483647> : vector<8xi32>
    %759 = vector.multi_reduction <minsi>, %758, %cst_192 [1] : vector<8x5xi32> to vector<8xi32>
    %760 = vector.shape_cast %759 : vector<8xi32> to vector<8x1xi32>
    %c3_i32_193 = arith.constant 3 : i32
    %761 = vector.broadcast %c3_i32_193 : i32 to vector<8x5xi32>
    %762 = arith.cmpi eq, %267, %761 : vector<8x5xi32>
    %763 = vector.shape_cast %754 : vector<8x1xf32> to vector<8x1xf32>
    %764 = vector.broadcast %763 : vector<8x1xf32> to vector<8x5xf32>
    %765 = arith.select %762, %764, %745 : vector<8x5xi1>, vector<8x5xf32>
    %c3_i32_194 = arith.constant 3 : i32
    %766 = vector.broadcast %c3_i32_194 : i32 to vector<8x5xi32>
    %767 = arith.cmpi eq, %267, %766 : vector<8x5xi32>
    %768 = vector.shape_cast %760 : vector<8x1xi32> to vector<8x1xi32>
    %769 = vector.broadcast %768 : vector<8x1xi32> to vector<8x5xi32>
    %770 = arith.select %767, %769, %750 : vector<8x5xi1>, vector<8x5xi32>
    %771 = vector.broadcast %266 : vector<1x5xf32> to vector<8x5xf32>
    %772 = arith.addf %688, %771 : vector<8x5xf32>
    %cst_195 = arith.constant dense<0xFF800000> : vector<8xf32>
    %773 = vector.multi_reduction <maximumf>, %772, %cst_195 [1] : vector<8x5xf32> to vector<8xf32>
    %774 = vector.shape_cast %773 : vector<8xf32> to vector<8x1xf32>
    %775 = vector.broadcast %774 : vector<8x1xf32> to vector<8x5xf32>
    %776 = arith.cmpf oeq, %772, %775 : vector<8x5xf32>
    %c5_i32_196 = arith.constant 5 : i32
    %777 = vector.broadcast %c5_i32_196 : i32 to vector<8x5xi32>
    %778 = arith.select %776, %267, %777 : vector<8x5xi1>, vector<8x5xi32>
    %cst_197 = arith.constant dense<2147483647> : vector<8xi32>
    %779 = vector.multi_reduction <minsi>, %778, %cst_197 [1] : vector<8x5xi32> to vector<8xi32>
    %780 = vector.shape_cast %779 : vector<8xi32> to vector<8x1xi32>
    %c4_i32_198 = arith.constant 4 : i32
    %781 = vector.broadcast %c4_i32_198 : i32 to vector<8x5xi32>
    %782 = arith.cmpi eq, %267, %781 : vector<8x5xi32>
    %783 = vector.shape_cast %774 : vector<8x1xf32> to vector<8x1xf32>
    %784 = vector.broadcast %783 : vector<8x1xf32> to vector<8x5xf32>
    %785 = arith.select %782, %784, %765 : vector<8x5xi1>, vector<8x5xf32>
    %c4_i32_199 = arith.constant 4 : i32
    %786 = vector.broadcast %c4_i32_199 : i32 to vector<8x5xi32>
    %787 = arith.cmpi eq, %267, %786 : vector<8x5xi32>
    %788 = vector.shape_cast %780 : vector<8x1xi32> to vector<8x1xi32>
    %789 = vector.broadcast %788 : vector<8x1xi32> to vector<8x5xi32>
    %790 = arith.select %787, %789, %770 : vector<8x5xi1>, vector<8x5xi32>
    %791 = vector.extract_strided_slice %259 {offsets = [32, 0], sizes = [8, 5], strides = [1, 1]} : vector<64x5xf32> to vector<8x5xf32>
    %792 = arith.addf %785, %791 : vector<8x5xf32>
    %cst_200 = arith.constant 0.000000e+00 : f32
    %793 = vector.broadcast %cst_200 : f32 to vector<8x5xf32>
    %c0_i32_201 = arith.constant 0 : i32
    %794 = vector.broadcast %c0_i32_201 : i32 to vector<8x5xi32>
    %795 = vector.broadcast %262 : vector<1x5xf32> to vector<8x5xf32>
    %796 = arith.addf %792, %795 : vector<8x5xf32>
    %cst_202 = arith.constant dense<0xFF800000> : vector<8xf32>
    %797 = vector.multi_reduction <maximumf>, %796, %cst_202 [1] : vector<8x5xf32> to vector<8xf32>
    %798 = vector.shape_cast %797 : vector<8xf32> to vector<8x1xf32>
    %799 = vector.broadcast %798 : vector<8x1xf32> to vector<8x5xf32>
    %800 = arith.cmpf oeq, %796, %799 : vector<8x5xf32>
    %c5_i32_203 = arith.constant 5 : i32
    %801 = vector.broadcast %c5_i32_203 : i32 to vector<8x5xi32>
    %802 = arith.select %800, %267, %801 : vector<8x5xi1>, vector<8x5xi32>
    %cst_204 = arith.constant dense<2147483647> : vector<8xi32>
    %803 = vector.multi_reduction <minsi>, %802, %cst_204 [1] : vector<8x5xi32> to vector<8xi32>
    %804 = vector.shape_cast %803 : vector<8xi32> to vector<8x1xi32>
    %c0_i32_205 = arith.constant 0 : i32
    %805 = vector.broadcast %c0_i32_205 : i32 to vector<8x5xi32>
    %806 = arith.cmpi eq, %267, %805 : vector<8x5xi32>
    %807 = vector.shape_cast %798 : vector<8x1xf32> to vector<8x1xf32>
    %808 = vector.broadcast %807 : vector<8x1xf32> to vector<8x5xf32>
    %809 = arith.select %806, %808, %793 : vector<8x5xi1>, vector<8x5xf32>
    %c0_i32_206 = arith.constant 0 : i32
    %810 = vector.broadcast %c0_i32_206 : i32 to vector<8x5xi32>
    %811 = arith.cmpi eq, %267, %810 : vector<8x5xi32>
    %812 = vector.shape_cast %804 : vector<8x1xi32> to vector<8x1xi32>
    %813 = vector.broadcast %812 : vector<8x1xi32> to vector<8x5xi32>
    %814 = arith.select %811, %813, %794 : vector<8x5xi1>, vector<8x5xi32>
    %815 = vector.broadcast %263 : vector<1x5xf32> to vector<8x5xf32>
    %816 = arith.addf %792, %815 : vector<8x5xf32>
    %cst_207 = arith.constant dense<0xFF800000> : vector<8xf32>
    %817 = vector.multi_reduction <maximumf>, %816, %cst_207 [1] : vector<8x5xf32> to vector<8xf32>
    %818 = vector.shape_cast %817 : vector<8xf32> to vector<8x1xf32>
    %819 = vector.broadcast %818 : vector<8x1xf32> to vector<8x5xf32>
    %820 = arith.cmpf oeq, %816, %819 : vector<8x5xf32>
    %c5_i32_208 = arith.constant 5 : i32
    %821 = vector.broadcast %c5_i32_208 : i32 to vector<8x5xi32>
    %822 = arith.select %820, %267, %821 : vector<8x5xi1>, vector<8x5xi32>
    %cst_209 = arith.constant dense<2147483647> : vector<8xi32>
    %823 = vector.multi_reduction <minsi>, %822, %cst_209 [1] : vector<8x5xi32> to vector<8xi32>
    %824 = vector.shape_cast %823 : vector<8xi32> to vector<8x1xi32>
    %c1_i32_210 = arith.constant 1 : i32
    %825 = vector.broadcast %c1_i32_210 : i32 to vector<8x5xi32>
    %826 = arith.cmpi eq, %267, %825 : vector<8x5xi32>
    %827 = vector.shape_cast %818 : vector<8x1xf32> to vector<8x1xf32>
    %828 = vector.broadcast %827 : vector<8x1xf32> to vector<8x5xf32>
    %829 = arith.select %826, %828, %809 : vector<8x5xi1>, vector<8x5xf32>
    %c1_i32_211 = arith.constant 1 : i32
    %830 = vector.broadcast %c1_i32_211 : i32 to vector<8x5xi32>
    %831 = arith.cmpi eq, %267, %830 : vector<8x5xi32>
    %832 = vector.shape_cast %824 : vector<8x1xi32> to vector<8x1xi32>
    %833 = vector.broadcast %832 : vector<8x1xi32> to vector<8x5xi32>
    %834 = arith.select %831, %833, %814 : vector<8x5xi1>, vector<8x5xi32>
    %835 = vector.broadcast %264 : vector<1x5xf32> to vector<8x5xf32>
    %836 = arith.addf %792, %835 : vector<8x5xf32>
    %cst_212 = arith.constant dense<0xFF800000> : vector<8xf32>
    %837 = vector.multi_reduction <maximumf>, %836, %cst_212 [1] : vector<8x5xf32> to vector<8xf32>
    %838 = vector.shape_cast %837 : vector<8xf32> to vector<8x1xf32>
    %839 = vector.broadcast %838 : vector<8x1xf32> to vector<8x5xf32>
    %840 = arith.cmpf oeq, %836, %839 : vector<8x5xf32>
    %c5_i32_213 = arith.constant 5 : i32
    %841 = vector.broadcast %c5_i32_213 : i32 to vector<8x5xi32>
    %842 = arith.select %840, %267, %841 : vector<8x5xi1>, vector<8x5xi32>
    %cst_214 = arith.constant dense<2147483647> : vector<8xi32>
    %843 = vector.multi_reduction <minsi>, %842, %cst_214 [1] : vector<8x5xi32> to vector<8xi32>
    %844 = vector.shape_cast %843 : vector<8xi32> to vector<8x1xi32>
    %c2_i32_215 = arith.constant 2 : i32
    %845 = vector.broadcast %c2_i32_215 : i32 to vector<8x5xi32>
    %846 = arith.cmpi eq, %267, %845 : vector<8x5xi32>
    %847 = vector.shape_cast %838 : vector<8x1xf32> to vector<8x1xf32>
    %848 = vector.broadcast %847 : vector<8x1xf32> to vector<8x5xf32>
    %849 = arith.select %846, %848, %829 : vector<8x5xi1>, vector<8x5xf32>
    %c2_i32_216 = arith.constant 2 : i32
    %850 = vector.broadcast %c2_i32_216 : i32 to vector<8x5xi32>
    %851 = arith.cmpi eq, %267, %850 : vector<8x5xi32>
    %852 = vector.shape_cast %844 : vector<8x1xi32> to vector<8x1xi32>
    %853 = vector.broadcast %852 : vector<8x1xi32> to vector<8x5xi32>
    %854 = arith.select %851, %853, %834 : vector<8x5xi1>, vector<8x5xi32>
    %855 = vector.broadcast %265 : vector<1x5xf32> to vector<8x5xf32>
    %856 = arith.addf %792, %855 : vector<8x5xf32>
    %cst_217 = arith.constant dense<0xFF800000> : vector<8xf32>
    %857 = vector.multi_reduction <maximumf>, %856, %cst_217 [1] : vector<8x5xf32> to vector<8xf32>
    %858 = vector.shape_cast %857 : vector<8xf32> to vector<8x1xf32>
    %859 = vector.broadcast %858 : vector<8x1xf32> to vector<8x5xf32>
    %860 = arith.cmpf oeq, %856, %859 : vector<8x5xf32>
    %c5_i32_218 = arith.constant 5 : i32
    %861 = vector.broadcast %c5_i32_218 : i32 to vector<8x5xi32>
    %862 = arith.select %860, %267, %861 : vector<8x5xi1>, vector<8x5xi32>
    %cst_219 = arith.constant dense<2147483647> : vector<8xi32>
    %863 = vector.multi_reduction <minsi>, %862, %cst_219 [1] : vector<8x5xi32> to vector<8xi32>
    %864 = vector.shape_cast %863 : vector<8xi32> to vector<8x1xi32>
    %c3_i32_220 = arith.constant 3 : i32
    %865 = vector.broadcast %c3_i32_220 : i32 to vector<8x5xi32>
    %866 = arith.cmpi eq, %267, %865 : vector<8x5xi32>
    %867 = vector.shape_cast %858 : vector<8x1xf32> to vector<8x1xf32>
    %868 = vector.broadcast %867 : vector<8x1xf32> to vector<8x5xf32>
    %869 = arith.select %866, %868, %849 : vector<8x5xi1>, vector<8x5xf32>
    %c3_i32_221 = arith.constant 3 : i32
    %870 = vector.broadcast %c3_i32_221 : i32 to vector<8x5xi32>
    %871 = arith.cmpi eq, %267, %870 : vector<8x5xi32>
    %872 = vector.shape_cast %864 : vector<8x1xi32> to vector<8x1xi32>
    %873 = vector.broadcast %872 : vector<8x1xi32> to vector<8x5xi32>
    %874 = arith.select %871, %873, %854 : vector<8x5xi1>, vector<8x5xi32>
    %875 = vector.broadcast %266 : vector<1x5xf32> to vector<8x5xf32>
    %876 = arith.addf %792, %875 : vector<8x5xf32>
    %cst_222 = arith.constant dense<0xFF800000> : vector<8xf32>
    %877 = vector.multi_reduction <maximumf>, %876, %cst_222 [1] : vector<8x5xf32> to vector<8xf32>
    %878 = vector.shape_cast %877 : vector<8xf32> to vector<8x1xf32>
    %879 = vector.broadcast %878 : vector<8x1xf32> to vector<8x5xf32>
    %880 = arith.cmpf oeq, %876, %879 : vector<8x5xf32>
    %c5_i32_223 = arith.constant 5 : i32
    %881 = vector.broadcast %c5_i32_223 : i32 to vector<8x5xi32>
    %882 = arith.select %880, %267, %881 : vector<8x5xi1>, vector<8x5xi32>
    %cst_224 = arith.constant dense<2147483647> : vector<8xi32>
    %883 = vector.multi_reduction <minsi>, %882, %cst_224 [1] : vector<8x5xi32> to vector<8xi32>
    %884 = vector.shape_cast %883 : vector<8xi32> to vector<8x1xi32>
    %c4_i32_225 = arith.constant 4 : i32
    %885 = vector.broadcast %c4_i32_225 : i32 to vector<8x5xi32>
    %886 = arith.cmpi eq, %267, %885 : vector<8x5xi32>
    %887 = vector.shape_cast %878 : vector<8x1xf32> to vector<8x1xf32>
    %888 = vector.broadcast %887 : vector<8x1xf32> to vector<8x5xf32>
    %889 = arith.select %886, %888, %869 : vector<8x5xi1>, vector<8x5xf32>
    %c4_i32_226 = arith.constant 4 : i32
    %890 = vector.broadcast %c4_i32_226 : i32 to vector<8x5xi32>
    %891 = arith.cmpi eq, %267, %890 : vector<8x5xi32>
    %892 = vector.shape_cast %884 : vector<8x1xi32> to vector<8x1xi32>
    %893 = vector.broadcast %892 : vector<8x1xi32> to vector<8x5xi32>
    %894 = arith.select %891, %893, %874 : vector<8x5xi1>, vector<8x5xi32>
    %895 = vector.extract_strided_slice %259 {offsets = [40, 0], sizes = [8, 5], strides = [1, 1]} : vector<64x5xf32> to vector<8x5xf32>
    %896 = arith.addf %889, %895 : vector<8x5xf32>
    %cst_227 = arith.constant 0.000000e+00 : f32
    %897 = vector.broadcast %cst_227 : f32 to vector<8x5xf32>
    %c0_i32_228 = arith.constant 0 : i32
    %898 = vector.broadcast %c0_i32_228 : i32 to vector<8x5xi32>
    %899 = vector.broadcast %262 : vector<1x5xf32> to vector<8x5xf32>
    %900 = arith.addf %896, %899 : vector<8x5xf32>
    %cst_229 = arith.constant dense<0xFF800000> : vector<8xf32>
    %901 = vector.multi_reduction <maximumf>, %900, %cst_229 [1] : vector<8x5xf32> to vector<8xf32>
    %902 = vector.shape_cast %901 : vector<8xf32> to vector<8x1xf32>
    %903 = vector.broadcast %902 : vector<8x1xf32> to vector<8x5xf32>
    %904 = arith.cmpf oeq, %900, %903 : vector<8x5xf32>
    %c5_i32_230 = arith.constant 5 : i32
    %905 = vector.broadcast %c5_i32_230 : i32 to vector<8x5xi32>
    %906 = arith.select %904, %267, %905 : vector<8x5xi1>, vector<8x5xi32>
    %cst_231 = arith.constant dense<2147483647> : vector<8xi32>
    %907 = vector.multi_reduction <minsi>, %906, %cst_231 [1] : vector<8x5xi32> to vector<8xi32>
    %908 = vector.shape_cast %907 : vector<8xi32> to vector<8x1xi32>
    %c0_i32_232 = arith.constant 0 : i32
    %909 = vector.broadcast %c0_i32_232 : i32 to vector<8x5xi32>
    %910 = arith.cmpi eq, %267, %909 : vector<8x5xi32>
    %911 = vector.shape_cast %902 : vector<8x1xf32> to vector<8x1xf32>
    %912 = vector.broadcast %911 : vector<8x1xf32> to vector<8x5xf32>
    %913 = arith.select %910, %912, %897 : vector<8x5xi1>, vector<8x5xf32>
    %c0_i32_233 = arith.constant 0 : i32
    %914 = vector.broadcast %c0_i32_233 : i32 to vector<8x5xi32>
    %915 = arith.cmpi eq, %267, %914 : vector<8x5xi32>
    %916 = vector.shape_cast %908 : vector<8x1xi32> to vector<8x1xi32>
    %917 = vector.broadcast %916 : vector<8x1xi32> to vector<8x5xi32>
    %918 = arith.select %915, %917, %898 : vector<8x5xi1>, vector<8x5xi32>
    %919 = vector.broadcast %263 : vector<1x5xf32> to vector<8x5xf32>
    %920 = arith.addf %896, %919 : vector<8x5xf32>
    %cst_234 = arith.constant dense<0xFF800000> : vector<8xf32>
    %921 = vector.multi_reduction <maximumf>, %920, %cst_234 [1] : vector<8x5xf32> to vector<8xf32>
    %922 = vector.shape_cast %921 : vector<8xf32> to vector<8x1xf32>
    %923 = vector.broadcast %922 : vector<8x1xf32> to vector<8x5xf32>
    %924 = arith.cmpf oeq, %920, %923 : vector<8x5xf32>
    %c5_i32_235 = arith.constant 5 : i32
    %925 = vector.broadcast %c5_i32_235 : i32 to vector<8x5xi32>
    %926 = arith.select %924, %267, %925 : vector<8x5xi1>, vector<8x5xi32>
    %cst_236 = arith.constant dense<2147483647> : vector<8xi32>
    %927 = vector.multi_reduction <minsi>, %926, %cst_236 [1] : vector<8x5xi32> to vector<8xi32>
    %928 = vector.shape_cast %927 : vector<8xi32> to vector<8x1xi32>
    %c1_i32_237 = arith.constant 1 : i32
    %929 = vector.broadcast %c1_i32_237 : i32 to vector<8x5xi32>
    %930 = arith.cmpi eq, %267, %929 : vector<8x5xi32>
    %931 = vector.shape_cast %922 : vector<8x1xf32> to vector<8x1xf32>
    %932 = vector.broadcast %931 : vector<8x1xf32> to vector<8x5xf32>
    %933 = arith.select %930, %932, %913 : vector<8x5xi1>, vector<8x5xf32>
    %c1_i32_238 = arith.constant 1 : i32
    %934 = vector.broadcast %c1_i32_238 : i32 to vector<8x5xi32>
    %935 = arith.cmpi eq, %267, %934 : vector<8x5xi32>
    %936 = vector.shape_cast %928 : vector<8x1xi32> to vector<8x1xi32>
    %937 = vector.broadcast %936 : vector<8x1xi32> to vector<8x5xi32>
    %938 = arith.select %935, %937, %918 : vector<8x5xi1>, vector<8x5xi32>
    %939 = vector.broadcast %264 : vector<1x5xf32> to vector<8x5xf32>
    %940 = arith.addf %896, %939 : vector<8x5xf32>
    %cst_239 = arith.constant dense<0xFF800000> : vector<8xf32>
    %941 = vector.multi_reduction <maximumf>, %940, %cst_239 [1] : vector<8x5xf32> to vector<8xf32>
    %942 = vector.shape_cast %941 : vector<8xf32> to vector<8x1xf32>
    %943 = vector.broadcast %942 : vector<8x1xf32> to vector<8x5xf32>
    %944 = arith.cmpf oeq, %940, %943 : vector<8x5xf32>
    %c5_i32_240 = arith.constant 5 : i32
    %945 = vector.broadcast %c5_i32_240 : i32 to vector<8x5xi32>
    %946 = arith.select %944, %267, %945 : vector<8x5xi1>, vector<8x5xi32>
    %cst_241 = arith.constant dense<2147483647> : vector<8xi32>
    %947 = vector.multi_reduction <minsi>, %946, %cst_241 [1] : vector<8x5xi32> to vector<8xi32>
    %948 = vector.shape_cast %947 : vector<8xi32> to vector<8x1xi32>
    %c2_i32_242 = arith.constant 2 : i32
    %949 = vector.broadcast %c2_i32_242 : i32 to vector<8x5xi32>
    %950 = arith.cmpi eq, %267, %949 : vector<8x5xi32>
    %951 = vector.shape_cast %942 : vector<8x1xf32> to vector<8x1xf32>
    %952 = vector.broadcast %951 : vector<8x1xf32> to vector<8x5xf32>
    %953 = arith.select %950, %952, %933 : vector<8x5xi1>, vector<8x5xf32>
    %c2_i32_243 = arith.constant 2 : i32
    %954 = vector.broadcast %c2_i32_243 : i32 to vector<8x5xi32>
    %955 = arith.cmpi eq, %267, %954 : vector<8x5xi32>
    %956 = vector.shape_cast %948 : vector<8x1xi32> to vector<8x1xi32>
    %957 = vector.broadcast %956 : vector<8x1xi32> to vector<8x5xi32>
    %958 = arith.select %955, %957, %938 : vector<8x5xi1>, vector<8x5xi32>
    %959 = vector.broadcast %265 : vector<1x5xf32> to vector<8x5xf32>
    %960 = arith.addf %896, %959 : vector<8x5xf32>
    %cst_244 = arith.constant dense<0xFF800000> : vector<8xf32>
    %961 = vector.multi_reduction <maximumf>, %960, %cst_244 [1] : vector<8x5xf32> to vector<8xf32>
    %962 = vector.shape_cast %961 : vector<8xf32> to vector<8x1xf32>
    %963 = vector.broadcast %962 : vector<8x1xf32> to vector<8x5xf32>
    %964 = arith.cmpf oeq, %960, %963 : vector<8x5xf32>
    %c5_i32_245 = arith.constant 5 : i32
    %965 = vector.broadcast %c5_i32_245 : i32 to vector<8x5xi32>
    %966 = arith.select %964, %267, %965 : vector<8x5xi1>, vector<8x5xi32>
    %cst_246 = arith.constant dense<2147483647> : vector<8xi32>
    %967 = vector.multi_reduction <minsi>, %966, %cst_246 [1] : vector<8x5xi32> to vector<8xi32>
    %968 = vector.shape_cast %967 : vector<8xi32> to vector<8x1xi32>
    %c3_i32_247 = arith.constant 3 : i32
    %969 = vector.broadcast %c3_i32_247 : i32 to vector<8x5xi32>
    %970 = arith.cmpi eq, %267, %969 : vector<8x5xi32>
    %971 = vector.shape_cast %962 : vector<8x1xf32> to vector<8x1xf32>
    %972 = vector.broadcast %971 : vector<8x1xf32> to vector<8x5xf32>
    %973 = arith.select %970, %972, %953 : vector<8x5xi1>, vector<8x5xf32>
    %c3_i32_248 = arith.constant 3 : i32
    %974 = vector.broadcast %c3_i32_248 : i32 to vector<8x5xi32>
    %975 = arith.cmpi eq, %267, %974 : vector<8x5xi32>
    %976 = vector.shape_cast %968 : vector<8x1xi32> to vector<8x1xi32>
    %977 = vector.broadcast %976 : vector<8x1xi32> to vector<8x5xi32>
    %978 = arith.select %975, %977, %958 : vector<8x5xi1>, vector<8x5xi32>
    %979 = vector.broadcast %266 : vector<1x5xf32> to vector<8x5xf32>
    %980 = arith.addf %896, %979 : vector<8x5xf32>
    %cst_249 = arith.constant dense<0xFF800000> : vector<8xf32>
    %981 = vector.multi_reduction <maximumf>, %980, %cst_249 [1] : vector<8x5xf32> to vector<8xf32>
    %982 = vector.shape_cast %981 : vector<8xf32> to vector<8x1xf32>
    %983 = vector.broadcast %982 : vector<8x1xf32> to vector<8x5xf32>
    %984 = arith.cmpf oeq, %980, %983 : vector<8x5xf32>
    %c5_i32_250 = arith.constant 5 : i32
    %985 = vector.broadcast %c5_i32_250 : i32 to vector<8x5xi32>
    %986 = arith.select %984, %267, %985 : vector<8x5xi1>, vector<8x5xi32>
    %cst_251 = arith.constant dense<2147483647> : vector<8xi32>
    %987 = vector.multi_reduction <minsi>, %986, %cst_251 [1] : vector<8x5xi32> to vector<8xi32>
    %988 = vector.shape_cast %987 : vector<8xi32> to vector<8x1xi32>
    %c4_i32_252 = arith.constant 4 : i32
    %989 = vector.broadcast %c4_i32_252 : i32 to vector<8x5xi32>
    %990 = arith.cmpi eq, %267, %989 : vector<8x5xi32>
    %991 = vector.shape_cast %982 : vector<8x1xf32> to vector<8x1xf32>
    %992 = vector.broadcast %991 : vector<8x1xf32> to vector<8x5xf32>
    %993 = arith.select %990, %992, %973 : vector<8x5xi1>, vector<8x5xf32>
    %c4_i32_253 = arith.constant 4 : i32
    %994 = vector.broadcast %c4_i32_253 : i32 to vector<8x5xi32>
    %995 = arith.cmpi eq, %267, %994 : vector<8x5xi32>
    %996 = vector.shape_cast %988 : vector<8x1xi32> to vector<8x1xi32>
    %997 = vector.broadcast %996 : vector<8x1xi32> to vector<8x5xi32>
    %998 = arith.select %995, %997, %978 : vector<8x5xi1>, vector<8x5xi32>
    %999 = vector.extract_strided_slice %259 {offsets = [48, 0], sizes = [8, 5], strides = [1, 1]} : vector<64x5xf32> to vector<8x5xf32>
    %1000 = arith.addf %993, %999 : vector<8x5xf32>
    %cst_254 = arith.constant 0.000000e+00 : f32
    %1001 = vector.broadcast %cst_254 : f32 to vector<8x5xf32>
    %c0_i32_255 = arith.constant 0 : i32
    %1002 = vector.broadcast %c0_i32_255 : i32 to vector<8x5xi32>
    %1003 = vector.broadcast %262 : vector<1x5xf32> to vector<8x5xf32>
    %1004 = arith.addf %1000, %1003 : vector<8x5xf32>
    %cst_256 = arith.constant dense<0xFF800000> : vector<8xf32>
    %1005 = vector.multi_reduction <maximumf>, %1004, %cst_256 [1] : vector<8x5xf32> to vector<8xf32>
    %1006 = vector.shape_cast %1005 : vector<8xf32> to vector<8x1xf32>
    %1007 = vector.broadcast %1006 : vector<8x1xf32> to vector<8x5xf32>
    %1008 = arith.cmpf oeq, %1004, %1007 : vector<8x5xf32>
    %c5_i32_257 = arith.constant 5 : i32
    %1009 = vector.broadcast %c5_i32_257 : i32 to vector<8x5xi32>
    %1010 = arith.select %1008, %267, %1009 : vector<8x5xi1>, vector<8x5xi32>
    %cst_258 = arith.constant dense<2147483647> : vector<8xi32>
    %1011 = vector.multi_reduction <minsi>, %1010, %cst_258 [1] : vector<8x5xi32> to vector<8xi32>
    %1012 = vector.shape_cast %1011 : vector<8xi32> to vector<8x1xi32>
    %c0_i32_259 = arith.constant 0 : i32
    %1013 = vector.broadcast %c0_i32_259 : i32 to vector<8x5xi32>
    %1014 = arith.cmpi eq, %267, %1013 : vector<8x5xi32>
    %1015 = vector.shape_cast %1006 : vector<8x1xf32> to vector<8x1xf32>
    %1016 = vector.broadcast %1015 : vector<8x1xf32> to vector<8x5xf32>
    %1017 = arith.select %1014, %1016, %1001 : vector<8x5xi1>, vector<8x5xf32>
    %c0_i32_260 = arith.constant 0 : i32
    %1018 = vector.broadcast %c0_i32_260 : i32 to vector<8x5xi32>
    %1019 = arith.cmpi eq, %267, %1018 : vector<8x5xi32>
    %1020 = vector.shape_cast %1012 : vector<8x1xi32> to vector<8x1xi32>
    %1021 = vector.broadcast %1020 : vector<8x1xi32> to vector<8x5xi32>
    %1022 = arith.select %1019, %1021, %1002 : vector<8x5xi1>, vector<8x5xi32>
    %1023 = vector.broadcast %263 : vector<1x5xf32> to vector<8x5xf32>
    %1024 = arith.addf %1000, %1023 : vector<8x5xf32>
    %cst_261 = arith.constant dense<0xFF800000> : vector<8xf32>
    %1025 = vector.multi_reduction <maximumf>, %1024, %cst_261 [1] : vector<8x5xf32> to vector<8xf32>
    %1026 = vector.shape_cast %1025 : vector<8xf32> to vector<8x1xf32>
    %1027 = vector.broadcast %1026 : vector<8x1xf32> to vector<8x5xf32>
    %1028 = arith.cmpf oeq, %1024, %1027 : vector<8x5xf32>
    %c5_i32_262 = arith.constant 5 : i32
    %1029 = vector.broadcast %c5_i32_262 : i32 to vector<8x5xi32>
    %1030 = arith.select %1028, %267, %1029 : vector<8x5xi1>, vector<8x5xi32>
    %cst_263 = arith.constant dense<2147483647> : vector<8xi32>
    %1031 = vector.multi_reduction <minsi>, %1030, %cst_263 [1] : vector<8x5xi32> to vector<8xi32>
    %1032 = vector.shape_cast %1031 : vector<8xi32> to vector<8x1xi32>
    %c1_i32_264 = arith.constant 1 : i32
    %1033 = vector.broadcast %c1_i32_264 : i32 to vector<8x5xi32>
    %1034 = arith.cmpi eq, %267, %1033 : vector<8x5xi32>
    %1035 = vector.shape_cast %1026 : vector<8x1xf32> to vector<8x1xf32>
    %1036 = vector.broadcast %1035 : vector<8x1xf32> to vector<8x5xf32>
    %1037 = arith.select %1034, %1036, %1017 : vector<8x5xi1>, vector<8x5xf32>
    %c1_i32_265 = arith.constant 1 : i32
    %1038 = vector.broadcast %c1_i32_265 : i32 to vector<8x5xi32>
    %1039 = arith.cmpi eq, %267, %1038 : vector<8x5xi32>
    %1040 = vector.shape_cast %1032 : vector<8x1xi32> to vector<8x1xi32>
    %1041 = vector.broadcast %1040 : vector<8x1xi32> to vector<8x5xi32>
    %1042 = arith.select %1039, %1041, %1022 : vector<8x5xi1>, vector<8x5xi32>
    %1043 = vector.broadcast %264 : vector<1x5xf32> to vector<8x5xf32>
    %1044 = arith.addf %1000, %1043 : vector<8x5xf32>
    %cst_266 = arith.constant dense<0xFF800000> : vector<8xf32>
    %1045 = vector.multi_reduction <maximumf>, %1044, %cst_266 [1] : vector<8x5xf32> to vector<8xf32>
    %1046 = vector.shape_cast %1045 : vector<8xf32> to vector<8x1xf32>
    %1047 = vector.broadcast %1046 : vector<8x1xf32> to vector<8x5xf32>
    %1048 = arith.cmpf oeq, %1044, %1047 : vector<8x5xf32>
    %c5_i32_267 = arith.constant 5 : i32
    %1049 = vector.broadcast %c5_i32_267 : i32 to vector<8x5xi32>
    %1050 = arith.select %1048, %267, %1049 : vector<8x5xi1>, vector<8x5xi32>
    %cst_268 = arith.constant dense<2147483647> : vector<8xi32>
    %1051 = vector.multi_reduction <minsi>, %1050, %cst_268 [1] : vector<8x5xi32> to vector<8xi32>
    %1052 = vector.shape_cast %1051 : vector<8xi32> to vector<8x1xi32>
    %c2_i32_269 = arith.constant 2 : i32
    %1053 = vector.broadcast %c2_i32_269 : i32 to vector<8x5xi32>
    %1054 = arith.cmpi eq, %267, %1053 : vector<8x5xi32>
    %1055 = vector.shape_cast %1046 : vector<8x1xf32> to vector<8x1xf32>
    %1056 = vector.broadcast %1055 : vector<8x1xf32> to vector<8x5xf32>
    %1057 = arith.select %1054, %1056, %1037 : vector<8x5xi1>, vector<8x5xf32>
    %c2_i32_270 = arith.constant 2 : i32
    %1058 = vector.broadcast %c2_i32_270 : i32 to vector<8x5xi32>
    %1059 = arith.cmpi eq, %267, %1058 : vector<8x5xi32>
    %1060 = vector.shape_cast %1052 : vector<8x1xi32> to vector<8x1xi32>
    %1061 = vector.broadcast %1060 : vector<8x1xi32> to vector<8x5xi32>
    %1062 = arith.select %1059, %1061, %1042 : vector<8x5xi1>, vector<8x5xi32>
    %1063 = vector.broadcast %265 : vector<1x5xf32> to vector<8x5xf32>
    %1064 = arith.addf %1000, %1063 : vector<8x5xf32>
    %cst_271 = arith.constant dense<0xFF800000> : vector<8xf32>
    %1065 = vector.multi_reduction <maximumf>, %1064, %cst_271 [1] : vector<8x5xf32> to vector<8xf32>
    %1066 = vector.shape_cast %1065 : vector<8xf32> to vector<8x1xf32>
    %1067 = vector.broadcast %1066 : vector<8x1xf32> to vector<8x5xf32>
    %1068 = arith.cmpf oeq, %1064, %1067 : vector<8x5xf32>
    %c5_i32_272 = arith.constant 5 : i32
    %1069 = vector.broadcast %c5_i32_272 : i32 to vector<8x5xi32>
    %1070 = arith.select %1068, %267, %1069 : vector<8x5xi1>, vector<8x5xi32>
    %cst_273 = arith.constant dense<2147483647> : vector<8xi32>
    %1071 = vector.multi_reduction <minsi>, %1070, %cst_273 [1] : vector<8x5xi32> to vector<8xi32>
    %1072 = vector.shape_cast %1071 : vector<8xi32> to vector<8x1xi32>
    %c3_i32_274 = arith.constant 3 : i32
    %1073 = vector.broadcast %c3_i32_274 : i32 to vector<8x5xi32>
    %1074 = arith.cmpi eq, %267, %1073 : vector<8x5xi32>
    %1075 = vector.shape_cast %1066 : vector<8x1xf32> to vector<8x1xf32>
    %1076 = vector.broadcast %1075 : vector<8x1xf32> to vector<8x5xf32>
    %1077 = arith.select %1074, %1076, %1057 : vector<8x5xi1>, vector<8x5xf32>
    %c3_i32_275 = arith.constant 3 : i32
    %1078 = vector.broadcast %c3_i32_275 : i32 to vector<8x5xi32>
    %1079 = arith.cmpi eq, %267, %1078 : vector<8x5xi32>
    %1080 = vector.shape_cast %1072 : vector<8x1xi32> to vector<8x1xi32>
    %1081 = vector.broadcast %1080 : vector<8x1xi32> to vector<8x5xi32>
    %1082 = arith.select %1079, %1081, %1062 : vector<8x5xi1>, vector<8x5xi32>
    %1083 = vector.broadcast %266 : vector<1x5xf32> to vector<8x5xf32>
    %1084 = arith.addf %1000, %1083 : vector<8x5xf32>
    %cst_276 = arith.constant dense<0xFF800000> : vector<8xf32>
    %1085 = vector.multi_reduction <maximumf>, %1084, %cst_276 [1] : vector<8x5xf32> to vector<8xf32>
    %1086 = vector.shape_cast %1085 : vector<8xf32> to vector<8x1xf32>
    %1087 = vector.broadcast %1086 : vector<8x1xf32> to vector<8x5xf32>
    %1088 = arith.cmpf oeq, %1084, %1087 : vector<8x5xf32>
    %c5_i32_277 = arith.constant 5 : i32
    %1089 = vector.broadcast %c5_i32_277 : i32 to vector<8x5xi32>
    %1090 = arith.select %1088, %267, %1089 : vector<8x5xi1>, vector<8x5xi32>
    %cst_278 = arith.constant dense<2147483647> : vector<8xi32>
    %1091 = vector.multi_reduction <minsi>, %1090, %cst_278 [1] : vector<8x5xi32> to vector<8xi32>
    %1092 = vector.shape_cast %1091 : vector<8xi32> to vector<8x1xi32>
    %c4_i32_279 = arith.constant 4 : i32
    %1093 = vector.broadcast %c4_i32_279 : i32 to vector<8x5xi32>
    %1094 = arith.cmpi eq, %267, %1093 : vector<8x5xi32>
    %1095 = vector.shape_cast %1086 : vector<8x1xf32> to vector<8x1xf32>
    %1096 = vector.broadcast %1095 : vector<8x1xf32> to vector<8x5xf32>
    %1097 = arith.select %1094, %1096, %1077 : vector<8x5xi1>, vector<8x5xf32>
    %c4_i32_280 = arith.constant 4 : i32
    %1098 = vector.broadcast %c4_i32_280 : i32 to vector<8x5xi32>
    %1099 = arith.cmpi eq, %267, %1098 : vector<8x5xi32>
    %1100 = vector.shape_cast %1092 : vector<8x1xi32> to vector<8x1xi32>
    %1101 = vector.broadcast %1100 : vector<8x1xi32> to vector<8x5xi32>
    %1102 = arith.select %1099, %1101, %1082 : vector<8x5xi1>, vector<8x5xi32>
    %1103 = vector.extract_strided_slice %259 {offsets = [56, 0], sizes = [8, 5], strides = [1, 1]} : vector<64x5xf32> to vector<8x5xf32>
    %1104 = arith.addf %1097, %1103 : vector<8x5xf32>
    %1105 = vector.extract_strided_slice %261 {offsets = [4, 0], sizes = [1, 5], strides = [1, 1]} : vector<5x5xf32> to vector<1x5xf32>
    %1106 = vector.broadcast %1105 : vector<1x5xf32> to vector<8x5xf32>
    %1107 = arith.addf %1104, %1106 : vector<8x5xf32>
    %cst_281 = arith.constant dense<0xFF800000> : vector<8xf32>
    %1108 = vector.multi_reduction <maximumf>, %1107, %cst_281 [1] : vector<8x5xf32> to vector<8xf32>
    %1109 = vector.shape_cast %1108 : vector<8xf32> to vector<8x1xf32>
    %1110 = vector.broadcast %1109 : vector<8x1xf32> to vector<8x5xf32>
    %1111 = arith.cmpf oeq, %1107, %1110 : vector<8x5xf32>
    %c5_i32_282 = arith.constant 5 : i32
    %1112 = vector.broadcast %c5_i32_282 : i32 to vector<8x5xi32>
    %1113 = arith.select %1111, %267, %1112 : vector<8x5xi1>, vector<8x5xi32>
    %cst_283 = arith.constant dense<2147483647> : vector<8xi32>
    %1114 = vector.multi_reduction <minsi>, %1113, %cst_283 [1] : vector<8x5xi32> to vector<8xi32>
    %1115 = vector.shape_cast %1114 : vector<8xi32> to vector<8x1xi32>
    %c0_284 = arith.constant 0 : index
    %c0_285 = arith.constant 0 : index
    %1116 = vector.load %arg12[%c0_284, %c0_285] : memref<8x1xf32, #tpu.memory_space<vmem>>, vector<8x1xf32>
    tpu.vector_store %arg12[%c0_284, %c0_285], %1109 {strides = array<i32>} : memref<8x1xf32, #tpu.memory_space<vmem>>, vector<8x1xf32>,
    %1117 = tpu.iota {dimensions = array<i32: 1>} : vector<8x9xi32>
    %c7_i32 = arith.constant 7 : i32
    %1118 = vector.broadcast %c7_i32 : i32 to vector<8x9xi32>
    %1119 = arith.cmpi eq, %1117, %1118 : vector<8x9xi32>
    %c0_i32_286 = arith.constant 0 : i32
    %1120 = vector.broadcast %c0_i32_286 : i32 to vector<8x9xi32>
    %1121 = vector.shape_cast %1115 : vector<8x1xi32> to vector<8x1xi32>
    %1122 = vector.broadcast %1121 : vector<8x1xi32> to vector<8x9xi32>
    %1123 = arith.select %1119, %1122, %1120 : vector<8x9xi1>, vector<8x9xi32>
    %1124 = vector.broadcast %1115 : vector<8x1xi32> to vector<8x5xi32>
    %1125 = arith.cmpi eq, %267, %1124 : vector<8x5xi32>
    %c0_i32_287 = arith.constant 0 : i32
    %1126 = vector.broadcast %c0_i32_287 : i32 to vector<8x5xi32>
    %1127 = arith.select %1125, %1102, %1126 : vector<8x5xi1>, vector<8x5xi32>
    %cst_288 = arith.constant dense<-2147483648> : vector<8xi32>
    %1128 = vector.multi_reduction <maxsi>, %1127, %cst_288 [1] : vector<8x5xi32> to vector<8xi32>
    %1129 = vector.shape_cast %1128 : vector<8xi32> to vector<8x1xi32>
    %c6_i32 = arith.constant 6 : i32
    %1130 = vector.broadcast %c6_i32 : i32 to vector<8x9xi32>
    %1131 = arith.cmpi eq, %1117, %1130 : vector<8x9xi32>
    %1132 = vector.shape_cast %1129 : vector<8x1xi32> to vector<8x1xi32>
    %1133 = vector.broadcast %1132 : vector<8x1xi32> to vector<8x9xi32>
    %1134 = arith.select %1131, %1133, %1123 : vector<8x9xi1>, vector<8x9xi32>
    %1135 = vector.broadcast %1129 : vector<8x1xi32> to vector<8x5xi32>
    %1136 = arith.cmpi eq, %267, %1135 : vector<8x5xi32>
    %c0_i32_289 = arith.constant 0 : i32
    %1137 = vector.broadcast %c0_i32_289 : i32 to vector<8x5xi32>
    %1138 = arith.select %1136, %998, %1137 : vector<8x5xi1>, vector<8x5xi32>
    %cst_290 = arith.constant dense<-2147483648> : vector<8xi32>
    %1139 = vector.multi_reduction <maxsi>, %1138, %cst_290 [1] : vector<8x5xi32> to vector<8xi32>
    %1140 = vector.shape_cast %1139 : vector<8xi32> to vector<8x1xi32>
    %c5_i32_291 = arith.constant 5 : i32
    %1141 = vector.broadcast %c5_i32_291 : i32 to vector<8x9xi32>
    %1142 = arith.cmpi eq, %1117, %1141 : vector<8x9xi32>
    %1143 = vector.shape_cast %1140 : vector<8x1xi32> to vector<8x1xi32>
    %1144 = vector.broadcast %1143 : vector<8x1xi32> to vector<8x9xi32>
    %1145 = arith.select %1142, %1144, %1134 : vector<8x9xi1>, vector<8x9xi32>
    %1146 = vector.broadcast %1140 : vector<8x1xi32> to vector<8x5xi32>
    %1147 = arith.cmpi eq, %267, %1146 : vector<8x5xi32>
    %c0_i32_292 = arith.constant 0 : i32
    %1148 = vector.broadcast %c0_i32_292 : i32 to vector<8x5xi32>
    %1149 = arith.select %1147, %894, %1148 : vector<8x5xi1>, vector<8x5xi32>
    %cst_293 = arith.constant dense<-2147483648> : vector<8xi32>
    %1150 = vector.multi_reduction <maxsi>, %1149, %cst_293 [1] : vector<8x5xi32> to vector<8xi32>
    %1151 = vector.shape_cast %1150 : vector<8xi32> to vector<8x1xi32>
    %c4_i32_294 = arith.constant 4 : i32
    %1152 = vector.broadcast %c4_i32_294 : i32 to vector<8x9xi32>
    %1153 = arith.cmpi eq, %1117, %1152 : vector<8x9xi32>
    %1154 = vector.shape_cast %1151 : vector<8x1xi32> to vector<8x1xi32>
    %1155 = vector.broadcast %1154 : vector<8x1xi32> to vector<8x9xi32>
    %1156 = arith.select %1153, %1155, %1145 : vector<8x9xi1>, vector<8x9xi32>
    %1157 = vector.broadcast %1151 : vector<8x1xi32> to vector<8x5xi32>
    %1158 = arith.cmpi eq, %267, %1157 : vector<8x5xi32>
    %c0_i32_295 = arith.constant 0 : i32
    %1159 = vector.broadcast %c0_i32_295 : i32 to vector<8x5xi32>
    %1160 = arith.select %1158, %790, %1159 : vector<8x5xi1>, vector<8x5xi32>
    %cst_296 = arith.constant dense<-2147483648> : vector<8xi32>
    %1161 = vector.multi_reduction <maxsi>, %1160, %cst_296 [1] : vector<8x5xi32> to vector<8xi32>
    %1162 = vector.shape_cast %1161 : vector<8xi32> to vector<8x1xi32>
    %c3_i32_297 = arith.constant 3 : i32
    %1163 = vector.broadcast %c3_i32_297 : i32 to vector<8x9xi32>
    %1164 = arith.cmpi eq, %1117, %1163 : vector<8x9xi32>
    %1165 = vector.shape_cast %1162 : vector<8x1xi32> to vector<8x1xi32>
    %1166 = vector.broadcast %1165 : vector<8x1xi32> to vector<8x9xi32>
    %1167 = arith.select %1164, %1166, %1156 : vector<8x9xi1>, vector<8x9xi32>
    %1168 = vector.broadcast %1162 : vector<8x1xi32> to vector<8x5xi32>
    %1169 = arith.cmpi eq, %267, %1168 : vector<8x5xi32>
    %c0_i32_298 = arith.constant 0 : i32
    %1170 = vector.broadcast %c0_i32_298 : i32 to vector<8x5xi32>
    %1171 = arith.select %1169, %686, %1170 : vector<8x5xi1>, vector<8x5xi32>
    %cst_299 = arith.constant dense<-2147483648> : vector<8xi32>
    %1172 = vector.multi_reduction <maxsi>, %1171, %cst_299 [1] : vector<8x5xi32> to vector<8xi32>
    %1173 = vector.shape_cast %1172 : vector<8xi32> to vector<8x1xi32>
    %c2_i32_300 = arith.constant 2 : i32
    %1174 = vector.broadcast %c2_i32_300 : i32 to vector<8x9xi32>
    %1175 = arith.cmpi eq, %1117, %1174 : vector<8x9xi32>
    %1176 = vector.shape_cast %1173 : vector<8x1xi32> to vector<8x1xi32>
    %1177 = vector.broadcast %1176 : vector<8x1xi32> to vector<8x9xi32>
    %1178 = arith.select %1175, %1177, %1167 : vector<8x9xi1>, vector<8x9xi32>
    %1179 = vector.broadcast %1173 : vector<8x1xi32> to vector<8x5xi32>
    %1180 = arith.cmpi eq, %267, %1179 : vector<8x5xi32>
    %c0_i32_301 = arith.constant 0 : i32
    %1181 = vector.broadcast %c0_i32_301 : i32 to vector<8x5xi32>
    %1182 = arith.select %1180, %582, %1181 : vector<8x5xi1>, vector<8x5xi32>
    %cst_302 = arith.constant dense<-2147483648> : vector<8xi32>
    %1183 = vector.multi_reduction <maxsi>, %1182, %cst_302 [1] : vector<8x5xi32> to vector<8xi32>
    %1184 = vector.shape_cast %1183 : vector<8xi32> to vector<8x1xi32>
    %c1_i32_303 = arith.constant 1 : i32
    %1185 = vector.broadcast %c1_i32_303 : i32 to vector<8x9xi32>
    %1186 = arith.cmpi eq, %1117, %1185 : vector<8x9xi32>
    %1187 = vector.shape_cast %1184 : vector<8x1xi32> to vector<8x1xi32>
    %1188 = vector.broadcast %1187 : vector<8x1xi32> to vector<8x9xi32>
    %1189 = arith.select %1186, %1188, %1178 : vector<8x9xi1>, vector<8x9xi32>
    %1190 = vector.broadcast %1184 : vector<8x1xi32> to vector<8x5xi32>
    %1191 = arith.cmpi eq, %267, %1190 : vector<8x5xi32>
    %c0_i32_304 = arith.constant 0 : i32
    %1192 = vector.broadcast %c0_i32_304 : i32 to vector<8x5xi32>
    %1193 = arith.select %1191, %478, %1192 : vector<8x5xi1>, vector<8x5xi32>
    %cst_305 = arith.constant dense<-2147483648> : vector<8xi32>
    %1194 = vector.multi_reduction <maxsi>, %1193, %cst_305 [1] : vector<8x5xi32> to vector<8xi32>
    %1195 = vector.shape_cast %1194 : vector<8xi32> to vector<8x1xi32>
    %c0_i32_306 = arith.constant 0 : i32
    %1196 = vector.broadcast %c0_i32_306 : i32 to vector<8x9xi32>
    %1197 = arith.cmpi eq, %1117, %1196 : vector<8x9xi32>
    %1198 = vector.shape_cast %1195 : vector<8x1xi32> to vector<8x1xi32>
    %1199 = vector.broadcast %1198 : vector<8x1xi32> to vector<8x9xi32>
    %1200 = arith.select %1197, %1199, %1189 : vector<8x9xi1>, vector<8x9xi32>
    %1201 = vector.broadcast %1195 : vector<8x1xi32> to vector<8x5xi32>
    %1202 = arith.cmpi eq, %267, %1201 : vector<8x5xi32>
    %c0_i32_307 = arith.constant 0 : i32
    %1203 = vector.broadcast %c0_i32_307 : i32 to vector<8x5xi32>
    %1204 = arith.select %1202, %374, %1203 : vector<8x5xi1>, vector<8x5xi32>
    %cst_308 = arith.constant dense<-2147483648> : vector<8xi32>
    %1205 = vector.multi_reduction <maxsi>, %1204, %cst_308 [1] : vector<8x5xi32> to vector<8xi32>
    %1206 = vector.shape_cast %1205 : vector<8xi32> to vector<8x1xi32>
    %c8_i32 = arith.constant 8 : i32
    %1207 = vector.broadcast %c8_i32 : i32 to vector<8x9xi32>
    %1208 = arith.cmpi eq, %1117, %1207 : vector<8x9xi32>
    %1209 = vector.shape_cast %1206 : vector<8x1xi32> to vector<8x1xi32>
    %1210 = vector.broadcast %1209 : vector<8x1xi32> to vector<8x9xi32>
    %1211 = arith.select %1208, %1210, %1200 : vector<8x9xi1>, vector<8x9xi32>
    %c0_309 = arith.constant 0 : index
    %c0_310 = arith.constant 0 : index
    %1212 = vector.load %arg11[%c0_309, %c0_310] : memref<8x9xi32, #tpu.memory_space<vmem>>, vector<8x9xi32>
    tpu.vector_store %arg11[%c0_309, %c0_310], %1211 {strides = array<i32>} : memref<8x9xi32, #tpu.memory_space<vmem>>, vector<8x9xi32>,
    return
  }
  func.func @transform_0(%arg0: i32) -> (i32, i32) {
    %c0_i32 = arith.constant 0 : i32
    %c0_i32_0 = arith.constant 0 : i32
    return %arg0, %c0_i32 : i32, i32
  }
  func.func @transform_1(%arg0: i32) -> (i32, i32) {
    %c0_i32 = arith.constant 0 : i32
    %c0_i32_0 = arith.constant 0 : i32
    %c0_i32_1 = arith.constant 0 : i32
    return %c0_i32, %c0_i32_0 : i32, i32
  }
  func.func @transform_2(%arg0: i32) -> (i32, i32) {
    %c0_i32 = arith.constant 0 : i32
    %c0_i32_0 = arith.constant 0 : i32
    %c0_i32_1 = arith.constant 0 : i32
    return %c0_i32, %c0_i32_0 : i32, i32
  }
  func.func @transform_3(%arg0: i32) -> (i32, i32) {
    %c0_i32 = arith.constant 0 : i32
    %c0_i32_0 = arith.constant 0 : i32
    %c0_i32_1 = arith.constant 0 : i32
    return %c0_i32, %c0_i32_0 : i32, i32
  }
  func.func @transform_4(%arg0: i32) -> (i32, i32) {
    %c0_i32 = arith.constant 0 : i32
    %c0_i32_0 = arith.constant 0 : i32
    return %arg0, %c0_i32 : i32, i32
  }
  func.func @transform_5(%arg0: i32) -> (i32, i32) {
    %c0_i32 = arith.constant 0 : i32
    %c0_i32_0 = arith.constant 0 : i32
    return %arg0, %c0_i32 : i32, i32
  }
  func.func @transform_6(%arg0: i32) -> (i32, i32) {
    %c0_i32 = arith.constant 0 : i32
    %c0_i32_0 = arith.constant 0 : i32
    %c0_i32_1 = arith.constant 0 : i32
    return %c0_i32, %c0_i32_0 : i32, i32
  }
  func.func @transform_7(%arg0: i32) -> (i32, i32) {
    %c0_i32 = arith.constant 0 : i32
    %c0_i32_0 = arith.constant 0 : i32
    %c0_i32_1 = arith.constant 0 : i32
    return %c0_i32, %c0_i32_0 : i32, i32
  }
  func.func @transform_8(%arg0: i32) -> (i32, i32) {
    %c0_i32 = arith.constant 0 : i32
    %c0_i32_0 = arith.constant 0 : i32
    %c0_i32_1 = arith.constant 0 : i32
    return %c0_i32, %c0_i32_0 : i32, i32
  }
  func.func @transform_9(%arg0: i32) -> (i32, i32) {
    %c0_i32 = arith.constant 0 : i32
    %c0_i32_0 = arith.constant 0 : i32
    return %arg0, %c0_i32 : i32, i32
  }
  func.func @transform_10(%arg0: i32) -> (i32, i32) {
    %c0_i32 = arith.constant 0 : i32
    %c0_i32_0 = arith.constant 0 : i32
    return %arg0, %c0_i32 : i32, i32
  }
  func.func @transform_11(%arg0: i32) -> (i32, i32) {
    %c0_i32 = arith.constant 0 : i32
    %c0_i32_0 = arith.constant 0 : i32
    return %arg0, %c0_i32 : i32, i32
  }
}

</mosaic_0001>

<llo_original>
// kernel: tpu_custom_call.1
$region0: #{tpu_custom_call.1}
  #allocation0 [shape = 'u32[]', space=smem, size = 0x4, offset = 0x4, fixed_abs, tag = 'smem constant byte address 0x4 - core index']
  #allocation1 [shape = 'u32[144,128]{1,0:T(1,128)}', space=vmem, size = 0x12000, scoped, tag = 'internal scratch']
  #allocation2 [shape = 'f32[64,32]{1,0:T(8,128)}', space=vmem, size = 0x8000, scoped, tag = 'scratch operand']
  %s0 = inlined_call_operand.vmem [shape: f32[128,16], index: 0, kind: input, shape index: {}]
  %s1 = inlined_call_operand.vmem [shape: bf16[16,128], index: 1, kind: input, shape index: {}]
  %s2 = inlined_call_operand.vmem [shape: f32[1,128], index: 2, kind: input, shape index: {}]
  %s3 = inlined_call_operand.vmem [shape: bf16[32,128], index: 3, kind: input, shape index: {}]
  %s4 = inlined_call_operand.vmem [shape: f32[16,32], index: 4, kind: input, shape index: {}]
  %s5 = inlined_call_operand.vmem [shape: f32[16,32], index: 5, kind: input, shape index: {}]
  %s6 = inlined_call_operand.vmem [shape: bf16[32,5], index: 6, kind: input, shape index: {}]
  %s7 = inlined_call_operand.vmem [shape: f32[1,5], index: 7, kind: input, shape index: {}]
  %s8 = inlined_call_operand.vmem [shape: f32[5,5], index: 8, kind: input, shape index: {}]
  %s9 = inlined_call_operand.vmem [shape: f32[128,5], index: 9, kind: output, shape index: {0}]
  %s10 = inlined_call_operand.hbm [shape: s32[16,9], index: 10, kind: output, shape index: {1}]
  %s11 = inlined_call_operand.vmem [shape: f32[16,1], index: 11, kind: output, shape index: {2}]
  %12 = xla_tuple %s9, %s10, %s11
  %s13 = sld [smem:[#allocation0]]
  $region85: #{tpu_custom_call.1} parent=0
    _
  %s15 = ssub.s32 1, %s13
  %s16 = scalar_select 0, %s15, %s13
  $region1: #{tpu_custom_call.1} parent=0
    #allocation3 [shape = 'u8[8192]{0}', space=vmem, size = 0x2000, scoped, tag = 'output window, operand 1']
    #allocation4 [shape = 's32[2]{0}', space=sflag, size = 0x8, scoped, tag = 'scoped memory for tpu_custom_call.1']
    %17 = vsyncpa [#allocation4], 0
    %s18 = scalar_lea.sflag [#allocation4], 1
    %19 = vsyncpa %s18, 0
    loop: start=0, step=1, limit=4
    $region2: #{tpu_custom_call.1} parent=1 // loop_pre_header
      _
    $region3: #{tpu_custom_call.1} parent=1 // loop_header
      %s21 = sphi 0, %s25
      %p22 = scmp.ge.s32.totalorder %s21, 4
      %s31 = sphi 0, %s33
      %s34 = sphi 0, %s31
      %s35 = sphi 0, %s34
      %s51 = sphi 0, %s35
      %s55 = sphi 0, %s55
      %s57 = sphi 0, %s55
      %s58 = sphi 0, %s57
      %s72 = sphi 0, %s58
      %s76 = sphi 0, %s76
      %s78 = sphi 0, %s76
      %s79 = sphi 0, %s78
      %s93 = sphi 0, %s79
      %s97 = sphi 0, %s97
      %s99 = sphi 0, %s97
      %s100 = sphi 0, %s99
      %s114 = sphi 0, %s100
      %s120 = sphi 0, %s122
      %s123 = sphi 0, %s120
      %s124 = sphi 0, %s123
      %s140 = sphi 0, %s124
      %s146 = sphi 0, %s148
      %s149 = sphi 0, %s146
      %s150 = sphi 0, %s149
      %s166 = sphi 0, %s150
      %s170 = sphi 0, %s170
      %s172 = sphi 0, %s170
      %s173 = sphi 0, %s172
      %s187 = sphi 0, %s173
      %s191 = sphi 0, %s191
      %s193 = sphi 0, %s191
      %s194 = sphi 0, %s193
      %s208 = sphi 0, %s194
      %s212 = sphi 0, %s212
      %s214 = sphi 0, %s212
      %s215 = sphi 0, %s214
      %s229 = sphi 0, %s215
      %s235 = sphi 0, %s237
      %s238 = sphi 0, %s235
      %s239 = sphi 0, %s238
      %s255 = sphi 0, %s239
      %s261 = sphi 0, %s263
      %s264 = sphi 0, %s261
      %s265 = sphi 0, %s264
      %s281 = sphi 0, %s265
      %s287 = sphi 0, %s289
      %s290 = sphi 0, %s287
      %s291 = sphi 0, %s290
      %s307 = sphi 0, %s291
    $region4: #{tpu_custom_call.1} parent=1 // loop_header_branch
      %24 = sbr.rel (%p22) target = $region8
    $region5: #{tpu_custom_call.1} parent=1 // loop_body
      %s26 = ssub.s32 %s21, 1
      %s27 = ssub.s32 %s21, 2
      %s28 = sadd.s32 %s21, 1
      %s29 = ssub.s32 %s21, %s28
      %p30 = scmp.eq.s32.totalorder %s29, 0
      %s32 = sadd.s32 %s31, 1
      %s33 = scalar_select %p30, %s31, %s32
      %p36 = pneg %p30
      %p37 = scmp.eq.s32.totalorder %s21, 1
      %p38 = por %p36, %p37
      %p39 = scmp.ne.s32.totalorder %s31, %s34
      %p40 = scmp.eq.s32.totalorder %s21, 0
      %p41 = por %p39, %p40
      %p42 = scmp.ne.s32.totalorder %s31, %s34
      %p43 = scmp.eq.s32.totalorder %s26, 1
      %p44 = por %p42, %p43
      %p45 = scmp.ne.s32.totalorder %s34, %s35
      %p46 = scmp.eq.s32.totalorder %s26, 0
      %p47 = por %p45, %p46
      %p48 = scmp.ne.s32.totalorder %s34, %s35
      %p49 = scmp.eq.s32.totalorder %s27, 1
      %p50 = por %p48, %p49
      %p52 = scmp.ne.s32.totalorder %s35, %s51
      %p53 = scmp.eq.s32.totalorder %s27, 0
      %p54 = por %p52, %p53
      %s56 = sadd.s32 %s55, 1
      %p59 = scmp.eq.s32.totalorder %s21, 1
      %p60 = scmp.ne.s32.totalorder %s55, %s57
      %p61 = scmp.eq.s32.totalorder %s21, 0
      %p62 = por %p60, %p61
      %p63 = scmp.ne.s32.totalorder %s55, %s57
      %p64 = scmp.eq.s32.totalorder %s26, 1
      %p65 = por %p63, %p64
      %p66 = scmp.ne.s32.totalorder %s57, %s58
      %p67 = scmp.eq.s32.totalorder %s26, 0
      %p68 = por %p66, %p67
      %p69 = scmp.ne.s32.totalorder %s57, %s58
      %p70 = scmp.eq.s32.totalorder %s27, 1
      %p71 = por %p69, %p70
      %p73 = scmp.ne.s32.totalorder %s58, %s72
      %p74 = scmp.eq.s32.totalorder %s27, 0
      %p75 = por %p73, %p74
      %s77 = sadd.s32 %s76, 1
      %p80 = scmp.eq.s32.totalorder %s21, 1
      %p81 = scmp.ne.s32.totalorder %s76, %s78
      %p82 = scmp.eq.s32.totalorder %s21, 0
      %p83 = por %p81, %p82
      %p84 = scmp.ne.s32.totalorder %s76, %s78
      %p85 = scmp.eq.s32.totalorder %s26, 1
      %p86 = por %p84, %p85
      %p87 = scmp.ne.s32.totalorder %s78, %s79
      %p88 = scmp.eq.s32.totalorder %s26, 0
      %p89 = por %p87, %p88
      %p90 = scmp.ne.s32.totalorder %s78, %s79
      %p91 = scmp.eq.s32.totalorder %s27, 1
      %p92 = por %p90, %p91
      %p94 = scmp.ne.s32.totalorder %s79, %s93
      %p95 = scmp.eq.s32.totalorder %s27, 0
      %p96 = por %p94, %p95
      %s98 = sadd.s32 %s97, 1
      %p101 = scmp.eq.s32.totalorder %s21, 1
      %p102 = scmp.ne.s32.totalorder %s97, %s99
      %p103 = scmp.eq.s32.totalorder %s21, 0
      %p104 = por %p102, %p103
      %p105 = scmp.ne.s32.totalorder %s97, %s99
      %p106 = scmp.eq.s32.totalorder %s26, 1
      %p107 = por %p105, %p106
      %p108 = scmp.ne.s32.totalorder %s99, %s100
      %p109 = scmp.eq.s32.totalorder %s26, 0
      %p110 = por %p108, %p109
      %p111 = scmp.ne.s32.totalorder %s99, %s100
      %p112 = scmp.eq.s32.totalorder %s27, 1
      %p113 = por %p111, %p112
      %p115 = scmp.ne.s32.totalorder %s100, %s114
      %p116 = scmp.eq.s32.totalorder %s27, 0
      %p117 = por %p115, %p116
      %s118 = ssub.s32 %s21, %s28
      %p119 = scmp.eq.s32.totalorder %s118, 0
      %s121 = sadd.s32 %s120, 1
      %s122 = scalar_select %p119, %s120, %s121
      %p125 = pneg %p119
      %p126 = scmp.eq.s32.totalorder %s21, 1
      %p127 = por %p125, %p126
      %p128 = scmp.ne.s32.totalorder %s120, %s123
      %p129 = scmp.eq.s32.totalorder %s21, 0
      %p130 = por %p128, %p129
      %p131 = scmp.ne.s32.totalorder %s120, %s123
      %p132 = scmp.eq.s32.totalorder %s26, 1
      %p133 = por %p131, %p132
      %p134 = scmp.ne.s32.totalorder %s123, %s124
      %p135 = scmp.eq.s32.totalorder %s26, 0
      %p136 = por %p134, %p135
      %p137 = scmp.ne.s32.totalorder %s123, %s124
      %p138 = scmp.eq.s32.totalorder %s27, 1
      %p139 = por %p137, %p138
      %p141 = scmp.ne.s32.totalorder %s124, %s140
      %p142 = scmp.eq.s32.totalorder %s27, 0
      %p143 = por %p141, %p142
      %s144 = ssub.s32 %s21, %s28
      %p145 = scmp.eq.s32.totalorder %s144, 0
      %s147 = sadd.s32 %s146, 1
      %s148 = scalar_select %p145, %s146, %s147
      %p151 = pneg %p145
      %p152 = scmp.eq.s32.totalorder %s21, 1
      %p153 = por %p151, %p152
      %p154 = scmp.ne.s32.totalorder %s146, %s149
      %p155 = scmp.eq.s32.totalorder %s21, 0
      %p156 = por %p154, %p155
      %p157 = scmp.ne.s32.totalorder %s146, %s149
      %p158 = scmp.eq.s32.totalorder %s26, 1
      %p159 = por %p157, %p158
      %p160 = scmp.ne.s32.totalorder %s149, %s150
      %p161 = scmp.eq.s32.totalorder %s26, 0
      %p162 = por %p160, %p161
      %p163 = scmp.ne.s32.totalorder %s149, %s150
      %p164 = scmp.eq.s32.totalorder %s27, 1
      %p165 = por %p163, %p164
      %p167 = scmp.ne.s32.totalorder %s150, %s166
      %p168 = scmp.eq.s32.totalorder %s27, 0
      %p169 = por %p167, %p168
      %s171 = sadd.s32 %s170, 1
      %p174 = scmp.eq.s32.totalorder %s21, 1
      %p175 = scmp.ne.s32.totalorder %s170, %s172
      %p176 = scmp.eq.s32.totalorder %s21, 0
      %p177 = por %p175, %p176
      %p178 = scmp.ne.s32.totalorder %s170, %s172
      %p179 = scmp.eq.s32.totalorder %s26, 1
      %p180 = por %p178, %p179
      %p181 = scmp.ne.s32.totalorder %s172, %s173
      %p182 = scmp.eq.s32.totalorder %s26, 0
      %p183 = por %p181, %p182
      %p184 = scmp.ne.s32.totalorder %s172, %s173
      %p185 = scmp.eq.s32.totalorder %s27, 1
      %p186 = por %p184, %p185
      %p188 = scmp.ne.s32.totalorder %s173, %s187
      %p189 = scmp.eq.s32.totalorder %s27, 0
      %p190 = por %p188, %p189
      %s192 = sadd.s32 %s191, 1
      %p195 = scmp.eq.s32.totalorder %s21, 1
      %p196 = scmp.ne.s32.totalorder %s191, %s193
      %p197 = scmp.eq.s32.totalorder %s21, 0
      %p198 = por %p196, %p197
      %p199 = scmp.ne.s32.totalorder %s191, %s193
      %p200 = scmp.eq.s32.totalorder %s26, 1
      %p201 = por %p199, %p200
      %p202 = scmp.ne.s32.totalorder %s193, %s194
      %p203 = scmp.eq.s32.totalorder %s26, 0
      %p204 = por %p202, %p203
      %p205 = scmp.ne.s32.totalorder %s193, %s194
      %p206 = scmp.eq.s32.totalorder %s27, 1
      %p207 = por %p205, %p206
      %p209 = scmp.ne.s32.totalorder %s194, %s208
      %p210 = scmp.eq.s32.totalorder %s27, 0
      %p211 = por %p209, %p210
      %s213 = sadd.s32 %s212, 1
      %p216 = scmp.eq.s32.totalorder %s21, 1
      %p217 = scmp.ne.s32.totalorder %s212, %s214
      %p218 = scmp.eq.s32.totalorder %s21, 0
      %p219 = por %p217, %p218
      %p220 = scmp.ne.s32.totalorder %s212, %s214
      %p221 = scmp.eq.s32.totalorder %s26, 1
      %p222 = por %p220, %p221
      %p223 = scmp.ne.s32.totalorder %s214, %s215
      %p224 = scmp.eq.s32.totalorder %s26, 0
      %p225 = por %p223, %p224
      %p226 = scmp.ne.s32.totalorder %s214, %s215
      %p227 = scmp.eq.s32.totalorder %s27, 1
      %p228 = por %p226, %p227
      %p230 = scmp.ne.s32.totalorder %s215, %s229
      %p231 = scmp.eq.s32.totalorder %s27, 0
      %p232 = por %p230, %p231
      %s233 = ssub.s32 %s21, %s28
      %p234 = scmp.eq.s32.totalorder %s233, 0
      %s236 = sadd.s32 %s235, 1
      %s237 = scalar_select %p234, %s235, %s236
      %p240 = pneg %p234
      %p241 = scmp.eq.s32.totalorder %s21, 1
      %p242 = por %p240, %p241
      %p243 = scmp.ne.s32.totalorder %s235, %s238
      %p244 = scmp.eq.s32.totalorder %s21, 0
      %p245 = por %p243, %p244
      %p246 = scmp.ne.s32.totalorder %s235, %s238
      %p247 = scmp.eq.s32.totalorder %s26, 1
      %p248 = por %p246, %p247
      %p249 = scmp.ne.s32.totalorder %s238, %s239
      %p250 = scmp.eq.s32.totalorder %s26, 0
      %p251 = por %p249, %p250
      %p252 = scmp.ne.s32.totalorder %s238, %s239
      %p253 = scmp.eq.s32.totalorder %s27, 1
      %p254 = por %p252, %p253
      %p256 = scmp.ne.s32.totalorder %s239, %s255
      %p257 = scmp.eq.s32.totalorder %s27, 0
      %p258 = por %p256, %p257
      %s259 = ssub.s32 %s21, %s28
      %p260 = scmp.eq.s32.totalorder %s259, 0
      %s262 = sadd.s32 %s261, 1
      %s263 = scalar_select %p260, %s261, %s262
      %p266 = pneg %p260
      %p267 = scmp.eq.s32.totalorder %s21, 1
      %p268 = por %p266, %p267
      %p269 = scmp.ne.s32.totalorder %s261, %s264
      %p270 = scmp.eq.s32.totalorder %s21, 0
      %p271 = por %p269, %p270
      %p272 = scmp.ne.s32.totalorder %s261, %s264
      %p273 = scmp.eq.s32.totalorder %s26, 1
      %p274 = por %p272, %p273
      %p275 = scmp.ne.s32.totalorder %s264, %s265
      %p276 = scmp.eq.s32.totalorder %s26, 0
      %p277 = por %p275, %p276
      %p278 = scmp.ne.s32.totalorder %s264, %s265
      %p279 = scmp.eq.s32.totalorder %s27, 1
      %p280 = por %p278, %p279
      %p282 = scmp.ne.s32.totalorder %s265, %s281
      %p283 = scmp.eq.s32.totalorder %s27, 0
      %p284 = por %p282, %p283
      %s285 = ssub.s32 %s21, %s28
      %p286 = scmp.eq.s32.totalorder %s285, 0
      %s288 = sadd.s32 %s287, 1
      %s289 = scalar_select %p286, %s287, %s288
      %p292 = pneg %p286
      %p293 = scmp.eq.s32.totalorder %s21, 1
      %p294 = por %p292, %p293
      %p295 = scmp.ne.s32.totalorder %s287, %s290
      %p296 = scmp.eq.s32.totalorder %s21, 0
      %p297 = por %p295, %p296
      %p298 = scmp.ne.s32.totalorder %s287, %s290
      %p299 = scmp.eq.s32.totalorder %s26, 1
      %p300 = por %p298, %p299
      %p301 = scmp.ne.s32.totalorder %s290, %s291
      %p302 = scmp.eq.s32.totalorder %s26, 0
      %p303 = por %p301, %p302
      %p304 = scmp.ne.s32.totalorder %s290, %s291
      %p305 = scmp.eq.s32.totalorder %s27, 1
      %p306 = por %p304, %p305
      %p308 = scmp.ne.s32.totalorder %s291, %s307
      %p309 = scmp.eq.s32.totalorder %s27, 0
      %p310 = por %p308, %p309
      %p311 = scmp.le.s32.totalorder 1, %s21
      %p312 = scmp.lt.s32.totalorder %s21, 3
      %p313 = pnand %p311, %p312
      %p314 = pneg %p313
      // Predicated region
      $region9: #{tpu_custom_call.1} parent=5 // pred_check
        _
      $region10: #{tpu_custom_call.1} parent=5 // pred_check_branch
        %316 = sbr.rel (%p313) target = $region12
      $region11: #{tpu_custom_call.1} parent=5 // pred_region
        %s317 = ssub.s32 %s21, 1
        // Predicated region
        $region13: #{tpu_custom_call.1} parent=11 // pred_check
          %p318 = pneg %p68
        $region14: #{tpu_custom_call.1} parent=11 // pred_check_branch
          %320 = sbr.rel (%p318) target = $region16
        $region15: #{tpu_custom_call.1} parent=11 // pred_region
          _
        $region16: #{tpu_custom_call.1} parent=11 // pred_fallthru
          _
        // Predicated region
        $region17: #{tpu_custom_call.1} parent=11 // pred_check
          %p321 = pneg %p89
        $region18: #{tpu_custom_call.1} parent=11 // pred_check_branch
          %323 = sbr.rel (%p321) target = $region20
        $region19: #{tpu_custom_call.1} parent=11 // pred_region
          _
        $region20: #{tpu_custom_call.1} parent=11 // pred_fallthru
          _
        // Predicated region
        $region21: #{tpu_custom_call.1} parent=11 // pred_check
          %p324 = pneg %p110
        $region22: #{tpu_custom_call.1} parent=11 // pred_check_branch
          %326 = sbr.rel (%p324) target = $region24
        $region23: #{tpu_custom_call.1} parent=11 // pred_region
          _
        $region24: #{tpu_custom_call.1} parent=11 // pred_fallthru
          _
        // Predicated region
        $region25: #{tpu_custom_call.1} parent=11 // pred_check
          %p327 = pneg %p183
        $region26: #{tpu_custom_call.1} parent=11 // pred_check_branch
          %329 = sbr.rel (%p327) target = $region28
        $region27: #{tpu_custom_call.1} parent=11 // pred_region
          _
        $region28: #{tpu_custom_call.1} parent=11 // pred_fallthru
          _
        // Predicated region
        $region29: #{tpu_custom_call.1} parent=11 // pred_check
          %p330 = pneg %p204
        $region30: #{tpu_custom_call.1} parent=11 // pred_check_branch
          %332 = sbr.rel (%p330) target = $region32
        $region31: #{tpu_custom_call.1} parent=11 // pred_region
          _
        $region32: #{tpu_custom_call.1} parent=11 // pred_fallthru
          _
        // Predicated region
        $region33: #{tpu_custom_call.1} parent=11 // pred_check
          %p333 = pneg %p225
        $region34: #{tpu_custom_call.1} parent=11 // pred_check_branch
          %335 = sbr.rel (%p333) target = $region36
        $region35: #{tpu_custom_call.1} parent=11 // pred_region
          _
        $region36: #{tpu_custom_call.1} parent=11 // pred_fallthru
          _
      $region12: #{tpu_custom_call.1} parent=5 // pred_fallthru
        _
      %p336 = scmp.lt.s32.totalorder %s21, 2
      // Predicated region
      $region37: #{tpu_custom_call.1} parent=5 // pred_check
        %p337 = pneg %p336
      $region38: #{tpu_custom_call.1} parent=5 // pred_check_branch
        %339 = sbr.rel (%p337) target = $region40
      $region39: #{tpu_custom_call.1} parent=5 // pred_region
        // Predicated region
        $region41: #{tpu_custom_call.1} parent=39 // pred_check
          %p340 = pneg %p41
        $region42: #{tpu_custom_call.1} parent=39 // pred_check_branch
          %342 = sbr.rel (%p340) target = $region44
        $region43: #{tpu_custom_call.1} parent=39 // pred_region
          %s343 = smul.u32 8, %s21
          %p344 = scmp.lt.s32.totalorder %s343, 15
          %s345 = scalar_select %p344, %s343, 15
          %s346 = smul.addr %s345, 8
          %s347 = scalar_lea.vmem %s0, %s346
          %s348 = smul.u32 8, %s21
        $region44: #{tpu_custom_call.1} parent=39 // pred_fallthru
          _
        // Predicated region
        $region45: #{tpu_custom_call.1} parent=39 // pred_check
          %p349 = pneg %p130
        $region46: #{tpu_custom_call.1} parent=39 // pred_check_branch
          %351 = sbr.rel (%p349) target = $region48
        $region47: #{tpu_custom_call.1} parent=39 // pred_region
          %p352 = scmp.lt.s32.totalorder %s21, 1
          %s353 = scalar_select %p352, %s21, 1
          %s354 = smul.addr %s353, 8
          %s355 = scalar_lea.vmem %s4, %s354
        $region48: #{tpu_custom_call.1} parent=39 // pred_fallthru
          _
        // Predicated region
        $region49: #{tpu_custom_call.1} parent=39 // pred_check
          %p356 = pneg %p156
        $region50: #{tpu_custom_call.1} parent=39 // pred_check_branch
          %358 = sbr.rel (%p356) target = $region52
        $region51: #{tpu_custom_call.1} parent=39 // pred_region
          %p359 = scmp.lt.s32.totalorder %s21, 1
          %s360 = scalar_select %p359, %s21, 1
          %s361 = smul.addr %s360, 8
          %s362 = scalar_lea.vmem %s5, %s361
        $region52: #{tpu_custom_call.1} parent=39 // pred_fallthru
          _
      $region40: #{tpu_custom_call.1} parent=5 // pred_fallthru
        _
      %p363 = scmp.le.s32.totalorder 1, %s21
      %p364 = scmp.lt.s32.totalorder %s21, 3
      %p365 = pnand %p363, %p364
      %p366 = pneg %p365
      // Predicated region
      $region53: #{tpu_custom_call.1} parent=5 // pred_check
        _
      $region54: #{tpu_custom_call.1} parent=5 // pred_check_branch
        %368 = sbr.rel (%p365) target = $region56
      $region55: #{tpu_custom_call.1} parent=5 // pred_region
        %s369 = ssub.s32 %s21, 1
        %s370 = smul.u32 8, %s26
        %p371 = scmp.lt.s32.totalorder %s370, 15
        %s372 = scalar_select %p371, %s370, 15
        %s373 = smul.addr %s372, 8
        %s374 = scalar_lea.vmem %s0, %s373
        %p375 = pneg %p47
        %p376 = pneg %p44
        %p377 = pneg %p68
        %p378 = pneg %p65
        %p379 = pneg %p89
        %p380 = pneg %p86
        %p381 = pneg %p110
        %p382 = pneg %p107
        %p383 = scmp.lt.s32.totalorder %s26, 1
        %s384 = scalar_select %p383, %s26, 1
        %s385 = smul.addr %s384, 8
        %s386 = scalar_lea.vmem %s4, %s385
        %p387 = pneg %p136
        %p388 = pneg %p133
        %p389 = scmp.lt.s32.totalorder %s26, 1
        %s390 = scalar_select %p389, %s26, 1
        %s391 = smul.addr %s390, 8
        %s392 = scalar_lea.vmem %s5, %s391
        %p393 = pneg %p162
        %p394 = pneg %p159
        %p395 = pneg %p183
        %p396 = pneg %p180
        %p397 = pneg %p204
        %p398 = pneg %p201
        %p399 = pneg %p225
        %p400 = pneg %p222
        %p401 = pneg %p251
        %p402 = pneg %p248
        %s403 = smul.u32 8, %s26
        %p404 = scmp.lt.s32.totalorder %s403, 15
        %s405 = scalar_select %p404, %s403, 15
        %s406 = smul.addr %s405, 8
        %s407 = scalar_lea.vmem %s9, %s406
        %p408 = pneg %p277
        %p409 = pneg %p274
        %s410 = sand.u32 %s264, 1
        %s411 = scalar_lea.sflag [#allocation4], %s410
        %s412 = sand.u32 %s264, 1
        %s413 = smul.addr %s412, 8
        %s414 = scalar_lea.vmem [#allocation3], %s413
        %p415 = pneg %p303
        %p416 = pneg %p300
        %p417 = scmp.lt.s32.totalorder %s26, 1
        %s418 = scalar_select %p417, %s26, 1
        %s419 = smul.addr %s418, 8
        %s420 = scalar_lea.vmem %s11, %s419
        %s421 = smul.u32 8, %s26
        %p422 = scmp.lt.s32.totalorder %s421, 15
        %s423 = scalar_select %p422, %s421, 15
        %s424 = smul.addr %s423, 8
        %s425 = scalar_lea.vmem %s0, %s424
        %s426 = smul.u32 8, %s26
        %p427 = scmp.lt.s32.totalorder %s26, 1
        %s428 = scalar_select %p427, %s26, 1
        %s429 = smul.addr %s428, 8
        %s430 = scalar_lea.vmem %s4, %s429
        %p431 = scmp.lt.s32.totalorder %s26, 1
        %s432 = scalar_select %p431, %s26, 1
        %s433 = smul.addr %s432, 8
        %s434 = scalar_lea.vmem %s5, %s433
        %s435 = smul.u32 8, %s26
        %p436 = scmp.lt.s32.totalorder %s435, 15
        %s437 = scalar_select %p436, %s435, 15
        %s438 = smul.addr %s437, 8
        %s439 = scalar_lea.vmem %s9, %s438
        %s440 = smul.u32 8, %s26
        %p441 = scmp.lt.s32.totalorder %s26, 1
        %s442 = scalar_select %p441, %s26, 1
        %s443 = smul.addr %s442, 8
        %s444 = scalar_lea.vmem %s11, %s443
        %v446 = vld [vmem:[%s425] sm:$0xff]
        %v447 = vld [vmem:[%s425 + $0x8] sm:$0xff]
        %v448 = vld [vmem:[%s425 + $0x10] sm:$0xff]
        %v449 = vld [vmem:[%s425 + $0x18] sm:$0xff]
        %v450 = vld [vmem:[%s425 + $0x20] sm:$0xff]
        %v451 = vld [vmem:[%s425 + $0x28] sm:$0xff]
        %v452 = vld [vmem:[%s425 + $0x30] sm:$0xff]
        %v453 = vld [vmem:[%s425 + $0x38] sm:$0xff]
        %v454 = vpack.c.bf16 %v447, %v446
        %v455 = vpack.c.bf16 %v449, %v448
        %v456 = vpack.c.bf16 %v451, %v450
        %v457 = vpack.c.bf16 %v453, %v452
        %v458 = vld [vmem:[%s1] sm:$0xf]
        %v459 = vld [vmem:[%s1 + $0x4] sm:$0xf]
        %v460 = vld [vmem:[%s2] sm:$0x1]
        %v462 = vlaneseq
        %v463 = vshrl.u32 %v462, 7
        %v464 = vsub.s32 0, %v463
        %v465 = vrot.slane %v460, %v464
        %v469 = vunpack.c.l.b16 %v458
        %v470 = vunpack.c.l.b16 %v459
        %v471 = vpack.c.b16 %v470, %v469
        %vm473 = vcmask 130048
        %v475 = vsel %vm473, %v454, 0
        %v478 = vsel %vm473, %v455, 0
        %v481 = vsel %vm473, %v456, 0
        %v484 = vsel %vm473, %v457, 0
        %486 = vmatprep.subr.bf16.mxu0 0
        %487 = vmatpush1.bf16.msra.mxu0 %v471
        %488 = vmatprep.subr.bf16.mxu0 0
        %489 = vmatpush1.bf16.msra.mxu0 0
        %490 = vmatprep.subr.bf16.mxu0 0
        %491 = vmatpush1.bf16.msra.mxu0 0
        %492 = vmatprep.subr.bf16.mxu0 0
        %493 = vmatpush1.bf16.msra.mxu0 0
        %494 = vmatprep.subr.bf16.mxu0 0
        %495 = vmatpush1.bf16.msra.mxu0 0
        %496 = vmatprep.subr.bf16.mxu0 0
        %497 = vmatpush1.bf16.msra.mxu0 0
        %498 = vmatprep.subr.bf16.mxu0 0
        %499 = vmatpush1.bf16.msra.mxu0 0
        %500 = vmatprep.subr.bf16.mxu0 0
        %501 = vmatpush1.bf16.msra.mxu0 0
        %502 = vmatprep.subr.bf16.mxu0 0
        %503 = vmatpush1.bf16.msra.mxu0 0
        %504 = vmatprep.subr.bf16.mxu0 0
        %505 = vmatpush1.bf16.msra.mxu0 0
        %506 = vmatprep.subr.bf16.mxu0 0
        %507 = vmatpush1.bf16.msra.mxu0 0
        %508 = vmatprep.subr.bf16.mxu0 0
        %509 = vmatpush1.bf16.msra.mxu0 0
        %510 = vmatprep.subr.bf16.mxu0 0
        %511 = vmatpush1.bf16.msra.mxu0 0
        %512 = vmatprep.subr.bf16.mxu0 0
        %513 = vmatpush1.bf16.msra.mxu0 0
        %514 = vmatprep.subr.bf16.mxu0 0
        %515 = vmatpush1.bf16.msra.mxu0 0
        %516 = vmatprep.subr.bf16.mxu0 0
        %517 = vmatpush1.bf16.msra.mxu0 0
        %518 = vmatprep.mubr.bf16.mxu0 0
        %519 = vmatmul.mubr.bf16.gmra.mrb[0].mxu0 %v475
        %v520 = vpop.f32.mrb[0].mxu0
        %v521 = vadd.f32 %v465, %v520
        %v522 = vpop.f32.mrb[0].mxu0
        %v523 = vpop.f32.mrb[0].mxu0
        %v524 = vadd.f32 %v465, %v523
        %v525 = vpop.f32.mrb[0].mxu0
        %526 = vmatprep.mubr.bf16.mxu0 0
        %527 = vmatmul.mubr.bf16.gmra.mrb[0].mxu0 %v478
        %v528 = vpop.f32.mrb[0].mxu0
        %v529 = vadd.f32 %v465, %v528
        %v530 = vpop.f32.mrb[0].mxu0
        %v531 = vpop.f32.mrb[0].mxu0
        %v532 = vadd.f32 %v465, %v531
        %v533 = vpop.f32.mrb[0].mxu0
        %534 = vmatprep.mubr.bf16.mxu0 0
        %535 = vmatmul.mubr.bf16.gmra.mrb[0].mxu0 %v481
        %v536 = vpop.f32.mrb[0].mxu0
        %v537 = vadd.f32 %v465, %v536
        %v538 = vpop.f32.mrb[0].mxu0
        %v539 = vpop.f32.mrb[0].mxu0
        %v540 = vadd.f32 %v465, %v539
        %v541 = vpop.f32.mrb[0].mxu0
        %542 = vmatprep.mubr.bf16.mxu0 0
        %543 = vmatmul.mubr.bf16.gmra.mrb[0].mxu0 %v484
        %v544 = vpop.f32.mrb[0].mxu0
        %v545 = vadd.f32 %v465, %v544
        %v546 = vpop.f32.mrb[0].mxu0
        %v547 = vpop.f32.mrb[0].mxu0
        %v548 = vadd.f32 %v465, %v547
        %v549 = vpop.f32.mrb[0].mxu0
        %550 = vdwg.mxu0
        %v551 = vlaneseq
        %v552 = vand.u32 %v551, 127
        %vm553 = vcmp.lt.s32.totalorder %v552, 0
        %v554 = vsub.s32 0, %v552
        %v555 = vsel %vm553, %v554, %v552
        %v556 = vshrl.u32 %v555, 5
        %v557 = vand.u32 %v555, 31
        %v558 = vsub.s32 0, %v557
        %v559 = vsel %vm553, %v558, %v557
        %vm560 = vcmp.ne.s32.totalorder %v559, 0
        %vm561 = vcmp.lt.s32.totalorder %v559, 0
        %vm562 = vmand %vm561, %vm560
        %v563 = vadd.s32 %v559, 32
        %v564 = vsel %vm562, %v563, %v559
        %vm565 = vcmp.lt.s32.totalorder %v564, 16
        %v566 = vsel %vm565, 1, 0
        %vm567 = vcmp.eq.s32.totalorder %v566, 1
        %v568 = vsel %vm567, %v521, %v548
        %v569 = vsel %vm567, %v524, %v545
        %v570 = vsel %vm567, %v529, %v540
        %v571 = vsel %vm567, %v532, %v537
        %v572 = vsel %vm567, %v537, %v532
        %v573 = vsel %vm567, %v540, %v529
        %v574 = vsel %vm567, %v545, %v524
        %v575 = vsel %vm567, %v548, %v521
        %v576 = vld [vmem:[%s3] sm:$0xf]
        %v577 = vld [vmem:[%s3 + $0x4] sm:$0xf]
        %v578 = vld [vmem:[%s3 + $0x8] sm:$0xf]
        %v579 = vld [vmem:[%s3 + $0xc] sm:$0xf]
        %v580 = vld [vmem:[%s430] sm:$0xff]
        %v581 = vld [vmem:[%s434] sm:$0xff]
        %v582 = vpack.c.bf16 %v580, %v580
        %v587 = vunpack.c.l.b16 %v576
        %v588 = vunpack.c.l.b16 %v577
        %v589 = vunpack.c.l.b16 %v578
        %v590 = vunpack.c.l.b16 %v579
        %v591 = vpack.c.b16 %v588, %v587
        %v592 = vpack.c.b16 %v590, %v589
        %vm595 = vcmask 261120
        %v597 = vsel %vm595, %v582, 0
        %599 = vmatprep.subr.bf16.mxu0 0
        %600 = vmatpush1.bf16.msra.mxu0 %v591
        %601 = vmatprep.subr.bf16.mxu0 0
        %602 = vmatpush1.bf16.msra.mxu0 %v592
        %603 = vmatprep.subr.bf16.mxu0 0
        %604 = vmatpush1.bf16.msra.mxu0 0
        %605 = vmatprep.subr.bf16.mxu0 0
        %606 = vmatpush1.bf16.msra.mxu0 0
        %607 = vmatprep.subr.bf16.mxu0 0
        %608 = vmatpush1.bf16.msra.mxu0 0
        %609 = vmatprep.subr.bf16.mxu0 0
        %610 = vmatpush1.bf16.msra.mxu0 0
        %611 = vmatprep.subr.bf16.mxu0 0
        %612 = vmatpush1.bf16.msra.mxu0 0
        %613 = vmatprep.subr.bf16.mxu0 0
        %614 = vmatpush1.bf16.msra.mxu0 0
        %615 = vmatprep.subr.bf16.mxu0 0
        %616 = vmatpush1.bf16.msra.mxu0 0
        %617 = vmatprep.subr.bf16.mxu0 0
        %618 = vmatpush1.bf16.msra.mxu0 0
        %619 = vmatprep.subr.bf16.mxu0 0
        %620 = vmatpush1.bf16.msra.mxu0 0
        %621 = vmatprep.subr.bf16.mxu0 0
        %622 = vmatpush1.bf16.msra.mxu0 0
        %623 = vmatprep.subr.bf16.mxu0 0
        %624 = vmatpush1.bf16.msra.mxu0 0
        %625 = vmatprep.subr.bf16.mxu0 0
        %626 = vmatpush1.bf16.msra.mxu0 0
        %627 = vmatprep.subr.bf16.mxu0 0
        %628 = vmatpush1.bf16.msra.mxu0 0
        %629 = vmatprep.subr.bf16.mxu0 0
        %630 = vmatpush1.bf16.msra.mxu0 0
        %631 = vmatprep.mubr.bf16.mxu0 0
        %632 = vmatmul.mubr.bf16.gmra.mrb[0].mxu0 %v597
        %v633 = vpop.f32.mrb[0].mxu0
        %v634 = vadd.f32 0.0, %v633
        %v635 = vpop.f32.mrb[0].mxu0
        %v636 = vpop.f32.mrb[0].mxu0
        %v637 = vpop.f32.mrb[0].mxu0
        %638 = vdwg.mxu0
        %v639 = vadd.f32 %v568, %v634
        %v640 = vxor.u32 %v639, 2147483648
        %v641 = vmul.f32 %v640, 1.442695
        %v642 = vpow.pop %v641
        %v643 = vadd.f32 %v642, 1.0
        %v644 = vrcp.pop %v643
        %v645 = vmul.f32 1.0, %v644
        %v646 = vtanh.pop %v639
        %648 = vrot.lane.b32.xlu0 %v581, 32
        %v649 = vpop.permute.xlu0 %648
        %v651 = vmul.f32 %v645, %v649
        %653 = vrot.lane.b32.xlu0 %v646, 32
        %v654 = vpop.permute.xlu0 %653
        %v656 = vmul.f32 %v645, %v654
        %658 = vrot.lane.b32.xlu0 %v656, 32
        %v659 = vpop.permute.xlu0 %658
        %v661 = vadd.f32 %v651, %v659
        %v662 = vtanh.pop %v661
        %664 = vrot.lane.b32.xlu0 %v662, 32
        %v665 = vpop.permute.xlu0 %664
        %v667 = vmul.f32 %v645, %v665
        %669 = vrot.lane.b32.xlu0 %v667, 64
        %v670 = vpop.permute.xlu0 %669
        %672 = vst.msk [vmem:[#allocation2] sm:$0xff] %vm473, %v670
        %vm673 = vcmask 261248
        %674 = vst.msk [vmem:[#allocation2 + $0x38] sm:$0xff] %vm673, %v670
        %v675 = vpack.c.bf16 %v667, %v667
        %677 = vrot.lane.b32.xlu0 %v675, 64
        %v678 = vpop.permute.xlu0 %677
        %v680 = vsel %vm595, %v678, 0
        %682 = vmatprep.subr.bf16.mxu0 0
        %683 = vmatpush1.bf16.msra.mxu0 %v591
        %684 = vmatprep.subr.bf16.mxu0 0
        %685 = vmatpush1.bf16.msra.mxu0 %v592
        %686 = vmatprep.subr.bf16.mxu0 0
        %687 = vmatpush1.bf16.msra.mxu0 0
        %688 = vmatprep.subr.bf16.mxu0 0
        %689 = vmatpush1.bf16.msra.mxu0 0
        %690 = vmatprep.subr.bf16.mxu0 0
        %691 = vmatpush1.bf16.msra.mxu0 0
        %692 = vmatprep.subr.bf16.mxu0 0
        %693 = vmatpush1.bf16.msra.mxu0 0
        %694 = vmatprep.subr.bf16.mxu0 0
        %695 = vmatpush1.bf16.msra.mxu0 0
        %696 = vmatprep.subr.bf16.mxu0 0
        %697 = vmatpush1.bf16.msra.mxu0 0
        %698 = vmatprep.subr.bf16.mxu0 0
        %699 = vmatpush1.bf16.msra.mxu0 0
        %700 = vmatprep.subr.bf16.mxu0 0
        %701 = vmatpush1.bf16.msra.mxu0 0
        %702 = vmatprep.subr.bf16.mxu0 0
        %703 = vmatpush1.bf16.msra.mxu0 0
        %704 = vmatprep.subr.bf16.mxu0 0
        %705 = vmatpush1.bf16.msra.mxu0 0
        %706 = vmatprep.subr.bf16.mxu0 0
        %707 = vmatpush1.bf16.msra.mxu0 0
        %708 = vmatprep.subr.bf16.mxu0 0
        %709 = vmatpush1.bf16.msra.mxu0 0
        %710 = vmatprep.subr.bf16.mxu0 0
        %711 = vmatpush1.bf16.msra.mxu0 0
        %712 = vmatprep.subr.bf16.mxu0 0
        %713 = vmatpush1.bf16.msra.mxu0 0
        %714 = vmatprep.mubr.bf16.mxu0 0
        %715 = vmatmul.mubr.bf16.gmra.mrb[0].mxu0 %v680
        %v716 = vpop.f32.mrb[0].mxu0
        %v717 = vadd.f32 0.0, %v716
        %v718 = vpop.f32.mrb[0].mxu0
        %v719 = vpop.f32.mrb[0].mxu0
        %v720 = vpop.f32.mrb[0].mxu0
        %721 = vdwg.mxu0
        %v722 = vadd.f32 %v569, %v717
        %v723 = vxor.u32 %v722, 2147483648
        %v724 = vmul.f32 %v723, 1.442695
        %v725 = vpow.pop %v724
        %v726 = vadd.f32 %v725, 1.0
        %v727 = vrcp.pop %v726
        %v728 = vmul.f32 1.0, %v727
        %v729 = vtanh.pop %v722
        %v730 = vmul.f32 %v728, %v661
        %732 = vrot.lane.b32.xlu0 %v729, 32
        %v733 = vpop.permute.xlu0 %732
        %v735 = vmul.f32 %v728, %v733
        %737 = vrot.lane.b32.xlu0 %v735, 32
        %v738 = vpop.permute.xlu0 %737
        %v740 = vadd.f32 %v730, %v738
        %v741 = vtanh.pop %v740
        %743 = vrot.lane.b32.xlu0 %v741, 32
        %v744 = vpop.permute.xlu0 %743
        %v746 = vmul.f32 %v728, %v744
        %748 = vrot.lane.b32.xlu0 %v746, 64
        %v749 = vpop.permute.xlu0 %748
        %751 = vst.msk [vmem:[#allocation2 + $0x8] sm:$0xff] %vm473, %v749
        %752 = vst.msk [vmem:[#allocation2 + $0x30] sm:$0xff] %vm673, %v749
        %v753 = vpack.c.bf16 %v746, %v746
        %755 = vrot.lane.b32.xlu0 %v753, 64
        %v756 = vpop.permute.xlu0 %755
        %v758 = vsel %vm595, %v756, 0
        %760 = vmatprep.subr.bf16.mxu0 0
        %761 = vmatpush1.bf16.msra.mxu0 %v591
        %762 = vmatprep.subr.bf16.mxu0 0
        %763 = vmatpush1.bf16.msra.mxu0 %v592
        %764 = vmatprep.subr.bf16.mxu0 0
        %765 = vmatpush1.bf16.msra.mxu0 0
        %766 = vmatprep.subr.bf16.mxu0 0
        %767 = vmatpush1.bf16.msra.mxu0 0
        %768 = vmatprep.subr.bf16.mxu0 0
        %769 = vmatpush1.bf16.msra.mxu0 0
        %770 = vmatprep.subr.bf16.mxu0 0
        %771 = vmatpush1.bf16.msra.mxu0 0
        %772 = vmatprep.subr.bf16.mxu0 0
        %773 = vmatpush1.bf16.msra.mxu0 0
        %774 = vmatprep.subr.bf16.mxu0 0
        %775 = vmatpush1.bf16.msra.mxu0 0
        %776 = vmatprep.subr.bf16.mxu0 0
        %777 = vmatpush1.bf16.msra.mxu0 0
        %778 = vmatprep.subr.bf16.mxu0 0
        %779 = vmatpush1.bf16.msra.mxu0 0
        %780 = vmatprep.subr.bf16.mxu0 0
        %781 = vmatpush1.bf16.msra.mxu0 0
        %782 = vmatprep.subr.bf16.mxu0 0
        %783 = vmatpush1.bf16.msra.mxu0 0
        %784 = vmatprep.subr.bf16.mxu0 0
        %785 = vmatpush1.bf16.msra.mxu0 0
        %786 = vmatprep.subr.bf16.mxu0 0
        %787 = vmatpush1.bf16.msra.mxu0 0
        %788 = vmatprep.subr.bf16.mxu0 0
        %789 = vmatpush1.bf16.msra.mxu0 0
        %790 = vmatprep.subr.bf16.mxu0 0
        %791 = vmatpush1.bf16.msra.mxu0 0
        %792 = vmatprep.mubr.bf16.mxu0 0
        %793 = vmatmul.mubr.bf16.gmra.mrb[0].mxu0 %v758
        %v794 = vpop.f32.mrb[0].mxu0
        %v795 = vadd.f32 0.0, %v794
        %v796 = vpop.f32.mrb[0].mxu0
        %v797 = vpop.f32.mrb[0].mxu0
        %v798 = vpop.f32.mrb[0].mxu0
        %799 = vdwg.mxu0
        %v800 = vadd.f32 %v570, %v795
        %v801 = vxor.u32 %v800, 2147483648
        %v802 = vmul.f32 %v801, 1.442695
        %v803 = vpow.pop %v802
        %v804 = vadd.f32 %v803, 1.0
        %v805 = vrcp.pop %v804
        %v806 = vmul.f32 1.0, %v805
        %v807 = vtanh.pop %v800
        %v808 = vmul.f32 %v806, %v740
        %810 = vrot.lane.b32.xlu0 %v807, 32
        %v811 = vpop.permute.xlu0 %810
        %v813 = vmul.f32 %v806, %v811
        %815 = vrot.lane.b32.xlu0 %v813, 32
        %v816 = vpop.permute.xlu0 %815
        %v818 = vadd.f32 %v808, %v816
        %v819 = vtanh.pop %v818
        %821 = vrot.lane.b32.xlu0 %v819, 32
        %v822 = vpop.permute.xlu0 %821
        %v824 = vmul.f32 %v806, %v822
        %826 = vrot.lane.b32.xlu0 %v824, 64
        %v827 = vpop.permute.xlu0 %826
        %829 = vst.msk [vmem:[#allocation2 + $0x10] sm:$0xff] %vm473, %v827
        %830 = vst.msk [vmem:[#allocation2 + $0x28] sm:$0xff] %vm673, %v827
        %v831 = vpack.c.bf16 %v824, %v824
        %833 = vrot.lane.b32.xlu0 %v831, 64
        %v834 = vpop.permute.xlu0 %833
        %v836 = vsel %vm595, %v834, 0
        %838 = vmatprep.subr.bf16.mxu0 0
        %839 = vmatpush1.bf16.msra.mxu0 %v591
        %840 = vmatprep.subr.bf16.mxu0 0
        %841 = vmatpush1.bf16.msra.mxu0 %v592
        %842 = vmatprep.subr.bf16.mxu0 0
        %843 = vmatpush1.bf16.msra.mxu0 0
        %844 = vmatprep.subr.bf16.mxu0 0
        %845 = vmatpush1.bf16.msra.mxu0 0
        %846 = vmatprep.subr.bf16.mxu0 0
        %847 = vmatpush1.bf16.msra.mxu0 0
        %848 = vmatprep.subr.bf16.mxu0 0
        %849 = vmatpush1.bf16.msra.mxu0 0
        %850 = vmatprep.subr.bf16.mxu0 0
        %851 = vmatpush1.bf16.msra.mxu0 0
        %852 = vmatprep.subr.bf16.mxu0 0
        %853 = vmatpush1.bf16.msra.mxu0 0
        %854 = vmatprep.subr.bf16.mxu0 0
        %855 = vmatpush1.bf16.msra.mxu0 0
        %856 = vmatprep.subr.bf16.mxu0 0
        %857 = vmatpush1.bf16.msra.mxu0 0
        %858 = vmatprep.subr.bf16.mxu0 0
        %859 = vmatpush1.bf16.msra.mxu0 0
        %860 = vmatprep.subr.bf16.mxu0 0
        %861 = vmatpush1.bf16.msra.mxu0 0
        %862 = vmatprep.subr.bf16.mxu0 0
        %863 = vmatpush1.bf16.msra.mxu0 0
        %864 = vmatprep.subr.bf16.mxu0 0
        %865 = vmatpush1.bf16.msra.mxu0 0
        %866 = vmatprep.subr.bf16.mxu0 0
        %867 = vmatpush1.bf16.msra.mxu0 0
        %868 = vmatprep.subr.bf16.mxu0 0
        %869 = vmatpush1.bf16.msra.mxu0 0
        %870 = vmatprep.mubr.bf16.mxu0 0
        %871 = vmatmul.mubr.bf16.gmra.mrb[0].mxu0 %v836
        %v872 = vpop.f32.mrb[0].mxu0
        %v873 = vadd.f32 0.0, %v872
        %v874 = vpop.f32.mrb[0].mxu0
        %v875 = vpop.f32.mrb[0].mxu0
        %v876 = vpop.f32.mrb[0].mxu0
        %877 = vdwg.mxu0
        %v878 = vadd.f32 %v571, %v873
        %v879 = vxor.u32 %v878, 2147483648
        %v880 = vmul.f32 %v879, 1.442695
        %v881 = vpow.pop %v880
        %v882 = vadd.f32 %v881, 1.0
        %v883 = vrcp.pop %v882
        %v884 = vmul.f32 1.0, %v883
        %v885 = vtanh.pop %v878
        %v886 = vmul.f32 %v884, %v818
        %888 = vrot.lane.b32.xlu0 %v885, 32
        %v889 = vpop.permute.xlu0 %888
        %v891 = vmul.f32 %v884, %v889
        %893 = vrot.lane.b32.xlu0 %v891, 32
        %v894 = vpop.permute.xlu0 %893
        %v896 = vadd.f32 %v886, %v894
        %v897 = vtanh.pop %v896
        %899 = vrot.lane.b32.xlu0 %v897, 32
        %v900 = vpop.permute.xlu0 %899
        %v902 = vmul.f32 %v884, %v900
        %904 = vrot.lane.b32.xlu0 %v902, 64
        %v905 = vpop.permute.xlu0 %904
        %907 = vst.msk [vmem:[#allocation2 + $0x18] sm:$0xff] %vm473, %v905
        %908 = vst.msk [vmem:[#allocation2 + $0x20] sm:$0xff] %vm673, %v905
        %v909 = vpack.c.bf16 %v902, %v902
        %911 = vrot.lane.b32.xlu0 %v909, 64
        %v912 = vpop.permute.xlu0 %911
        %v914 = vsel %vm595, %v912, 0
        %916 = vmatprep.subr.bf16.mxu0 0
        %917 = vmatpush1.bf16.msra.mxu0 %v591
        %918 = vmatprep.subr.bf16.mxu0 0
        %919 = vmatpush1.bf16.msra.mxu0 %v592
        %920 = vmatprep.subr.bf16.mxu0 0
        %921 = vmatpush1.bf16.msra.mxu0 0
        %922 = vmatprep.subr.bf16.mxu0 0
        %923 = vmatpush1.bf16.msra.mxu0 0
        %924 = vmatprep.subr.bf16.mxu0 0
        %925 = vmatpush1.bf16.msra.mxu0 0
        %926 = vmatprep.subr.bf16.mxu0 0
        %927 = vmatpush1.bf16.msra.mxu0 0
        %928 = vmatprep.subr.bf16.mxu0 0
        %929 = vmatpush1.bf16.msra.mxu0 0
        %930 = vmatprep.subr.bf16.mxu0 0
        %931 = vmatpush1.bf16.msra.mxu0 0
        %932 = vmatprep.subr.bf16.mxu0 0
        %933 = vmatpush1.bf16.msra.mxu0 0
        %934 = vmatprep.subr.bf16.mxu0 0
        %935 = vmatpush1.bf16.msra.mxu0 0
        %936 = vmatprep.subr.bf16.mxu0 0
        %937 = vmatpush1.bf16.msra.mxu0 0
        %938 = vmatprep.subr.bf16.mxu0 0
        %939 = vmatpush1.bf16.msra.mxu0 0
        %940 = vmatprep.subr.bf16.mxu0 0
        %941 = vmatpush1.bf16.msra.mxu0 0
        %942 = vmatprep.subr.bf16.mxu0 0
        %943 = vmatpush1.bf16.msra.mxu0 0
        %944 = vmatprep.subr.bf16.mxu0 0
        %945 = vmatpush1.bf16.msra.mxu0 0
        %946 = vmatprep.subr.bf16.mxu0 0
        %947 = vmatpush1.bf16.msra.mxu0 0
        %948 = vmatprep.mubr.bf16.mxu0 0
        %949 = vmatmul.mubr.bf16.gmra.mrb[0].mxu0 %v914
        %v950 = vpop.f32.mrb[0].mxu0
        %v951 = vadd.f32 0.0, %v950
        %v952 = vpop.f32.mrb[0].mxu0
        %v953 = vpop.f32.mrb[0].mxu0
        %v954 = vpop.f32.mrb[0].mxu0
        %955 = vdwg.mxu0
        %v956 = vadd.f32 %v572, %v951
        %v957 = vxor.u32 %v956, 2147483648
        %v958 = vmul.f32 %v957, 1.442695
        %v959 = vpow.pop %v958
        %v960 = vadd.f32 %v959, 1.0
        %v961 = vrcp.pop %v960
        %v962 = vmul.f32 1.0, %v961
        %v963 = vtanh.pop %v956
        %v964 = vmul.f32 %v962, %v896
        %966 = vrot.lane.b32.xlu0 %v963, 32
        %v967 = vpop.permute.xlu0 %966
        %v969 = vmul.f32 %v962, %v967
        %971 = vrot.lane.b32.xlu0 %v969, 32
        %v972 = vpop.permute.xlu0 %971
        %v974 = vadd.f32 %v964, %v972
        %v975 = vtanh.pop %v974
        %977 = vrot.lane.b32.xlu0 %v975, 32
        %v978 = vpop.permute.xlu0 %977
        %v980 = vmul.f32 %v962, %v978
        %982 = vrot.lane.b32.xlu0 %v980, 64
        %v983 = vpop.permute.xlu0 %982
        %985 = vst.msk [vmem:[#allocation2 + $0x20] sm:$0xff] %vm473, %v983
        %986 = vst.msk [vmem:[#allocation2 + $0x18] sm:$0xff] %vm673, %v983
        %v987 = vpack.c.bf16 %v980, %v980
        %989 = vrot.lane.b32.xlu0 %v987, 64
        %v990 = vpop.permute.xlu0 %989
        %v992 = vsel %vm595, %v990, 0
        %994 = vmatprep.subr.bf16.mxu0 0
        %995 = vmatpush1.bf16.msra.mxu0 %v591
        %996 = vmatprep.subr.bf16.mxu0 0
        %997 = vmatpush1.bf16.msra.mxu0 %v592
        %998 = vmatprep.subr.bf16.mxu0 0
        %999 = vmatpush1.bf16.msra.mxu0 0
        %1000 = vmatprep.subr.bf16.mxu0 0
        %1001 = vmatpush1.bf16.msra.mxu0 0
        %1002 = vmatprep.subr.bf16.mxu0 0
        %1003 = vmatpush1.bf16.msra.mxu0 0
        %1004 = vmatprep.subr.bf16.mxu0 0
        %1005 = vmatpush1.bf16.msra.mxu0 0
        %1006 = vmatprep.subr.bf16.mxu0 0
        %1007 = vmatpush1.bf16.msra.mxu0 0
        %1008 = vmatprep.subr.bf16.mxu0 0
        %1009 = vmatpush1.bf16.msra.mxu0 0
        %1010 = vmatprep.subr.bf16.mxu0 0
        %1011 = vmatpush1.bf16.msra.mxu0 0
        %1012 = vmatprep.subr.bf16.mxu0 0
        %1013 = vmatpush1.bf16.msra.mxu0 0
        %1014 = vmatprep.subr.bf16.mxu0 0
        %1015 = vmatpush1.bf16.msra.mxu0 0
        %1016 = vmatprep.subr.bf16.mxu0 0
        %1017 = vmatpush1.bf16.msra.mxu0 0
        %1018 = vmatprep.subr.bf16.mxu0 0
        %1019 = vmatpush1.bf16.msra.mxu0 0
        %1020 = vmatprep.subr.bf16.mxu0 0
        %1021 = vmatpush1.bf16.msra.mxu0 0
        %1022 = vmatprep.subr.bf16.mxu0 0
        %1023 = vmatpush1.bf16.msra.mxu0 0
        %1024 = vmatprep.subr.bf16.mxu0 0
        %1025 = vmatpush1.bf16.msra.mxu0 0
        %1026 = vmatprep.mubr.bf16.mxu0 0
        %1027 = vmatmul.mubr.bf16.gmra.mrb[0].mxu0 %v992
        %v1028 = vpop.f32.mrb[0].mxu0
        %v1029 = vadd.f32 0.0, %v1028
        %v1030 = vpop.f32.mrb[0].mxu0
        %v1031 = vpop.f32.mrb[0].mxu0
        %v1032 = vpop.f32.mrb[0].mxu0
        %1033 = vdwg.mxu0
        %v1034 = vadd.f32 %v573, %v1029
        %v1035 = vxor.u32 %v1034, 2147483648
        %v1036 = vmul.f32 %v1035, 1.442695
        %v1037 = vpow.pop %v1036
        %v1038 = vadd.f32 %v1037, 1.0
        %v1039 = vrcp.pop %v1038
        %v1040 = vmul.f32 1.0, %v1039
        %v1041 = vtanh.pop %v1034
        %v1042 = vmul.f32 %v1040, %v974
        %1044 = vrot.lane.b32.xlu0 %v1041, 32
        %v1045 = vpop.permute.xlu0 %1044
        %v1047 = vmul.f32 %v1040, %v1045
        %1049 = vrot.lane.b32.xlu0 %v1047, 32
        %v1050 = vpop.permute.xlu0 %1049
        %v1052 = vadd.f32 %v1042, %v1050
        %v1053 = vtanh.pop %v1052
        %1055 = vrot.lane.b32.xlu0 %v1053, 32
        %v1056 = vpop.permute.xlu0 %1055
        %v1058 = vmul.f32 %v1040, %v1056
        %1060 = vrot.lane.b32.xlu0 %v1058, 64
        %v1061 = vpop.permute.xlu0 %1060
        %1063 = vst.msk [vmem:[#allocation2 + $0x28] sm:$0xff] %vm473, %v1061
        %1064 = vst.msk [vmem:[#allocation2 + $0x10] sm:$0xff] %vm673, %v1061
        %v1065 = vpack.c.bf16 %v1058, %v1058
        %1067 = vrot.lane.b32.xlu0 %v1065, 64
        %v1068 = vpop.permute.xlu0 %1067
        %v1070 = vsel %vm595, %v1068, 0
        %1072 = vmatprep.subr.bf16.mxu0 0
        %1073 = vmatpush1.bf16.msra.mxu0 %v591
        %1074 = vmatprep.subr.bf16.mxu0 0
        %1075 = vmatpush1.bf16.msra.mxu0 %v592
        %1076 = vmatprep.subr.bf16.mxu0 0
        %1077 = vmatpush1.bf16.msra.mxu0 0
        %1078 = vmatprep.subr.bf16.mxu0 0
        %1079 = vmatpush1.bf16.msra.mxu0 0
        %1080 = vmatprep.subr.bf16.mxu0 0
        %1081 = vmatpush1.bf16.msra.mxu0 0
        %1082 = vmatprep.subr.bf16.mxu0 0
        %1083 = vmatpush1.bf16.msra.mxu0 0
        %1084 = vmatprep.subr.bf16.mxu0 0
        %1085 = vmatpush1.bf16.msra.mxu0 0
        %1086 = vmatprep.subr.bf16.mxu0 0
        %1087 = vmatpush1.bf16.msra.mxu0 0
        %1088 = vmatprep.subr.bf16.mxu0 0
        %1089 = vmatpush1.bf16.msra.mxu0 0
        %1090 = vmatprep.subr.bf16.mxu0 0
        %1091 = vmatpush1.bf16.msra.mxu0 0
        %1092 = vmatprep.subr.bf16.mxu0 0
        %1093 = vmatpush1.bf16.msra.mxu0 0
        %1094 = vmatprep.subr.bf16.mxu0 0
        %1095 = vmatpush1.bf16.msra.mxu0 0
        %1096 = vmatprep.subr.bf16.mxu0 0
        %1097 = vmatpush1.bf16.msra.mxu0 0
        %1098 = vmatprep.subr.bf16.mxu0 0
        %1099 = vmatpush1.bf16.msra.mxu0 0
        %1100 = vmatprep.subr.bf16.mxu0 0
        %1101 = vmatpush1.bf16.msra.mxu0 0
        %1102 = vmatprep.subr.bf16.mxu0 0
        %1103 = vmatpush1.bf16.msra.mxu0 0
        %1104 = vmatprep.mubr.bf16.mxu0 0
        %1105 = vmatmul.mubr.bf16.gmra.mrb[0].mxu0 %v1070
        %v1106 = vpop.f32.mrb[0].mxu0
        %v1107 = vadd.f32 0.0, %v1106
        %v1108 = vpop.f32.mrb[0].mxu0
        %v1109 = vpop.f32.mrb[0].mxu0
        %v1110 = vpop.f32.mrb[0].mxu0
        %1111 = vdwg.mxu0
        %v1112 = vadd.f32 %v574, %v1107
        %v1113 = vxor.u32 %v1112, 2147483648
        %v1114 = vmul.f32 %v1113, 1.442695
        %v1115 = vpow.pop %v1114
        %v1116 = vadd.f32 %v1115, 1.0
        %v1117 = vrcp.pop %v1116
        %v1118 = vmul.f32 1.0, %v1117
        %v1119 = vtanh.pop %v1112
        %v1120 = vmul.f32 %v1118, %v1052
        %1122 = vrot.lane.b32.xlu0 %v1119, 32
        %v1123 = vpop.permute.xlu0 %1122
        %v1125 = vmul.f32 %v1118, %v1123
        %1127 = vrot.lane.b32.xlu0 %v1125, 32
        %v1128 = vpop.permute.xlu0 %1127
        %v1130 = vadd.f32 %v1120, %v1128
        %v1131 = vtanh.pop %v1130
        %1133 = vrot.lane.b32.xlu0 %v1131, 32
        %v1134 = vpop.permute.xlu0 %1133
        %v1136 = vmul.f32 %v1118, %v1134
        %1138 = vrot.lane.b32.xlu0 %v1136, 64
        %v1139 = vpop.permute.xlu0 %1138
        %1141 = vst.msk [vmem:[#allocation2 + $0x30] sm:$0xff] %vm473, %v1139
        %1142 = vst.msk [vmem:[#allocation2 + $0x8] sm:$0xff] %vm673, %v1139
        %v1143 = vpack.c.bf16 %v1136, %v1136
        %1145 = vrot.lane.b32.xlu0 %v1143, 64
        %v1146 = vpop.permute.xlu0 %1145
        %v1148 = vsel %vm595, %v1146, 0
        %1150 = vmatprep.subr.bf16.mxu0 0
        %1151 = vmatpush1.bf16.msra.mxu0 %v591
        %1152 = vmatprep.subr.bf16.mxu0 0
        %1153 = vmatpush1.bf16.msra.mxu0 %v592
        %1154 = vmatprep.subr.bf16.mxu0 0
        %1155 = vmatpush1.bf16.msra.mxu0 0
        %1156 = vmatprep.subr.bf16.mxu0 0
        %1157 = vmatpush1.bf16.msra.mxu0 0
        %1158 = vmatprep.subr.bf16.mxu0 0
        %1159 = vmatpush1.bf16.msra.mxu0 0
        %1160 = vmatprep.subr.bf16.mxu0 0
        %1161 = vmatpush1.bf16.msra.mxu0 0
        %1162 = vmatprep.subr.bf16.mxu0 0
        %1163 = vmatpush1.bf16.msra.mxu0 0
        %1164 = vmatprep.subr.bf16.mxu0 0
        %1165 = vmatpush1.bf16.msra.mxu0 0
        %1166 = vmatprep.subr.bf16.mxu0 0
        %1167 = vmatpush1.bf16.msra.mxu0 0
        %1168 = vmatprep.subr.bf16.mxu0 0
        %1169 = vmatpush1.bf16.msra.mxu0 0
        %1170 = vmatprep.subr.bf16.mxu0 0
        %1171 = vmatpush1.bf16.msra.mxu0 0
        %1172 = vmatprep.subr.bf16.mxu0 0
        %1173 = vmatpush1.bf16.msra.mxu0 0
        %1174 = vmatprep.subr.bf16.mxu0 0
        %1175 = vmatpush1.bf16.msra.mxu0 0
        %1176 = vmatprep.subr.bf16.mxu0 0
        %1177 = vmatpush1.bf16.msra.mxu0 0
        %1178 = vmatprep.subr.bf16.mxu0 0
        %1179 = vmatpush1.bf16.msra.mxu0 0
        %1180 = vmatprep.subr.bf16.mxu0 0
        %1181 = vmatpush1.bf16.msra.mxu0 0
        %1182 = vmatprep.mubr.bf16.mxu0 0
        %1183 = vmatmul.mubr.bf16.gmra.mrb[0].mxu0 %v1148
        %v1184 = vpop.f32.mrb[0].mxu0
        %v1185 = vadd.f32 0.0, %v1184
        %v1186 = vpop.f32.mrb[0].mxu0
        %v1187 = vpop.f32.mrb[0].mxu0
        %v1188 = vpop.f32.mrb[0].mxu0
        %1189 = vdwg.mxu0
        %v1190 = vadd.f32 %v575, %v1185
        %v1191 = vxor.u32 %v1190, 2147483648
        %v1192 = vmul.f32 %v1191, 1.442695
        %v1193 = vpow.pop %v1192
        %v1194 = vadd.f32 %v1193, 1.0
        %v1195 = vrcp.pop %v1194
        %v1196 = vmul.f32 1.0, %v1195
        %v1197 = vtanh.pop %v1190
        %v1198 = vmul.f32 %v1196, %v1130
        %1200 = vrot.lane.b32.xlu0 %v1197, 32
        %v1201 = vpop.permute.xlu0 %1200
        %v1203 = vmul.f32 %v1196, %v1201
        %1205 = vrot.lane.b32.xlu0 %v1203, 32
        %v1206 = vpop.permute.xlu0 %1205
        %v1208 = vadd.f32 %v1198, %v1206
        %v1209 = vtanh.pop %v1208
        %1211 = vrot.lane.b32.xlu0 %v1209, 32
        %v1212 = vpop.permute.xlu0 %1211
        %v1214 = vmul.f32 %v1196, %v1212
        %1216 = vrot.lane.b32.xlu0 %v1214, 64
        %v1217 = vpop.permute.xlu0 %1216
        %1219 = vst.msk [vmem:[#allocation2 + $0x38] sm:$0xff] %vm473, %v1217
        %1220 = vst.msk [vmem:[#allocation2] sm:$0xff] %vm673, %v1217
        %v1221 = vld [vmem:[#allocation2] sm:$0xff]
        %v1222 = vld [vmem:[#allocation2 + $0x8] sm:$0xff]
        %v1223 = vld [vmem:[#allocation2 + $0x10] sm:$0xff]
        %v1224 = vld [vmem:[#allocation2 + $0x18] sm:$0xff]
        %v1225 = vld [vmem:[#allocation2 + $0x20] sm:$0xff]
        %v1226 = vld [vmem:[#allocation2 + $0x28] sm:$0xff]
        %v1227 = vld [vmem:[#allocation2 + $0x30] sm:$0xff]
        %v1228 = vld [vmem:[#allocation2 + $0x38] sm:$0xff]
        %v1229 = vpack.c.bf16 %v1222, %v1221
        %v1230 = vpack.c.bf16 %v1224, %v1223
        %v1231 = vpack.c.bf16 %v1226, %v1225
        %v1232 = vpack.c.bf16 %v1228, %v1227
        %v1233 = vld [vmem:[%s6] sm:$0xf]
        %v1234 = vld [vmem:[%s6 + $0x4] sm:$0xf]
        %v1235 = vld [vmem:[%s6 + $0x8] sm:$0xf]
        %v1236 = vld [vmem:[%s6 + $0xc] sm:$0xf]
        %v1237 = vld [vmem:[%s7] sm:$0x1]
        %v1239 = vlaneseq
        %v1240 = vshrl.u32 %v1239, 7
        %v1241 = vsub.s32 0, %v1240
        %v1242 = vrot.slane %v1237, %v1241
        %v1248 = vunpack.c.l.b16 %v1233
        %v1249 = vunpack.c.l.b16 %v1234
        %v1250 = vunpack.c.l.b16 %v1235
        %v1251 = vunpack.c.l.b16 %v1236
        %v1252 = vpack.c.b16 %v1249, %v1248
        %v1253 = vpack.c.b16 %v1251, %v1250
        %v1257 = vsel %vm595, %v1229, 0
        %v1260 = vsel %vm595, %v1230, 0
        %v1263 = vsel %vm595, %v1231, 0
        %v1266 = vsel %vm595, %v1232, 0
        %1268 = vmatprep.subr.bf16.mxu0 0
        %1269 = vmatpush1.bf16.msra.mxu0 %v1252
        %1270 = vmatprep.subr.bf16.mxu0 0
        %1271 = vmatpush1.bf16.msra.mxu0 %v1253
        %1272 = vmatprep.subr.bf16.mxu0 0
        %1273 = vmatpush1.bf16.msra.mxu0 0
        %1274 = vmatprep.subr.bf16.mxu0 0
        %1275 = vmatpush1.bf16.msra.mxu0 0
        %1276 = vmatprep.subr.bf16.mxu0 0
        %1277 = vmatpush1.bf16.msra.mxu0 0
        %1278 = vmatprep.subr.bf16.mxu0 0
        %1279 = vmatpush1.bf16.msra.mxu0 0
        %1280 = vmatprep.subr.bf16.mxu0 0
        %1281 = vmatpush1.bf16.msra.mxu0 0
        %1282 = vmatprep.subr.bf16.mxu0 0
        %1283 = vmatpush1.bf16.msra.mxu0 0
        %1284 = vmatprep.subr.bf16.mxu0 0
        %1285 = vmatpush1.bf16.msra.mxu0 0
        %1286 = vmatprep.subr.bf16.mxu0 0
        %1287 = vmatpush1.bf16.msra.mxu0 0
        %1288 = vmatprep.subr.bf16.mxu0 0
        %1289 = vmatpush1.bf16.msra.mxu0 0
        %1290 = vmatprep.subr.bf16.mxu0 0
        %1291 = vmatpush1.bf16.msra.mxu0 0
        %1292 = vmatprep.subr.bf16.mxu0 0
        %1293 = vmatpush1.bf16.msra.mxu0 0
        %1294 = vmatprep.subr.bf16.mxu0 0
        %1295 = vmatpush1.bf16.msra.mxu0 0
        %1296 = vmatprep.subr.bf16.mxu0 0
        %1297 = vmatpush1.bf16.msra.mxu0 0
        %1298 = vmatprep.subr.bf16.mxu0 0
        %1299 = vmatpush1.bf16.msra.mxu0 0
        %1300 = vmatprep.mubr.bf16.mxu0 0
        %1301 = vmatmul.mubr.bf16.gmra.mrb[0].mxu0 %v1257
        %v1302 = vpop.f32.mrb[0].mxu0
        %v1303 = vadd.f32 %v1242, %v1302
        %v1304 = vpop.f32.mrb[0].mxu0
        %v1305 = vpop.f32.mrb[0].mxu0
        %v1306 = vadd.f32 %v1242, %v1305
        %v1307 = vpop.f32.mrb[0].mxu0
        %1308 = vmatprep.mubr.bf16.mxu0 0
        %1309 = vmatmul.mubr.bf16.gmra.mrb[0].mxu0 %v1260
        %v1310 = vpop.f32.mrb[0].mxu0
        %v1311 = vadd.f32 %v1242, %v1310
        %v1312 = vpop.f32.mrb[0].mxu0
        %v1313 = vpop.f32.mrb[0].mxu0
        %v1314 = vadd.f32 %v1242, %v1313
        %v1315 = vpop.f32.mrb[0].mxu0
        %1316 = vmatprep.mubr.bf16.mxu0 0
        %1317 = vmatmul.mubr.bf16.gmra.mrb[0].mxu0 %v1263
        %v1318 = vpop.f32.mrb[0].mxu0
        %v1319 = vadd.f32 %v1242, %v1318
        %v1320 = vpop.f32.mrb[0].mxu0
        %v1321 = vpop.f32.mrb[0].mxu0
        %v1322 = vadd.f32 %v1242, %v1321
        %v1323 = vpop.f32.mrb[0].mxu0
        %1324 = vmatprep.mubr.bf16.mxu0 0
        %1325 = vmatmul.mubr.bf16.gmra.mrb[0].mxu0 %v1266
        %v1326 = vpop.f32.mrb[0].mxu0
        %v1327 = vadd.f32 %v1242, %v1326
        %v1328 = vpop.f32.mrb[0].mxu0
        %v1329 = vpop.f32.mrb[0].mxu0
        %v1330 = vadd.f32 %v1242, %v1329
        %v1331 = vpop.f32.mrb[0].mxu0
        %1332 = vdwg.mxu0
        %vm1333 = vcmask 39936
        %1334 = vst.msk [vmem:[%s439] sm:$0xff] %vm1333, %v1303
        %1335 = vst.msk [vmem:[%s439 + $0x8] sm:$0xff] %vm1333, %v1306
        %1336 = vst.msk [vmem:[%s439 + $0x10] sm:$0xff] %vm1333, %v1311
        %1337 = vst.msk [vmem:[%s439 + $0x18] sm:$0xff] %vm1333, %v1314
        %1338 = vst.msk [vmem:[%s439 + $0x20] sm:$0xff] %vm1333, %v1319
        %1339 = vst.msk [vmem:[%s439 + $0x28] sm:$0xff] %vm1333, %v1322
        %1340 = vst.msk [vmem:[%s439 + $0x30] sm:$0xff] %vm1333, %v1327
        %1341 = vst.msk [vmem:[%s439 + $0x38] sm:$0xff] %vm1333, %v1330
        %v1342 = vld [vmem:[%s8] sm:$0x1f]
        %vm1343 = vcmp.eq.s32.totalorder %v552, 3
        %v1344 = vsel %vm1343, 0.0, -10000.0
        %v1345 = vlaneseq
        %v1346 = vshrl.u32 %v1345, 7
        %v1347 = vsub.s32 0, %v1346
        %v1348 = vrot.slane %v1342, %v1347
        %v1349 = vadd.f32 %v1344, %v1348
        %v1350 = vsel %vm1333, %v1349, -inf
        %1351 = vmax.xlane.f32.xlu0 %v1350
        %v1352 = vpop.xlane.xlu0 %1351
        %vm1353 = vcmp.eq.f32.partialorder %v1349, %v1352
        %v1354 = vsel %vm1353, %v552, 5
        %v1355 = vsel %vm1333, %v1354, 2147483647
        %v1356 = vand.u32 %v1355, 65535
        %v1357 = vshra.s32 %v1355, 16
        %v1358 = vcvt.s32.f32 %v1356
        %v1359 = vcvt.s32.f32 %v1357
        %1360 = vmin.xlane.f32.xlu0 %v1359
        %v1361 = vpop.xlane.xlu0 %1360
        %vm1362 = vcmp.eq.f32.partialorder %v1359, %v1361
        %v1363 = vsel %vm1362, %v1358, inf
        %1364 = vmin.xlane.f32.xlu0 %v1363
        %v1365 = vpop.xlane.xlu0 %1364
        %v1366 = vcvt.f32.s32 %v1365
        %v1367 = vcvt.f32.s32 %v1361
        %v1368 = vshll.u32 %v1367, 16
        %v1369 = vadd.s32 %v1368, %v1366
        %vm1370 = vcmp.eq.s32.totalorder %v552, 0
        %v1371 = vsel %vm1370, %v1352, 0.0
        %v1372 = vsel %vm1370, %v1369, 0
        %v1373 = vlaneseq
        %v1374 = vshrl.u32 %v1373, 7
        %v1375 = vsub.s32 1, %v1374
        %v1376 = vrot.slane %v1342, %v1375
        %v1377 = vadd.f32 %v1344, %v1376
        %v1378 = vsel %vm1333, %v1377, -inf
        %1379 = vmax.xlane.f32.xlu0 %v1378
        %v1380 = vpop.xlane.xlu0 %1379
        %vm1381 = vcmp.eq.f32.partialorder %v1377, %v1380
        %v1382 = vsel %vm1381, %v552, 5
        %v1383 = vsel %vm1333, %v1382, 2147483647
        %v1384 = vand.u32 %v1383, 65535
        %v1385 = vshra.s32 %v1383, 16
        %v1386 = vcvt.s32.f32 %v1384
        %v1387 = vcvt.s32.f32 %v1385
        %1388 = vmin.xlane.f32.xlu0 %v1387
        %v1389 = vpop.xlane.xlu0 %1388
        %vm1390 = vcmp.eq.f32.partialorder %v1387, %v1389
        %v1391 = vsel %vm1390, %v1386, inf
        %1392 = vmin.xlane.f32.xlu0 %v1391
        %v1393 = vpop.xlane.xlu0 %1392
        %v1394 = vcvt.f32.s32 %v1393
        %v1395 = vcvt.f32.s32 %v1389
        %v1396 = vshll.u32 %v1395, 16
        %v1397 = vadd.s32 %v1396, %v1394
        %vm1398 = vcmp.eq.s32.totalorder %v552, 1
        %v1399 = vsel %vm1398, %v1380, %v1371
        %v1400 = vsel %vm1398, %v1397, %v1372
        %v1401 = vlaneseq
        %v1402 = vshrl.u32 %v1401, 7
        %v1403 = vsub.s32 2, %v1402
        %v1404 = vrot.slane %v1342, %v1403
        %v1405 = vadd.f32 %v1344, %v1404
        %v1406 = vsel %vm1333, %v1405, -inf
        %1407 = vmax.xlane.f32.xlu0 %v1406
        %v1408 = vpop.xlane.xlu0 %1407
        %vm1409 = vcmp.eq.f32.partialorder %v1405, %v1408
        %v1410 = vsel %vm1409, %v552, 5
        %v1411 = vsel %vm1333, %v1410, 2147483647
        %v1412 = vand.u32 %v1411, 65535
        %v1413 = vshra.s32 %v1411, 16
        %v1414 = vcvt.s32.f32 %v1412
        %v1415 = vcvt.s32.f32 %v1413
        %1416 = vmin.xlane.f32.xlu0 %v1415
        %v1417 = vpop.xlane.xlu0 %1416
        %vm1418 = vcmp.eq.f32.partialorder %v1415, %v1417
        %v1419 = vsel %vm1418, %v1414, inf
        %1420 = vmin.xlane.f32.xlu0 %v1419
        %v1421 = vpop.xlane.xlu0 %1420
        %v1422 = vcvt.f32.s32 %v1421
        %v1423 = vcvt.f32.s32 %v1417
        %v1424 = vshll.u32 %v1423, 16
        %v1425 = vadd.s32 %v1424, %v1422
        %vm1426 = vcmp.eq.s32.totalorder %v552, 2
        %v1427 = vsel %vm1426, %v1408, %v1399
        %v1428 = vsel %vm1426, %v1425, %v1400
        %v1429 = vlaneseq
        %v1430 = vshrl.u32 %v1429, 7
        %v1431 = vsub.s32 3, %v1430
        %v1432 = vrot.slane %v1342, %v1431
        %v1433 = vadd.f32 %v1344, %v1432
        %v1434 = vsel %vm1333, %v1433, -inf
        %1435 = vmax.xlane.f32.xlu0 %v1434
        %v1436 = vpop.xlane.xlu0 %1435
        %vm1437 = vcmp.eq.f32.partialorder %v1433, %v1436
        %v1438 = vsel %vm1437, %v552, 5
        %v1439 = vsel %vm1333, %v1438, 2147483647
        %v1440 = vand.u32 %v1439, 65535
        %v1441 = vshra.s32 %v1439, 16
        %v1442 = vcvt.s32.f32 %v1440
        %v1443 = vcvt.s32.f32 %v1441
        %1444 = vmin.xlane.f32.xlu0 %v1443
        %v1445 = vpop.xlane.xlu0 %1444
        %vm1446 = vcmp.eq.f32.partialorder %v1443, %v1445
        %v1447 = vsel %vm1446, %v1442, inf
        %1448 = vmin.xlane.f32.xlu0 %v1447
        %v1449 = vpop.xlane.xlu0 %1448
        %v1450 = vcvt.f32.s32 %v1449
        %v1451 = vcvt.f32.s32 %v1445
        %v1452 = vshll.u32 %v1451, 16
        %v1453 = vadd.s32 %v1452, %v1450
        %v1454 = vsel %vm1343, %v1436, %v1427
        %v1455 = vsel %vm1343, %v1453, %v1428
        %v1456 = vlaneseq
        %v1457 = vshrl.u32 %v1456, 7
        %v1458 = vsub.s32 4, %v1457
        %v1459 = vrot.slane %v1342, %v1458
        %v1460 = vadd.f32 %v1344, %v1459
        %v1461 = vsel %vm1333, %v1460, -inf
        %1462 = vmax.xlane.f32.xlu0 %v1461
        %v1463 = vpop.xlane.xlu0 %1462
        %vm1464 = vcmp.eq.f32.partialorder %v1460, %v1463
        %v1465 = vsel %vm1464, %v552, 5
        %v1466 = vsel %vm1333, %v1465, 2147483647
        %v1467 = vand.u32 %v1466, 65535
        %v1468 = vshra.s32 %v1466, 16
        %v1469 = vcvt.s32.f32 %v1467
        %v1470 = vcvt.s32.f32 %v1468
        %1471 = vmin.xlane.f32.xlu0 %v1470
        %v1472 = vpop.xlane.xlu0 %1471
        %vm1473 = vcmp.eq.f32.partialorder %v1470, %v1472
        %v1474 = vsel %vm1473, %v1469, inf
        %1475 = vmin.xlane.f32.xlu0 %v1474
        %v1476 = vpop.xlane.xlu0 %1475
        %v1477 = vcvt.f32.s32 %v1476
        %v1478 = vcvt.f32.s32 %v1472
        %v1479 = vshll.u32 %v1478, 16
        %v1480 = vadd.s32 %v1479, %v1477
        %vm1481 = vcmp.eq.s32.totalorder %v552, 4
        %v1482 = vsel %vm1481, %v1463, %v1454
        %v1483 = vsel %vm1481, %v1480, %v1455
        %v1484 = vadd.f32 %v1482, %v1303
        %v1485 = vadd.f32 %v1484, %v1348
        %v1486 = vsel %vm1333, %v1485, -inf
        %1487 = vmax.xlane.f32.xlu0 %v1486
        %v1488 = vpop.xlane.xlu0 %1487
        %vm1489 = vcmp.eq.f32.partialorder %v1485, %v1488
        %v1490 = vsel %vm1489, %v552, 5
        %v1491 = vsel %vm1333, %v1490, 2147483647
        %v1492 = vand.u32 %v1491, 65535
        %v1493 = vshra.s32 %v1491, 16
        %v1494 = vcvt.s32.f32 %v1492
        %v1495 = vcvt.s32.f32 %v1493
        %1496 = vmin.xlane.f32.xlu0 %v1495
        %v1497 = vpop.xlane.xlu0 %1496
        %vm1498 = vcmp.eq.f32.partialorder %v1495, %v1497
        %v1499 = vsel %vm1498, %v1494, inf
        %1500 = vmin.xlane.f32.xlu0 %v1499
        %v1501 = vpop.xlane.xlu0 %1500
        %v1502 = vcvt.f32.s32 %v1501
        %v1503 = vcvt.f32.s32 %v1497
        %v1504 = vshll.u32 %v1503, 16
        %v1505 = vadd.s32 %v1504, %v1502
        %v1506 = vsel %vm1370, %v1488, 0.0
        %v1507 = vsel %vm1370, %v1505, 0
        %v1508 = vadd.f32 %v1484, %v1376
        %v1509 = vsel %vm1333, %v1508, -inf
        %1510 = vmax.xlane.f32.xlu0 %v1509
        %v1511 = vpop.xlane.xlu0 %1510
        %vm1512 = vcmp.eq.f32.partialorder %v1508, %v1511
        %v1513 = vsel %vm1512, %v552, 5
        %v1514 = vsel %vm1333, %v1513, 2147483647
        %v1515 = vand.u32 %v1514, 65535
        %v1516 = vshra.s32 %v1514, 16
        %v1517 = vcvt.s32.f32 %v1515
        %v1518 = vcvt.s32.f32 %v1516
        %1519 = vmin.xlane.f32.xlu0 %v1518
        %v1520 = vpop.xlane.xlu0 %1519
        %vm1521 = vcmp.eq.f32.partialorder %v1518, %v1520
        %v1522 = vsel %vm1521, %v1517, inf
        %1523 = vmin.xlane.f32.xlu0 %v1522
        %v1524 = vpop.xlane.xlu0 %1523
        %v1525 = vcvt.f32.s32 %v1524
        %v1526 = vcvt.f32.s32 %v1520
        %v1527 = vshll.u32 %v1526, 16
        %v1528 = vadd.s32 %v1527, %v1525
        %v1529 = vsel %vm1398, %v1511, %v1506
        %v1530 = vsel %vm1398, %v1528, %v1507
        %v1531 = vadd.f32 %v1484, %v1404
        %v1532 = vsel %vm1333, %v1531, -inf
        %1533 = vmax.xlane.f32.xlu0 %v1532
        %v1534 = vpop.xlane.xlu0 %1533
        %vm1535 = vcmp.eq.f32.partialorder %v1531, %v1534
        %v1536 = vsel %vm1535, %v552, 5
        %v1537 = vsel %vm1333, %v1536, 2147483647
        %v1538 = vand.u32 %v1537, 65535
        %v1539 = vshra.s32 %v1537, 16
        %v1540 = vcvt.s32.f32 %v1538
        %v1541 = vcvt.s32.f32 %v1539
        %1542 = vmin.xlane.f32.xlu0 %v1541
        %v1543 = vpop.xlane.xlu0 %1542
        %vm1544 = vcmp.eq.f32.partialorder %v1541, %v1543
        %v1545 = vsel %vm1544, %v1540, inf
        %1546 = vmin.xlane.f32.xlu0 %v1545
        %v1547 = vpop.xlane.xlu0 %1546
        %v1548 = vcvt.f32.s32 %v1547
        %v1549 = vcvt.f32.s32 %v1543
        %v1550 = vshll.u32 %v1549, 16
        %v1551 = vadd.s32 %v1550, %v1548
        %v1552 = vsel %vm1426, %v1534, %v1529
        %v1553 = vsel %vm1426, %v1551, %v1530
        %v1554 = vadd.f32 %v1484, %v1432
        %v1555 = vsel %vm1333, %v1554, -inf
        %1556 = vmax.xlane.f32.xlu0 %v1555
        %v1557 = vpop.xlane.xlu0 %1556
        %vm1558 = vcmp.eq.f32.partialorder %v1554, %v1557
        %v1559 = vsel %vm1558, %v552, 5
        %v1560 = vsel %vm1333, %v1559, 2147483647
        %v1561 = vand.u32 %v1560, 65535
        %v1562 = vshra.s32 %v1560, 16
        %v1563 = vcvt.s32.f32 %v1561
        %v1564 = vcvt.s32.f32 %v1562
        %1565 = vmin.xlane.f32.xlu0 %v1564
        %v1566 = vpop.xlane.xlu0 %1565
        %vm1567 = vcmp.eq.f32.partialorder %v1564, %v1566
        %v1568 = vsel %vm1567, %v1563, inf
        %1569 = vmin.xlane.f32.xlu0 %v1568
        %v1570 = vpop.xlane.xlu0 %1569
        %v1571 = vcvt.f32.s32 %v1570
        %v1572 = vcvt.f32.s32 %v1566
        %v1573 = vshll.u32 %v1572, 16
        %v1574 = vadd.s32 %v1573, %v1571
        %v1575 = vsel %vm1343, %v1557, %v1552
        %v1576 = vsel %vm1343, %v1574, %v1553
        %v1577 = vadd.f32 %v1484, %v1459
        %v1578 = vsel %vm1333, %v1577, -inf
        %1579 = vmax.xlane.f32.xlu0 %v1578
        %v1580 = vpop.xlane.xlu0 %1579
        %vm1581 = vcmp.eq.f32.partialorder %v1577, %v1580
        %v1582 = vsel %vm1581, %v552, 5
        %v1583 = vsel %vm1333, %v1582, 2147483647
        %v1584 = vand.u32 %v1583, 65535
        %v1585 = vshra.s32 %v1583, 16
        %v1586 = vcvt.s32.f32 %v1584
        %v1587 = vcvt.s32.f32 %v1585
        %1588 = vmin.xlane.f32.xlu0 %v1587
        %v1589 = vpop.xlane.xlu0 %1588
        %vm1590 = vcmp.eq.f32.partialorder %v1587, %v1589
        %v1591 = vsel %vm1590, %v1586, inf
        %1592 = vmin.xlane.f32.xlu0 %v1591
        %v1593 = vpop.xlane.xlu0 %1592
        %v1594 = vcvt.f32.s32 %v1593
        %v1595 = vcvt.f32.s32 %v1589
        %v1596 = vshll.u32 %v1595, 16
        %v1597 = vadd.s32 %v1596, %v1594
        %v1598 = vsel %vm1481, %v1580, %v1575
        %v1599 = vsel %vm1481, %v1597, %v1576
        %v1600 = vadd.f32 %v1598, %v1306
        %v1601 = vadd.f32 %v1600, %v1348
        %v1602 = vsel %vm1333, %v1601, -inf
        %1603 = vmax.xlane.f32.xlu0 %v1602
        %v1604 = vpop.xlane.xlu0 %1603
        %vm1605 = vcmp.eq.f32.partialorder %v1601, %v1604
        %v1606 = vsel %vm1605, %v552, 5
        %v1607 = vsel %vm1333, %v1606, 2147483647
        %v1608 = vand.u32 %v1607, 65535
        %v1609 = vshra.s32 %v1607, 16
        %v1610 = vcvt.s32.f32 %v1608
        %v1611 = vcvt.s32.f32 %v1609
        %1612 = vmin.xlane.f32.xlu0 %v1611
        %v1613 = vpop.xlane.xlu0 %1612
        %vm1614 = vcmp.eq.f32.partialorder %v1611, %v1613
        %v1615 = vsel %vm1614, %v1610, inf
        %1616 = vmin.xlane.f32.xlu0 %v1615
        %v1617 = vpop.xlane.xlu0 %1616
        %v1618 = vcvt.f32.s32 %v1617
        %v1619 = vcvt.f32.s32 %v1613
        %v1620 = vshll.u32 %v1619, 16
        %v1621 = vadd.s32 %v1620, %v1618
        %v1622 = vsel %vm1370, %v1604, 0.0
        %v1623 = vsel %vm1370, %v1621, 0
        %v1624 = vadd.f32 %v1600, %v1376
        %v1625 = vsel %vm1333, %v1624, -inf
        %1626 = vmax.xlane.f32.xlu0 %v1625
        %v1627 = vpop.xlane.xlu0 %1626
        %vm1628 = vcmp.eq.f32.partialorder %v1624, %v1627
        %v1629 = vsel %vm1628, %v552, 5
        %v1630 = vsel %vm1333, %v1629, 2147483647
        %v1631 = vand.u32 %v1630, 65535
        %v1632 = vshra.s32 %v1630, 16
        %v1633 = vcvt.s32.f32 %v1631
        %v1634 = vcvt.s32.f32 %v1632
        %1635 = vmin.xlane.f32.xlu0 %v1634
        %v1636 = vpop.xlane.xlu0 %1635
        %vm1637 = vcmp.eq.f32.partialorder %v1634, %v1636
        %v1638 = vsel %vm1637, %v1633, inf
        %1639 = vmin.xlane.f32.xlu0 %v1638
        %v1640 = vpop.xlane.xlu0 %1639
        %v1641 = vcvt.f32.s32 %v1640
        %v1642 = vcvt.f32.s32 %v1636
        %v1643 = vshll.u32 %v1642, 16
        %v1644 = vadd.s32 %v1643, %v1641
        %v1645 = vsel %vm1398, %v1627, %v1622
        %v1646 = vsel %vm1398, %v1644, %v1623
        %v1647 = vadd.f32 %v1600, %v1404
        %v1648 = vsel %vm1333, %v1647, -inf
        %1649 = vmax.xlane.f32.xlu0 %v1648
        %v1650 = vpop.xlane.xlu0 %1649
        %vm1651 = vcmp.eq.f32.partialorder %v1647, %v1650
        %v1652 = vsel %vm1651, %v552, 5
        %v1653 = vsel %vm1333, %v1652, 2147483647
        %v1654 = vand.u32 %v1653, 65535
        %v1655 = vshra.s32 %v1653, 16
        %v1656 = vcvt.s32.f32 %v1654
        %v1657 = vcvt.s32.f32 %v1655
        %1658 = vmin.xlane.f32.xlu0 %v1657
        %v1659 = vpop.xlane.xlu0 %1658
        %vm1660 = vcmp.eq.f32.partialorder %v1657, %v1659
        %v1661 = vsel %vm1660, %v1656, inf
        %1662 = vmin.xlane.f32.xlu0 %v1661
        %v1663 = vpop.xlane.xlu0 %1662
        %v1664 = vcvt.f32.s32 %v1663
        %v1665 = vcvt.f32.s32 %v1659
        %v1666 = vshll.u32 %v1665, 16
        %v1667 = vadd.s32 %v1666, %v1664
        %v1668 = vsel %vm1426, %v1650, %v1645
        %v1669 = vsel %vm1426, %v1667, %v1646
        %v1670 = vadd.f32 %v1600, %v1432
        %v1671 = vsel %vm1333, %v1670, -inf
        %1672 = vmax.xlane.f32.xlu0 %v1671
        %v1673 = vpop.xlane.xlu0 %1672
        %vm1674 = vcmp.eq.f32.partialorder %v1670, %v1673
        %v1675 = vsel %vm1674, %v552, 5
        %v1676 = vsel %vm1333, %v1675, 2147483647
        %v1677 = vand.u32 %v1676, 65535
        %v1678 = vshra.s32 %v1676, 16
        %v1679 = vcvt.s32.f32 %v1677
        %v1680 = vcvt.s32.f32 %v1678
        %1681 = vmin.xlane.f32.xlu0 %v1680
        %v1682 = vpop.xlane.xlu0 %1681
        %vm1683 = vcmp.eq.f32.partialorder %v1680, %v1682
        %v1684 = vsel %vm1683, %v1679, inf
        %1685 = vmin.xlane.f32.xlu0 %v1684
        %v1686 = vpop.xlane.xlu0 %1685
        %v1687 = vcvt.f32.s32 %v1686
        %v1688 = vcvt.f32.s32 %v1682
        %v1689 = vshll.u32 %v1688, 16
        %v1690 = vadd.s32 %v1689, %v1687
        %v1691 = vsel %vm1343, %v1673, %v1668
        %v1692 = vsel %vm1343, %v1690, %v1669
        %v1693 = vadd.f32 %v1600, %v1459
        %v1694 = vsel %vm1333, %v1693, -inf
        %1695 = vmax.xlane.f32.xlu0 %v1694
        %v1696 = vpop.xlane.xlu0 %1695
        %vm1697 = vcmp.eq.f32.partialorder %v1693, %v1696
        %v1698 = vsel %vm1697, %v552, 5
        %v1699 = vsel %vm1333, %v1698, 2147483647
        %v1700 = vand.u32 %v1699, 65535
        %v1701 = vshra.s32 %v1699, 16
        %v1702 = vcvt.s32.f32 %v1700
        %v1703 = vcvt.s32.f32 %v1701
        %1704 = vmin.xlane.f32.xlu0 %v1703
        %v1705 = vpop.xlane.xlu0 %1704
        %vm1706 = vcmp.eq.f32.partialorder %v1703, %v1705
        %v1707 = vsel %vm1706, %v1702, inf
        %1708 = vmin.xlane.f32.xlu0 %v1707
        %v1709 = vpop.xlane.xlu0 %1708
        %v1710 = vcvt.f32.s32 %v1709
        %v1711 = vcvt.f32.s32 %v1705
        %v1712 = vshll.u32 %v1711, 16
        %v1713 = vadd.s32 %v1712, %v1710
        %v1714 = vsel %vm1481, %v1696, %v1691
        %v1715 = vsel %vm1481, %v1713, %v1692
        %v1716 = vadd.f32 %v1714, %v1311
        %v1717 = vadd.f32 %v1716, %v1348
        %v1718 = vsel %vm1333, %v1717, -inf
        %1719 = vmax.xlane.f32.xlu0 %v1718
        %v1720 = vpop.xlane.xlu0 %1719
        %vm1721 = vcmp.eq.f32.partialorder %v1717, %v1720
        %v1722 = vsel %vm1721, %v552, 5
        %v1723 = vsel %vm1333, %v1722, 2147483647
        %v1724 = vand.u32 %v1723, 65535
        %v1725 = vshra.s32 %v1723, 16
        %v1726 = vcvt.s32.f32 %v1724
        %v1727 = vcvt.s32.f32 %v1725
        %1728 = vmin.xlane.f32.xlu0 %v1727
        %v1729 = vpop.xlane.xlu0 %1728
        %vm1730 = vcmp.eq.f32.partialorder %v1727, %v1729
        %v1731 = vsel %vm1730, %v1726, inf
        %1732 = vmin.xlane.f32.xlu0 %v1731
        %v1733 = vpop.xlane.xlu0 %1732
        %v1734 = vcvt.f32.s32 %v1733
        %v1735 = vcvt.f32.s32 %v1729
        %v1736 = vshll.u32 %v1735, 16
        %v1737 = vadd.s32 %v1736, %v1734
        %v1738 = vsel %vm1370, %v1720, 0.0
        %v1739 = vsel %vm1370, %v1737, 0
        %v1740 = vadd.f32 %v1716, %v1376
        %v1741 = vsel %vm1333, %v1740, -inf
        %1742 = vmax.xlane.f32.xlu0 %v1741
        %v1743 = vpop.xlane.xlu0 %1742
        %vm1744 = vcmp.eq.f32.partialorder %v1740, %v1743
        %v1745 = vsel %vm1744, %v552, 5
        %v1746 = vsel %vm1333, %v1745, 2147483647
        %v1747 = vand.u32 %v1746, 65535
        %v1748 = vshra.s32 %v1746, 16
        %v1749 = vcvt.s32.f32 %v1747
        %v1750 = vcvt.s32.f32 %v1748
        %1751 = vmin.xlane.f32.xlu0 %v1750
        %v1752 = vpop.xlane.xlu0 %1751
        %vm1753 = vcmp.eq.f32.partialorder %v1750, %v1752
        %v1754 = vsel %vm1753, %v1749, inf
        %1755 = vmin.xlane.f32.xlu0 %v1754
        %v1756 = vpop.xlane.xlu0 %1755
        %v1757 = vcvt.f32.s32 %v1756
        %v1758 = vcvt.f32.s32 %v1752
        %v1759 = vshll.u32 %v1758, 16
        %v1760 = vadd.s32 %v1759, %v1757
        %v1761 = vsel %vm1398, %v1743, %v1738
        %v1762 = vsel %vm1398, %v1760, %v1739
        %v1763 = vadd.f32 %v1716, %v1404
        %v1764 = vsel %vm1333, %v1763, -inf
        %1765 = vmax.xlane.f32.xlu0 %v1764
        %v1766 = vpop.xlane.xlu0 %1765
        %vm1767 = vcmp.eq.f32.partialorder %v1763, %v1766
        %v1768 = vsel %vm1767, %v552, 5
        %v1769 = vsel %vm1333, %v1768, 2147483647
        %v1770 = vand.u32 %v1769, 65535
        %v1771 = vshra.s32 %v1769, 16
        %v1772 = vcvt.s32.f32 %v1770
        %v1773 = vcvt.s32.f32 %v1771
        %1774 = vmin.xlane.f32.xlu0 %v1773
        %v1775 = vpop.xlane.xlu0 %1774
        %vm1776 = vcmp.eq.f32.partialorder %v1773, %v1775
        %v1777 = vsel %vm1776, %v1772, inf
        %1778 = vmin.xlane.f32.xlu0 %v1777
        %v1779 = vpop.xlane.xlu0 %1778
        %v1780 = vcvt.f32.s32 %v1779
        %v1781 = vcvt.f32.s32 %v1775
        %v1782 = vshll.u32 %v1781, 16
        %v1783 = vadd.s32 %v1782, %v1780
        %v1784 = vsel %vm1426, %v1766, %v1761
        %v1785 = vsel %vm1426, %v1783, %v1762
        %v1786 = vadd.f32 %v1716, %v1432
        %v1787 = vsel %vm1333, %v1786, -inf
        %1788 = vmax.xlane.f32.xlu0 %v1787
        %v1789 = vpop.xlane.xlu0 %1788
        %vm1790 = vcmp.eq.f32.partialorder %v1786, %v1789
        %v1791 = vsel %vm1790, %v552, 5
        %v1792 = vsel %vm1333, %v1791, 2147483647
        %v1793 = vand.u32 %v1792, 65535
        %v1794 = vshra.s32 %v1792, 16
        %v1795 = vcvt.s32.f32 %v1793
        %v1796 = vcvt.s32.f32 %v1794
        %1797 = vmin.xlane.f32.xlu0 %v1796
        %v1798 = vpop.xlane.xlu0 %1797
        %vm1799 = vcmp.eq.f32.partialorder %v1796, %v1798
        %v1800 = vsel %vm1799, %v1795, inf
        %1801 = vmin.xlane.f32.xlu0 %v1800
        %v1802 = vpop.xlane.xlu0 %1801
        %v1803 = vcvt.f32.s32 %v1802
        %v1804 = vcvt.f32.s32 %v1798
        %v1805 = vshll.u32 %v1804, 16
        %v1806 = vadd.s32 %v1805, %v1803
        %v1807 = vsel %vm1343, %v1789, %v1784
        %v1808 = vsel %vm1343, %v1806, %v1785
        %v1809 = vadd.f32 %v1716, %v1459
        %v1810 = vsel %vm1333, %v1809, -inf
        %1811 = vmax.xlane.f32.xlu0 %v1810
        %v1812 = vpop.xlane.xlu0 %1811
        %vm1813 = vcmp.eq.f32.partialorder %v1809, %v1812
        %v1814 = vsel %vm1813, %v552, 5
        %v1815 = vsel %vm1333, %v1814, 2147483647
        %v1816 = vand.u32 %v1815, 65535
        %v1817 = vshra.s32 %v1815, 16
        %v1818 = vcvt.s32.f32 %v1816
        %v1819 = vcvt.s32.f32 %v1817
        %1820 = vmin.xlane.f32.xlu0 %v1819
        %v1821 = vpop.xlane.xlu0 %1820
        %vm1822 = vcmp.eq.f32.partialorder %v1819, %v1821
        %v1823 = vsel %vm1822, %v1818, inf
        %1824 = vmin.xlane.f32.xlu0 %v1823
        %v1825 = vpop.xlane.xlu0 %1824
        %v1826 = vcvt.f32.s32 %v1825
        %v1827 = vcvt.f32.s32 %v1821
        %v1828 = vshll.u32 %v1827, 16
        %v1829 = vadd.s32 %v1828, %v1826
        %v1830 = vsel %vm1481, %v1812, %v1807
        %v1831 = vsel %vm1481, %v1829, %v1808
        %v1832 = vadd.f32 %v1830, %v1314
        %v1833 = vadd.f32 %v1832, %v1348
        %v1834 = vsel %vm1333, %v1833, -inf
        %1835 = vmax.xlane.f32.xlu0 %v1834
        %v1836 = vpop.xlane.xlu0 %1835
        %vm1837 = vcmp.eq.f32.partialorder %v1833, %v1836
        %v1838 = vsel %vm1837, %v552, 5
        %v1839 = vsel %vm1333, %v1838, 2147483647
        %v1840 = vand.u32 %v1839, 65535
        %v1841 = vshra.s32 %v1839, 16
        %v1842 = vcvt.s32.f32 %v1840
        %v1843 = vcvt.s32.f32 %v1841
        %1844 = vmin.xlane.f32.xlu0 %v1843
        %v1845 = vpop.xlane.xlu0 %1844
        %vm1846 = vcmp.eq.f32.partialorder %v1843, %v1845
        %v1847 = vsel %vm1846, %v1842, inf
        %1848 = vmin.xlane.f32.xlu0 %v1847
        %v1849 = vpop.xlane.xlu0 %1848
        %v1850 = vcvt.f32.s32 %v1849
        %v1851 = vcvt.f32.s32 %v1845
        %v1852 = vshll.u32 %v1851, 16
        %v1853 = vadd.s32 %v1852, %v1850
        %v1854 = vsel %vm1370, %v1836, 0.0
        %v1855 = vsel %vm1370, %v1853, 0
        %v1856 = vadd.f32 %v1832, %v1376
        %v1857 = vsel %vm1333, %v1856, -inf
        %1858 = vmax.xlane.f32.xlu0 %v1857
        %v1859 = vpop.xlane.xlu0 %1858
        %vm1860 = vcmp.eq.f32.partialorder %v1856, %v1859
        %v1861 = vsel %vm1860, %v552, 5
        %v1862 = vsel %vm1333, %v1861, 2147483647
        %v1863 = vand.u32 %v1862, 65535
        %v1864 = vshra.s32 %v1862, 16
        %v1865 = vcvt.s32.f32 %v1863
        %v1866 = vcvt.s32.f32 %v1864
        %1867 = vmin.xlane.f32.xlu0 %v1866
        %v1868 = vpop.xlane.xlu0 %1867
        %vm1869 = vcmp.eq.f32.partialorder %v1866, %v1868
        %v1870 = vsel %vm1869, %v1865, inf
        %1871 = vmin.xlane.f32.xlu0 %v1870
        %v1872 = vpop.xlane.xlu0 %1871
        %v1873 = vcvt.f32.s32 %v1872
        %v1874 = vcvt.f32.s32 %v1868
        %v1875 = vshll.u32 %v1874, 16
        %v1876 = vadd.s32 %v1875, %v1873
        %v1877 = vsel %vm1398, %v1859, %v1854
        %v1878 = vsel %vm1398, %v1876, %v1855
        %v1879 = vadd.f32 %v1832, %v1404
        %v1880 = vsel %vm1333, %v1879, -inf
        %1881 = vmax.xlane.f32.xlu0 %v1880
        %v1882 = vpop.xlane.xlu0 %1881
        %vm1883 = vcmp.eq.f32.partialorder %v1879, %v1882
        %v1884 = vsel %vm1883, %v552, 5
        %v1885 = vsel %vm1333, %v1884, 2147483647
        %v1886 = vand.u32 %v1885, 65535
        %v1887 = vshra.s32 %v1885, 16
        %v1888 = vcvt.s32.f32 %v1886
        %v1889 = vcvt.s32.f32 %v1887
        %1890 = vmin.xlane.f32.xlu0 %v1889
        %v1891 = vpop.xlane.xlu0 %1890
        %vm1892 = vcmp.eq.f32.partialorder %v1889, %v1891
        %v1893 = vsel %vm1892, %v1888, inf
        %1894 = vmin.xlane.f32.xlu0 %v1893
        %v1895 = vpop.xlane.xlu0 %1894
        %v1896 = vcvt.f32.s32 %v1895
        %v1897 = vcvt.f32.s32 %v1891
        %v1898 = vshll.u32 %v1897, 16
        %v1899 = vadd.s32 %v1898, %v1896
        %v1900 = vsel %vm1426, %v1882, %v1877
        %v1901 = vsel %vm1426, %v1899, %v1878
        %v1902 = vadd.f32 %v1832, %v1432
        %v1903 = vsel %vm1333, %v1902, -inf
        %1904 = vmax.xlane.f32.xlu0 %v1903
        %v1905 = vpop.xlane.xlu0 %1904
        %vm1906 = vcmp.eq.f32.partialorder %v1902, %v1905
        %v1907 = vsel %vm1906, %v552, 5
        %v1908 = vsel %vm1333, %v1907, 2147483647
        %v1909 = vand.u32 %v1908, 65535
        %v1910 = vshra.s32 %v1908, 16
        %v1911 = vcvt.s32.f32 %v1909
        %v1912 = vcvt.s32.f32 %v1910
        %1913 = vmin.xlane.f32.xlu0 %v1912
        %v1914 = vpop.xlane.xlu0 %1913
        %vm1915 = vcmp.eq.f32.partialorder %v1912, %v1914
        %v1916 = vsel %vm1915, %v1911, inf
        %1917 = vmin.xlane.f32.xlu0 %v1916
        %v1918 = vpop.xlane.xlu0 %1917
        %v1919 = vcvt.f32.s32 %v1918
        %v1920 = vcvt.f32.s32 %v1914
        %v1921 = vshll.u32 %v1920, 16
        %v1922 = vadd.s32 %v1921, %v1919
        %v1923 = vsel %vm1343, %v1905, %v1900
        %v1924 = vsel %vm1343, %v1922, %v1901
        %v1925 = vadd.f32 %v1832, %v1459
        %v1926 = vsel %vm1333, %v1925, -inf
        %1927 = vmax.xlane.f32.xlu0 %v1926
        %v1928 = vpop.xlane.xlu0 %1927
        %vm1929 = vcmp.eq.f32.partialorder %v1925, %v1928
        %v1930 = vsel %vm1929, %v552, 5
        %v1931 = vsel %vm1333, %v1930, 2147483647
        %v1932 = vand.u32 %v1931, 65535
        %v1933 = vshra.s32 %v1931, 16
        %v1934 = vcvt.s32.f32 %v1932
        %v1935 = vcvt.s32.f32 %v1933
        %1936 = vmin.xlane.f32.xlu0 %v1935
        %v1937 = vpop.xlane.xlu0 %1936
        %vm1938 = vcmp.eq.f32.partialorder %v1935, %v1937
        %v1939 = vsel %vm1938, %v1934, inf
        %1940 = vmin.xlane.f32.xlu0 %v1939
        %v1941 = vpop.xlane.xlu0 %1940
        %v1942 = vcvt.f32.s32 %v1941
        %v1943 = vcvt.f32.s32 %v1937
        %v1944 = vshll.u32 %v1943, 16
        %v1945 = vadd.s32 %v1944, %v1942
        %v1946 = vsel %vm1481, %v1928, %v1923
        %v1947 = vsel %vm1481, %v1945, %v1924
        %v1948 = vadd.f32 %v1946, %v1319
        %v1949 = vadd.f32 %v1948, %v1348
        %v1950 = vsel %vm1333, %v1949, -inf
        %1951 = vmax.xlane.f32.xlu0 %v1950
        %v1952 = vpop.xlane.xlu0 %1951
        %vm1953 = vcmp.eq.f32.partialorder %v1949, %v1952
        %v1954 = vsel %vm1953, %v552, 5
        %v1955 = vsel %vm1333, %v1954, 2147483647
        %v1956 = vand.u32 %v1955, 65535
        %v1957 = vshra.s32 %v1955, 16
        %v1958 = vcvt.s32.f32 %v1956
        %v1959 = vcvt.s32.f32 %v1957
        %1960 = vmin.xlane.f32.xlu0 %v1959
        %v1961 = vpop.xlane.xlu0 %1960
        %vm1962 = vcmp.eq.f32.partialorder %v1959, %v1961
        %v1963 = vsel %vm1962, %v1958, inf
        %1964 = vmin.xlane.f32.xlu0 %v1963
        %v1965 = vpop.xlane.xlu0 %1964
        %v1966 = vcvt.f32.s32 %v1965
        %v1967 = vcvt.f32.s32 %v1961
        %v1968 = vshll.u32 %v1967, 16
        %v1969 = vadd.s32 %v1968, %v1966
        %v1970 = vsel %vm1370, %v1952, 0.0
        %v1971 = vsel %vm1370, %v1969, 0
        %v1972 = vadd.f32 %v1948, %v1376
        %v1973 = vsel %vm1333, %v1972, -inf
        %1974 = vmax.xlane.f32.xlu0 %v1973
        %v1975 = vpop.xlane.xlu0 %1974
        %vm1976 = vcmp.eq.f32.partialorder %v1972, %v1975
        %v1977 = vsel %vm1976, %v552, 5
        %v1978 = vsel %vm1333, %v1977, 2147483647
        %v1979 = vand.u32 %v1978, 65535
        %v1980 = vshra.s32 %v1978, 16
        %v1981 = vcvt.s32.f32 %v1979
        %v1982 = vcvt.s32.f32 %v1980
        %1983 = vmin.xlane.f32.xlu0 %v1982
        %v1984 = vpop.xlane.xlu0 %1983
        %vm1985 = vcmp.eq.f32.partialorder %v1982, %v1984
        %v1986 = vsel %vm1985, %v1981, inf
        %1987 = vmin.xlane.f32.xlu0 %v1986
        %v1988 = vpop.xlane.xlu0 %1987
        %v1989 = vcvt.f32.s32 %v1988
        %v1990 = vcvt.f32.s32 %v1984
        %v1991 = vshll.u32 %v1990, 16
        %v1992 = vadd.s32 %v1991, %v1989
        %v1993 = vsel %vm1398, %v1975, %v1970
        %v1994 = vsel %vm1398, %v1992, %v1971
        %v1995 = vadd.f32 %v1948, %v1404
        %v1996 = vsel %vm1333, %v1995, -inf
        %1997 = vmax.xlane.f32.xlu0 %v1996
        %v1998 = vpop.xlane.xlu0 %1997
        %vm1999 = vcmp.eq.f32.partialorder %v1995, %v1998
        %v2000 = vsel %vm1999, %v552, 5
        %v2001 = vsel %vm1333, %v2000, 2147483647
        %v2002 = vand.u32 %v2001, 65535
        %v2003 = vshra.s32 %v2001, 16
        %v2004 = vcvt.s32.f32 %v2002
        %v2005 = vcvt.s32.f32 %v2003
        %2006 = vmin.xlane.f32.xlu0 %v2005
        %v2007 = vpop.xlane.xlu0 %2006
        %vm2008 = vcmp.eq.f32.partialorder %v2005, %v2007
        %v2009 = vsel %vm2008, %v2004, inf
        %2010 = vmin.xlane.f32.xlu0 %v2009
        %v2011 = vpop.xlane.xlu0 %2010
        %v2012 = vcvt.f32.s32 %v2011
        %v2013 = vcvt.f32.s32 %v2007
        %v2014 = vshll.u32 %v2013, 16
        %v2015 = vadd.s32 %v2014, %v2012
        %v2016 = vsel %vm1426, %v1998, %v1993
        %v2017 = vsel %vm1426, %v2015, %v1994
        %v2018 = vadd.f32 %v1948, %v1432
        %v2019 = vsel %vm1333, %v2018, -inf
        %2020 = vmax.xlane.f32.xlu0 %v2019
        %v2021 = vpop.xlane.xlu0 %2020
        %vm2022 = vcmp.eq.f32.partialorder %v2018, %v2021
        %v2023 = vsel %vm2022, %v552, 5
        %v2024 = vsel %vm1333, %v2023, 2147483647
        %v2025 = vand.u32 %v2024, 65535
        %v2026 = vshra.s32 %v2024, 16
        %v2027 = vcvt.s32.f32 %v2025
        %v2028 = vcvt.s32.f32 %v2026
        %2029 = vmin.xlane.f32.xlu0 %v2028
        %v2030 = vpop.xlane.xlu0 %2029
        %vm2031 = vcmp.eq.f32.partialorder %v2028, %v2030
        %v2032 = vsel %vm2031, %v2027, inf
        %2033 = vmin.xlane.f32.xlu0 %v2032
        %v2034 = vpop.xlane.xlu0 %2033
        %v2035 = vcvt.f32.s32 %v2034
        %v2036 = vcvt.f32.s32 %v2030
        %v2037 = vshll.u32 %v2036, 16
        %v2038 = vadd.s32 %v2037, %v2035
        %v2039 = vsel %vm1343, %v2021, %v2016
        %v2040 = vsel %vm1343, %v2038, %v2017
        %v2041 = vadd.f32 %v1948, %v1459
        %v2042 = vsel %vm1333, %v2041, -inf
        %2043 = vmax.xlane.f32.xlu0 %v2042
        %v2044 = vpop.xlane.xlu0 %2043
        %vm2045 = vcmp.eq.f32.partialorder %v2041, %v2044
        %v2046 = vsel %vm2045, %v552, 5
        %v2047 = vsel %vm1333, %v2046, 2147483647
        %v2048 = vand.u32 %v2047, 65535
        %v2049 = vshra.s32 %v2047, 16
        %v2050 = vcvt.s32.f32 %v2048
        %v2051 = vcvt.s32.f32 %v2049
        %2052 = vmin.xlane.f32.xlu0 %v2051
        %v2053 = vpop.xlane.xlu0 %2052
        %vm2054 = vcmp.eq.f32.partialorder %v2051, %v2053
        %v2055 = vsel %vm2054, %v2050, inf
        %2056 = vmin.xlane.f32.xlu0 %v2055
        %v2057 = vpop.xlane.xlu0 %2056
        %v2058 = vcvt.f32.s32 %v2057
        %v2059 = vcvt.f32.s32 %v2053
        %v2060 = vshll.u32 %v2059, 16
        %v2061 = vadd.s32 %v2060, %v2058
        %v2062 = vsel %vm1481, %v2044, %v2039
        %v2063 = vsel %vm1481, %v2061, %v2040
        %v2064 = vadd.f32 %v2062, %v1322
        %v2065 = vadd.f32 %v2064, %v1348
        %v2066 = vsel %vm1333, %v2065, -inf
        %2067 = vmax.xlane.f32.xlu0 %v2066
        %v2068 = vpop.xlane.xlu0 %2067
        %vm2069 = vcmp.eq.f32.partialorder %v2065, %v2068
        %v2070 = vsel %vm2069, %v552, 5
        %v2071 = vsel %vm1333, %v2070, 2147483647
        %v2072 = vand.u32 %v2071, 65535
        %v2073 = vshra.s32 %v2071, 16
        %v2074 = vcvt.s32.f32 %v2072
        %v2075 = vcvt.s32.f32 %v2073
        %2076 = vmin.xlane.f32.xlu0 %v2075
        %v2077 = vpop.xlane.xlu0 %2076
        %vm2078 = vcmp.eq.f32.partialorder %v2075, %v2077
        %v2079 = vsel %vm2078, %v2074, inf
        %2080 = vmin.xlane.f32.xlu0 %v2079
        %v2081 = vpop.xlane.xlu0 %2080
        %v2082 = vcvt.f32.s32 %v2081
        %v2083 = vcvt.f32.s32 %v2077
        %v2084 = vshll.u32 %v2083, 16
        %v2085 = vadd.s32 %v2084, %v2082
        %v2086 = vsel %vm1370, %v2068, 0.0
        %v2087 = vsel %vm1370, %v2085, 0
        %v2088 = vadd.f32 %v2064, %v1376
        %v2089 = vsel %vm1333, %v2088, -inf
        %2090 = vmax.xlane.f32.xlu0 %v2089
        %v2091 = vpop.xlane.xlu0 %2090
        %vm2092 = vcmp.eq.f32.partialorder %v2088, %v2091
        %v2093 = vsel %vm2092, %v552, 5
        %v2094 = vsel %vm1333, %v2093, 2147483647
        %v2095 = vand.u32 %v2094, 65535
        %v2096 = vshra.s32 %v2094, 16
        %v2097 = vcvt.s32.f32 %v2095
        %v2098 = vcvt.s32.f32 %v2096
        %2099 = vmin.xlane.f32.xlu0 %v2098
        %v2100 = vpop.xlane.xlu0 %2099
        %vm2101 = vcmp.eq.f32.partialorder %v2098, %v2100
        %v2102 = vsel %vm2101, %v2097, inf
        %2103 = vmin.xlane.f32.xlu0 %v2102
        %v2104 = vpop.xlane.xlu0 %2103
        %v2105 = vcvt.f32.s32 %v2104
        %v2106 = vcvt.f32.s32 %v2100
        %v2107 = vshll.u32 %v2106, 16
        %v2108 = vadd.s32 %v2107, %v2105
        %v2109 = vsel %vm1398, %v2091, %v2086
        %v2110 = vsel %vm1398, %v2108, %v2087
        %v2111 = vadd.f32 %v2064, %v1404
        %v2112 = vsel %vm1333, %v2111, -inf
        %2113 = vmax.xlane.f32.xlu0 %v2112
        %v2114 = vpop.xlane.xlu0 %2113
        %vm2115 = vcmp.eq.f32.partialorder %v2111, %v2114
        %v2116 = vsel %vm2115, %v552, 5
        %v2117 = vsel %vm1333, %v2116, 2147483647
        %v2118 = vand.u32 %v2117, 65535
        %v2119 = vshra.s32 %v2117, 16
        %v2120 = vcvt.s32.f32 %v2118
        %v2121 = vcvt.s32.f32 %v2119
        %2122 = vmin.xlane.f32.xlu0 %v2121
        %v2123 = vpop.xlane.xlu0 %2122
        %vm2124 = vcmp.eq.f32.partialorder %v2121, %v2123
        %v2125 = vsel %vm2124, %v2120, inf
        %2126 = vmin.xlane.f32.xlu0 %v2125
        %v2127 = vpop.xlane.xlu0 %2126
        %v2128 = vcvt.f32.s32 %v2127
        %v2129 = vcvt.f32.s32 %v2123
        %v2130 = vshll.u32 %v2129, 16
        %v2131 = vadd.s32 %v2130, %v2128
        %v2132 = vsel %vm1426, %v2114, %v2109
        %v2133 = vsel %vm1426, %v2131, %v2110
        %v2134 = vadd.f32 %v2064, %v1432
        %v2135 = vsel %vm1333, %v2134, -inf
        %2136 = vmax.xlane.f32.xlu0 %v2135
        %v2137 = vpop.xlane.xlu0 %2136
        %vm2138 = vcmp.eq.f32.partialorder %v2134, %v2137
        %v2139 = vsel %vm2138, %v552, 5
        %v2140 = vsel %vm1333, %v2139, 2147483647
        %v2141 = vand.u32 %v2140, 65535
        %v2142 = vshra.s32 %v2140, 16
        %v2143 = vcvt.s32.f32 %v2141
        %v2144 = vcvt.s32.f32 %v2142
        %2145 = vmin.xlane.f32.xlu0 %v2144
        %v2146 = vpop.xlane.xlu0 %2145
        %vm2147 = vcmp.eq.f32.partialorder %v2144, %v2146
        %v2148 = vsel %vm2147, %v2143, inf
        %2149 = vmin.xlane.f32.xlu0 %v2148
        %v2150 = vpop.xlane.xlu0 %2149
        %v2151 = vcvt.f32.s32 %v2150
        %v2152 = vcvt.f32.s32 %v2146
        %v2153 = vshll.u32 %v2152, 16
        %v2154 = vadd.s32 %v2153, %v2151
        %v2155 = vsel %vm1343, %v2137, %v2132
        %v2156 = vsel %vm1343, %v2154, %v2133
        %v2157 = vadd.f32 %v2064, %v1459
        %v2158 = vsel %vm1333, %v2157, -inf
        %2159 = vmax.xlane.f32.xlu0 %v2158
        %v2160 = vpop.xlane.xlu0 %2159
        %vm2161 = vcmp.eq.f32.partialorder %v2157, %v2160
        %v2162 = vsel %vm2161, %v552, 5
        %v2163 = vsel %vm1333, %v2162, 2147483647
        %v2164 = vand.u32 %v2163, 65535
        %v2165 = vshra.s32 %v2163, 16
        %v2166 = vcvt.s32.f32 %v2164
        %v2167 = vcvt.s32.f32 %v2165
        %2168 = vmin.xlane.f32.xlu0 %v2167
        %v2169 = vpop.xlane.xlu0 %2168
        %vm2170 = vcmp.eq.f32.partialorder %v2167, %v2169
        %v2171 = vsel %vm2170, %v2166, inf
        %2172 = vmin.xlane.f32.xlu0 %v2171
        %v2173 = vpop.xlane.xlu0 %2172
        %v2174 = vcvt.f32.s32 %v2173
        %v2175 = vcvt.f32.s32 %v2169
        %v2176 = vshll.u32 %v2175, 16
        %v2177 = vadd.s32 %v2176, %v2174
        %v2178 = vsel %vm1481, %v2160, %v2155
        %v2179 = vsel %vm1481, %v2177, %v2156
        %v2180 = vadd.f32 %v2178, %v1327
        %v2181 = vadd.f32 %v2180, %v1348
        %v2182 = vsel %vm1333, %v2181, -inf
        %2183 = vmax.xlane.f32.xlu0 %v2182
        %v2184 = vpop.xlane.xlu0 %2183
        %vm2185 = vcmp.eq.f32.partialorder %v2181, %v2184
        %v2186 = vsel %vm2185, %v552, 5
        %v2187 = vsel %vm1333, %v2186, 2147483647
        %v2188 = vand.u32 %v2187, 65535
        %v2189 = vshra.s32 %v2187, 16
        %v2190 = vcvt.s32.f32 %v2188
        %v2191 = vcvt.s32.f32 %v2189
        %2192 = vmin.xlane.f32.xlu0 %v2191
        %v2193 = vpop.xlane.xlu0 %2192
        %vm2194 = vcmp.eq.f32.partialorder %v2191, %v2193
        %v2195 = vsel %vm2194, %v2190, inf
        %2196 = vmin.xlane.f32.xlu0 %v2195
        %v2197 = vpop.xlane.xlu0 %2196
        %v2198 = vcvt.f32.s32 %v2197
        %v2199 = vcvt.f32.s32 %v2193
        %v2200 = vshll.u32 %v2199, 16
        %v2201 = vadd.s32 %v2200, %v2198
        %v2202 = vsel %vm1370, %v2184, 0.0
        %v2203 = vsel %vm1370, %v2201, 0
        %v2204 = vadd.f32 %v2180, %v1376
        %v2205 = vsel %vm1333, %v2204, -inf
        %2206 = vmax.xlane.f32.xlu0 %v2205
        %v2207 = vpop.xlane.xlu0 %2206
        %vm2208 = vcmp.eq.f32.partialorder %v2204, %v2207
        %v2209 = vsel %vm2208, %v552, 5
        %v2210 = vsel %vm1333, %v2209, 2147483647
        %v2211 = vand.u32 %v2210, 65535
        %v2212 = vshra.s32 %v2210, 16
        %v2213 = vcvt.s32.f32 %v2211
        %v2214 = vcvt.s32.f32 %v2212
        %2215 = vmin.xlane.f32.xlu0 %v2214
        %v2216 = vpop.xlane.xlu0 %2215
        %vm2217 = vcmp.eq.f32.partialorder %v2214, %v2216
        %v2218 = vsel %vm2217, %v2213, inf
        %2219 = vmin.xlane.f32.xlu0 %v2218
        %v2220 = vpop.xlane.xlu0 %2219
        %v2221 = vcvt.f32.s32 %v2220
        %v2222 = vcvt.f32.s32 %v2216
        %v2223 = vshll.u32 %v2222, 16
        %v2224 = vadd.s32 %v2223, %v2221
        %v2225 = vsel %vm1398, %v2207, %v2202
        %v2226 = vsel %vm1398, %v2224, %v2203
        %v2227 = vadd.f32 %v2180, %v1404
        %v2228 = vsel %vm1333, %v2227, -inf
        %2229 = vmax.xlane.f32.xlu0 %v2228
        %v2230 = vpop.xlane.xlu0 %2229
        %vm2231 = vcmp.eq.f32.partialorder %v2227, %v2230
        %v2232 = vsel %vm2231, %v552, 5
        %v2233 = vsel %vm1333, %v2232, 2147483647
        %v2234 = vand.u32 %v2233, 65535
        %v2235 = vshra.s32 %v2233, 16
        %v2236 = vcvt.s32.f32 %v2234
        %v2237 = vcvt.s32.f32 %v2235
        %2238 = vmin.xlane.f32.xlu0 %v2237
        %v2239 = vpop.xlane.xlu0 %2238
        %vm2240 = vcmp.eq.f32.partialorder %v2237, %v2239
        %v2241 = vsel %vm2240, %v2236, inf
        %2242 = vmin.xlane.f32.xlu0 %v2241
        %v2243 = vpop.xlane.xlu0 %2242
        %v2244 = vcvt.f32.s32 %v2243
        %v2245 = vcvt.f32.s32 %v2239
        %v2246 = vshll.u32 %v2245, 16
        %v2247 = vadd.s32 %v2246, %v2244
        %v2248 = vsel %vm1426, %v2230, %v2225
        %v2249 = vsel %vm1426, %v2247, %v2226
        %v2250 = vadd.f32 %v2180, %v1432
        %v2251 = vsel %vm1333, %v2250, -inf
        %2252 = vmax.xlane.f32.xlu0 %v2251
        %v2253 = vpop.xlane.xlu0 %2252
        %vm2254 = vcmp.eq.f32.partialorder %v2250, %v2253
        %v2255 = vsel %vm2254, %v552, 5
        %v2256 = vsel %vm1333, %v2255, 2147483647
        %v2257 = vand.u32 %v2256, 65535
        %v2258 = vshra.s32 %v2256, 16
        %v2259 = vcvt.s32.f32 %v2257
        %v2260 = vcvt.s32.f32 %v2258
        %2261 = vmin.xlane.f32.xlu0 %v2260
        %v2262 = vpop.xlane.xlu0 %2261
        %vm2263 = vcmp.eq.f32.partialorder %v2260, %v2262
        %v2264 = vsel %vm2263, %v2259, inf
        %2265 = vmin.xlane.f32.xlu0 %v2264
        %v2266 = vpop.xlane.xlu0 %2265
        %v2267 = vcvt.f32.s32 %v2266
        %v2268 = vcvt.f32.s32 %v2262
        %v2269 = vshll.u32 %v2268, 16
        %v2270 = vadd.s32 %v2269, %v2267
        %v2271 = vsel %vm1343, %v2253, %v2248
        %v2272 = vsel %vm1343, %v2270, %v2249
        %v2273 = vadd.f32 %v2180, %v1459
        %v2274 = vsel %vm1333, %v2273, -inf
        %2275 = vmax.xlane.f32.xlu0 %v2274
        %v2276 = vpop.xlane.xlu0 %2275
        %vm2277 = vcmp.eq.f32.partialorder %v2273, %v2276
        %v2278 = vsel %vm2277, %v552, 5
        %v2279 = vsel %vm1333, %v2278, 2147483647
        %v2280 = vand.u32 %v2279, 65535
        %v2281 = vshra.s32 %v2279, 16
        %v2282 = vcvt.s32.f32 %v2280
        %v2283 = vcvt.s32.f32 %v2281
        %2284 = vmin.xlane.f32.xlu0 %v2283
        %v2285 = vpop.xlane.xlu0 %2284
        %vm2286 = vcmp.eq.f32.partialorder %v2283, %v2285
        %v2287 = vsel %vm2286, %v2282, inf
        %2288 = vmin.xlane.f32.xlu0 %v2287
        %v2289 = vpop.xlane.xlu0 %2288
        %v2290 = vcvt.f32.s32 %v2289
        %v2291 = vcvt.f32.s32 %v2285
        %v2292 = vshll.u32 %v2291, 16
        %v2293 = vadd.s32 %v2292, %v2290
        %v2294 = vsel %vm1481, %v2276, %v2271
        %v2295 = vsel %vm1481, %v2293, %v2272
        %v2296 = vadd.f32 %v2294, %v1330
        %v2297 = vadd.f32 %v2296, %v1459
        %v2298 = vsel %vm1333, %v2297, -inf
        %2299 = vmax.xlane.f32.xlu0 %v2298
        %v2300 = vpop.xlane.xlu0 %2299
        %vm2301 = vcmp.eq.f32.partialorder %v2297, %v2300
        %v2302 = vsel %vm2301, %v552, 5
        %v2303 = vsel %vm1333, %v2302, 2147483647
        %v2304 = vand.u32 %v2303, 65535
        %v2305 = vshra.s32 %v2303, 16
        %v2306 = vcvt.s32.f32 %v2304
        %v2307 = vcvt.s32.f32 %v2305
        %2308 = vmin.xlane.f32.xlu0 %v2307
        %v2309 = vpop.xlane.xlu0 %2308
        %vm2310 = vcmp.eq.f32.partialorder %v2307, %v2309
        %v2311 = vsel %vm2310, %v2306, inf
        %2312 = vmin.xlane.f32.xlu0 %v2311
        %v2313 = vpop.xlane.xlu0 %2312
        %v2314 = vcvt.f32.s32 %v2313
        %v2315 = vcvt.f32.s32 %v2309
        %v2316 = vshll.u32 %v2315, 16
        %v2317 = vadd.s32 %v2316, %v2314
        %vm2318 = vcmask 7168
        %2319 = vst.msk [vmem:[%s444] sm:$0xff] %vm2318, %v2300
        %vm2320 = vcmp.eq.s32.totalorder %v552, 7
        %v2321 = vsel %vm2320, %v2317, 0
        %vm2322 = vcmp.eq.s32.totalorder %v552, %v2317
        %v2323 = vsel %vm2322, %v2295, 0
        %v2324 = vsel %vm1333, %v2323, 2147483648
        %v2325 = vand.u32 %v2324, 65535
        %v2326 = vshra.s32 %v2324, 16
        %v2327 = vcvt.s32.f32 %v2325
        %v2328 = vcvt.s32.f32 %v2326
        %2329 = vmax.xlane.f32.xlu0 %v2328
        %v2330 = vpop.xlane.xlu0 %2329
        %vm2331 = vcmp.eq.f32.partialorder %v2328, %v2330
        %v2332 = vsel %vm2331, %v2327, -inf
        %2333 = vmax.xlane.f32.xlu0 %v2332
        %v2334 = vpop.xlane.xlu0 %2333
        %v2335 = vcvt.f32.s32 %v2334
        %v2336 = vcvt.f32.s32 %v2330
        %v2337 = vshll.u32 %v2336, 16
        %v2338 = vadd.s32 %v2337, %v2335
        %vm2339 = vcmp.eq.s32.totalorder %v552, 6
        %v2340 = vsel %vm2339, %v2338, %v2321
        %vm2341 = vcmp.eq.s32.totalorder %v552, %v2338
        %v2342 = vsel %vm2341, %v2179, 0
        %v2343 = vsel %vm1333, %v2342, 2147483648
        %v2344 = vand.u32 %v2343, 65535
        %v2345 = vshra.s32 %v2343, 16
        %v2346 = vcvt.s32.f32 %v2344
        %v2347 = vcvt.s32.f32 %v2345
        %2348 = vmax.xlane.f32.xlu0 %v2347
        %v2349 = vpop.xlane.xlu0 %2348
        %vm2350 = vcmp.eq.f32.partialorder %v2347, %v2349
        %v2351 = vsel %vm2350, %v2346, -inf
        %2352 = vmax.xlane.f32.xlu0 %v2351
        %v2353 = vpop.xlane.xlu0 %2352
        %v2354 = vcvt.f32.s32 %v2353
        %v2355 = vcvt.f32.s32 %v2349
        %v2356 = vshll.u32 %v2355, 16
        %v2357 = vadd.s32 %v2356, %v2354
        %vm2358 = vcmp.eq.s32.totalorder %v552, 5
        %v2359 = vsel %vm2358, %v2357, %v2340
        %vm2360 = vcmp.eq.s32.totalorder %v552, %v2357
        %v2361 = vsel %vm2360, %v2063, 0
        %v2362 = vsel %vm1333, %v2361, 2147483648
        %v2363 = vand.u32 %v2362, 65535
        %v2364 = vshra.s32 %v2362, 16
        %v2365 = vcvt.s32.f32 %v2363
        %v2366 = vcvt.s32.f32 %v2364
        %2367 = vmax.xlane.f32.xlu0 %v2366
        %v2368 = vpop.xlane.xlu0 %2367
        %vm2369 = vcmp.eq.f32.partialorder %v2366, %v2368
        %v2370 = vsel %vm2369, %v2365, -inf
        %2371 = vmax.xlane.f32.xlu0 %v2370
        %v2372 = vpop.xlane.xlu0 %2371
        %v2373 = vcvt.f32.s32 %v2372
        %v2374 = vcvt.f32.s32 %v2368
        %v2375 = vshll.u32 %v2374, 16
        %v2376 = vadd.s32 %v2375, %v2373
        %v2377 = vsel %vm1481, %v2376, %v2359
        %vm2378 = vcmp.eq.s32.totalorder %v552, %v2376
        %v2379 = vsel %vm2378, %v1947, 0
        %v2380 = vsel %vm1333, %v2379, 2147483648
        %v2381 = vand.u32 %v2380, 65535
        %v2382 = vshra.s32 %v2380, 16
        %v2383 = vcvt.s32.f32 %v2381
        %v2384 = vcvt.s32.f32 %v2382
        %2385 = vmax.xlane.f32.xlu0 %v2384
        %v2386 = vpop.xlane.xlu0 %2385
        %vm2387 = vcmp.eq.f32.partialorder %v2384, %v2386
        %v2388 = vsel %vm2387, %v2383, -inf
        %2389 = vmax.xlane.f32.xlu0 %v2388
        %v2390 = vpop.xlane.xlu0 %2389
        %v2391 = vcvt.f32.s32 %v2390
        %v2392 = vcvt.f32.s32 %v2386
        %v2393 = vshll.u32 %v2392, 16
        %v2394 = vadd.s32 %v2393, %v2391
        %v2395 = vsel %vm1343, %v2394, %v2377
        %vm2396 = vcmp.eq.s32.totalorder %v552, %v2394
        %v2397 = vsel %vm2396, %v1831, 0
        %v2398 = vsel %vm1333, %v2397, 2147483648
        %v2399 = vand.u32 %v2398, 65535
        %v2400 = vshra.s32 %v2398, 16
        %v2401 = vcvt.s32.f32 %v2399
        %v2402 = vcvt.s32.f32 %v2400
        %2403 = vmax.xlane.f32.xlu0 %v2402
        %v2404 = vpop.xlane.xlu0 %2403
        %vm2405 = vcmp.eq.f32.partialorder %v2402, %v2404
        %v2406 = vsel %vm2405, %v2401, -inf
        %2407 = vmax.xlane.f32.xlu0 %v2406
        %v2408 = vpop.xlane.xlu0 %2407
        %v2409 = vcvt.f32.s32 %v2408
        %v2410 = vcvt.f32.s32 %v2404
        %v2411 = vshll.u32 %v2410, 16
        %v2412 = vadd.s32 %v2411, %v2409
        %v2413 = vsel %vm1426, %v2412, %v2395
        %vm2414 = vcmp.eq.s32.totalorder %v552, %v2412
        %v2415 = vsel %vm2414, %v1715, 0
        %v2416 = vsel %vm1333, %v2415, 2147483648
        %v2417 = vand.u32 %v2416, 65535
        %v2418 = vshra.s32 %v2416, 16
        %v2419 = vcvt.s32.f32 %v2417
        %v2420 = vcvt.s32.f32 %v2418
        %2421 = vmax.xlane.f32.xlu0 %v2420
        %v2422 = vpop.xlane.xlu0 %2421
        %vm2423 = vcmp.eq.f32.partialorder %v2420, %v2422
        %v2424 = vsel %vm2423, %v2419, -inf
        %2425 = vmax.xlane.f32.xlu0 %v2424
        %v2426 = vpop.xlane.xlu0 %2425
        %v2427 = vcvt.f32.s32 %v2426
        %v2428 = vcvt.f32.s32 %v2422
        %v2429 = vshll.u32 %v2428, 16
        %v2430 = vadd.s32 %v2429, %v2427
        %v2431 = vsel %vm1398, %v2430, %v2413
        %vm2432 = vcmp.eq.s32.totalorder %v552, %v2430
        %v2433 = vsel %vm2432, %v1599, 0
        %v2434 = vsel %vm1333, %v2433, 2147483648
        %v2435 = vand.u32 %v2434, 65535
        %v2436 = vshra.s32 %v2434, 16
        %v2437 = vcvt.s32.f32 %v2435
        %v2438 = vcvt.s32.f32 %v2436
        %2439 = vmax.xlane.f32.xlu0 %v2438
        %v2440 = vpop.xlane.xlu0 %2439
        %vm2441 = vcmp.eq.f32.partialorder %v2438, %v2440
        %v2442 = vsel %vm2441, %v2437, -inf
        %2443 = vmax.xlane.f32.xlu0 %v2442
        %v2444 = vpop.xlane.xlu0 %2443
        %v2445 = vcvt.f32.s32 %v2444
        %v2446 = vcvt.f32.s32 %v2440
        %v2447 = vshll.u32 %v2446, 16
        %v2448 = vadd.s32 %v2447, %v2445
        %v2449 = vsel %vm1370, %v2448, %v2431
        %vm2450 = vcmp.eq.s32.totalorder %v552, %v2448
        %v2451 = vsel %vm2450, %v1483, 0
        %v2452 = vsel %vm1333, %v2451, 2147483648
        %v2453 = vand.u32 %v2452, 65535
        %v2454 = vshra.s32 %v2452, 16
        %v2455 = vcvt.s32.f32 %v2453
        %v2456 = vcvt.s32.f32 %v2454
        %2457 = vmax.xlane.f32.xlu0 %v2456
        %v2458 = vpop.xlane.xlu0 %2457
        %vm2459 = vcmp.eq.f32.partialorder %v2456, %v2458
        %v2460 = vsel %vm2459, %v2455, -inf
        %2461 = vmax.xlane.f32.xlu0 %v2460
        %v2462 = vpop.xlane.xlu0 %2461
        %v2463 = vcvt.f32.s32 %v2462
        %v2464 = vcvt.f32.s32 %v2458
        %v2465 = vshll.u32 %v2464, 16
        %v2466 = vadd.s32 %v2465, %v2463
        %vm2467 = vcmp.eq.s32.totalorder %v552, 8
        %v2468 = vsel %vm2467, %v2466, %v2449
        %vm2469 = vcmask 72704
        %2470 = vst.msk [vmem:[%s414] sm:$0xff] %vm2469, %v2468
        %s2471 = smul.u32 8, %s26
        %p2472 = scmp.lt.s32.totalorder %s2471, 15
        %s2473 = scalar_select %p2472, %s2471, 15
        %s2474 = smul.addr %s2473, 8
        %s2475 = scalar_lea.vmem %s9, %s2474
        %s2476 = sand.u32 %s264, 1
        %s2477 = scalar_lea.sflag [#allocation4], %s2476
        %s2478 = sand.u32 %s264, 1
        %s2479 = smul.addr %s2478, 8
        %s2480 = scalar_lea.vmem [#allocation3], %s2479
        %p2481 = scmp.lt.s32.totalorder %s26, 1
        %s2482 = scalar_select %p2481, %s26, 1
        %s2483 = smul.addr %s2482, 8
        %s2484 = scalar_lea.vmem %s11, %s2483
        // Predicated region
        $region57: #{tpu_custom_call.1} parent=55 // pred_check
          %p2485 = pneg %p248
        $region58: #{tpu_custom_call.1} parent=55 // pred_check_branch
          %2487 = sbr.rel (%p2485) target = $region60
        $region59: #{tpu_custom_call.1} parent=55 // pred_region
          %s2488 = smul.u32 8, %s26
        $region60: #{tpu_custom_call.1} parent=55 // pred_fallthru
          _
        // Predicated region
        $region61: #{tpu_custom_call.1} parent=55 // pred_check
          %p2489 = pneg %p274
        $region62: #{tpu_custom_call.1} parent=55 // pred_check_branch
          %2491 = sbr.rel (%p2489) target = $region64
        $region63: #{tpu_custom_call.1} parent=55 // pred_region
          %s2493 = ssub.s32 128, 128
          %2494 = vsyncadd %s2477, %s2493
          %s2495 = smul.addr %s26, 128
          %s2496 = scalar_lea.hbm %s10, %s2495
          %s2498 = sshll.u32 %s2480, 4
          %s2499 = int_to_ptr.vmem [resolvable:$true] %s2498
          %2501 = dma.vmem_to_hbm [thread:$0]  %s2499, 128, %s2496, %s2477
        $region64: #{tpu_custom_call.1} parent=55 // pred_fallthru
          _
        // Predicated region
        $region65: #{tpu_custom_call.1} parent=55 // pred_check
          %p2502 = pneg %p300
        $region66: #{tpu_custom_call.1} parent=55 // pred_check_branch
          %2504 = sbr.rel (%p2502) target = $region68
        $region67: #{tpu_custom_call.1} parent=55 // pred_region
          _
        $region68: #{tpu_custom_call.1} parent=55 // pred_fallthru
          _
      $region56: #{tpu_custom_call.1} parent=5 // pred_fallthru
        _
      %p2505 = scmp.le.s32.totalorder 2, %s21
      // Predicated region
      $region69: #{tpu_custom_call.1} parent=5 // pred_check
        %p2506 = pneg %p2505
      $region70: #{tpu_custom_call.1} parent=5 // pred_check_branch
        %2508 = sbr.rel (%p2506) target = $region72
      $region71: #{tpu_custom_call.1} parent=5 // pred_region
        %s2509 = ssub.s32 %s21, 2
        // Predicated region
        $region73: #{tpu_custom_call.1} parent=71 // pred_check
          %p2510 = pneg %p254
        $region74: #{tpu_custom_call.1} parent=71 // pred_check_branch
          %2512 = sbr.rel (%p2510) target = $region76
        $region75: #{tpu_custom_call.1} parent=71 // pred_region
          %s2513 = smul.u32 8, %s27
          %p2514 = scmp.lt.s32.totalorder %s2513, 15
          %s2515 = scalar_select %p2514, %s2513, 15
          %s2516 = smul.addr %s2515, 8
          %s2517 = scalar_lea.vmem %s9, %s2516
        $region76: #{tpu_custom_call.1} parent=71 // pred_fallthru
          _
        // Predicated region
        $region77: #{tpu_custom_call.1} parent=71 // pred_check
          %p2518 = pneg %p280
        $region78: #{tpu_custom_call.1} parent=71 // pred_check_branch
          %2520 = sbr.rel (%p2518) target = $region80
        $region79: #{tpu_custom_call.1} parent=71 // pred_region
          %s2521 = sand.u32 %s265, 1
          %s2522 = scalar_lea.sflag [#allocation4], %s2521
          %s2523 = sand.u32 %s265, 1
          %s2524 = smul.addr %s2523, 8
          %s2525 = scalar_lea.vmem [#allocation3], %s2524
          %2526 = dma.done %s2522, 128
        $region80: #{tpu_custom_call.1} parent=71 // pred_fallthru
          _
        // Predicated region
        $region81: #{tpu_custom_call.1} parent=71 // pred_check
          %p2527 = pneg %p306
        $region82: #{tpu_custom_call.1} parent=71 // pred_check_branch
          %2529 = sbr.rel (%p2527) target = $region84
        $region83: #{tpu_custom_call.1} parent=71 // pred_region
          %p2530 = scmp.lt.s32.totalorder %s27, 1
          %s2531 = scalar_select %p2530, %s27, 1
          %s2532 = smul.addr %s2531, 8
          %s2533 = scalar_lea.vmem %s11, %s2532
        $region84: #{tpu_custom_call.1} parent=71 // pred_fallthru
          _
      $region72: #{tpu_custom_call.1} parent=5 // pred_fallthru
        _
    $region6: #{tpu_custom_call.1} parent=1 // loop_footer
      %s25 = sadd.s32 1, %s21
    $region7: #{tpu_custom_call.1} parent=1 // loop_footer_branch
      %20 = sbr.rel target = $region3
    $region8: #{tpu_custom_call.1} parent=1 // loop_exit
      _
    %2534 = vsyncpa [#allocation4], 1
    %s2535 = scalar_lea.sflag [#allocation4], 1
    %2536 = vsyncpa %s2535, 1

</llo_original>
